<compile_context>
chip_gen: v6e
topology: v6e:2x2x1
jax: 0.10.0
libtpu: 0.0.40
codegen_flags: <defaults>
</compile_context>

<pallas_src>
import functools

import jax
import jax.numpy as jnp
from jax import lax
from jax.experimental import pallas as pl
from jax.experimental.pallas import tpu as pltpu


_VMEM_LIMIT_BYTES = 48 * 1024 * 1024  # > default scoped limit on all gens, < v7x physical


def _fit_tile(dim, want, unit):
    """Largest t <= want that divides dim and is a multiple of `unit`, else dim."""
    want = min(want, dim)
    t = (want // unit) * unit
    while t >= unit:
        if dim % t == 0:
            return t
        t -= unit
    return dim


# ----------------------------------------------------------------------------
# Matmul kernels: plain / fused running-sum add, normal / transposed-A,
# single-K fast path / K-tiled accumulator path.
# ----------------------------------------------------------------------------

def _make_mm_kernel(transpose_a, fuse_add, emit_z, single_k):
    cdims = (((0,), (0,)), ((), ())) if transpose_a else (((1,), (0,)), ((), ()))

    def _dot(a, b):
        return lax.dot_general(a, b, cdims, preferred_element_type=jnp.float32)

    if single_k:
        if not fuse_add:
            def kern(a_ref, b_ref, o_ref):
                o_ref[...] = _dot(a_ref[...], b_ref[...]).astype(o_ref.dtype)
        elif emit_z:
            def kern(a_ref, b_ref, p_ref, z_ref, s_ref):
                p = _dot(a_ref[...], b_ref[...])
                z_ref[...] = p.astype(z_ref.dtype)
                s_ref[...] = (p + p_ref[...]).astype(s_ref.dtype)
        else:
            def kern(a_ref, b_ref, p_ref, s_ref):
                p = _dot(a_ref[...], b_ref[...])
                s_ref[...] = (p + p_ref[...]).astype(s_ref.dtype)
        return kern

    if not fuse_add:
        def kern(a_ref, b_ref, o_ref, acc_ref):
            @pl.when(pl.program_id(2) == 0)
            def _():
                acc_ref[...] = jnp.zeros_like(acc_ref)

            acc_ref[...] += _dot(a_ref[...], b_ref[...])

            @pl.when(pl.program_id(2) == pl.num_programs(2) - 1)
            def _():
                o_ref[...] = acc_ref[...].astype(o_ref.dtype)
    elif emit_z:
        def kern(a_ref, b_ref, p_ref, z_ref, s_ref, acc_ref):
            @pl.when(pl.program_id(2) == 0)
            def _():
                acc_ref[...] = jnp.zeros_like(acc_ref)

            acc_ref[...] += _dot(a_ref[...], b_ref[...])

            @pl.when(pl.program_id(2) == pl.num_programs(2) - 1)
            def _():
                acc = acc_ref[...]
                z_ref[...] = acc.astype(z_ref.dtype)
                s_ref[...] = (acc + p_ref[...]).astype(s_ref.dtype)
    else:
        def kern(a_ref, b_ref, p_ref, s_ref, acc_ref):
            @pl.when(pl.program_id(2) == 0)
            def _():
                acc_ref[...] = jnp.zeros_like(acc_ref)

            acc_ref[...] += _dot(a_ref[...], b_ref[...])

            @pl.when(pl.program_id(2) == pl.num_programs(2) - 1)
            def _():
                s_ref[...] = (acc_ref[...] + p_ref[...]).astype(s_ref.dtype)
    return kern


def matmul_pallas(a, b, add_to=None, *, transpose_a=False, return_z=True,
                  z_dtype=jnp.float32, out_dtype=jnp.float32,
                  tm=512, tn=512, tk=512):
    """Computes P = a @ b (or a.T @ b if transpose_a).

    add_to is None              -> returns P                        [out_dtype]
    add_to given, return_z=True -> returns (P [z_dtype], add_to + P [f32])
    add_to given, return_z=False-> returns add_to + P [f32]
    """
    if transpose_a:
        K, M = a.shape
    else:
        M, K = a.shape
    K2, N = b.shape
    assert K == K2
    if add_to is not None:
        assert add_to.shape == (M, N)
    f32 = jnp.float32

    tm = _fit_tile(M, tm, 128 if transpose_a else 8)
    tn = _fit_tile(N, tn, 128)
    tk = _fit_tile(K, tk, 128)
    single_k = (tk == K)
    fuse_add = add_to is not None

    kern = _make_mm_kernel(transpose_a, fuse_add, return_z, single_k)

    if single_k:
        grid = (M // tm, N // tn)
        if transpose_a:
            a_spec = pl.BlockSpec((K, tm), lambda i, j: (0, i))
        else:
            a_spec = pl.BlockSpec((tm, K), lambda i, j: (i, 0))
        b_spec = pl.BlockSpec((K, tn), lambda i, j: (0, j))
        o_spec = pl.BlockSpec((tm, tn), lambda i, j: (i, j))
        sem = ("parallel", "parallel")
        scratch = []
    else:
        grid = (M // tm, N // tn, K // tk)
        if transpose_a:
            a_spec = pl.BlockSpec((tk, tm), lambda i, j, k: (k, i))
        else:
            a_spec = pl.BlockSpec((tm, tk), lambda i, j, k: (i, k))
        b_spec = pl.BlockSpec((tk, tn), lambda i, j, k: (k, j))
        o_spec = pl.BlockSpec((tm, tn), lambda i, j, k: (i, j))
        sem = ("parallel", "parallel", "arbitrary")
        scratch = [pltpu.VMEM((tm, tn), f32)]

    cp = pltpu.CompilerParams(dimension_semantics=sem,
                              vmem_limit_bytes=_VMEM_LIMIT_BYTES)

    if not fuse_add:
        return pl.pallas_call(
            kern,
            out_shape=jax.ShapeDtypeStruct((M, N), out_dtype),
            grid_spec=pltpu.PrefetchScalarGridSpec(
                num_scalar_prefetch=0, grid=grid,
                in_specs=[a_spec, b_spec], out_specs=o_spec,
                scratch_shapes=scratch),
            compiler_params=cp,
        )(a, b)

    if return_z:
        out_shape = (jax.ShapeDtypeStruct((M, N), z_dtype),
                     jax.ShapeDtypeStruct((M, N), f32))
        out_specs = (o_spec, o_spec)
    else:
        out_shape = jax.ShapeDtypeStruct((M, N), f32)
        out_specs = o_spec
    return pl.pallas_call(
        kern,
        out_shape=out_shape,
        grid_spec=pltpu.PrefetchScalarGridSpec(
            num_scalar_prefetch=0, grid=grid,
            in_specs=[a_spec, b_spec, o_spec], out_specs=out_specs,
            scratch_shapes=scratch),
        compiler_params=cp,
    )(a, b, add_to)


# ----------------------------------------------------------------------------
# Fused contrastive reduction:  sum_j exp((x @ w.T)[i, j] / temp)
# ----------------------------------------------------------------------------

def _expsum_kernel(x_ref, w_ref, o_ref, acc_ref, *, inv_temp, lane_dense):
    @pl.when(pl.program_id(1) == 0)
    def _():
        acc_ref[...] = jnp.zeros_like(acc_ref)

    # Contract the trailing (lane) dims of both operands: no in-kernel transpose.
    # NOTE: matches the PyTorch reference — no running-max / logsumexp stabilization.
    s = lax.dot_general(x_ref[...], w_ref[...], (((1,), (1,)), ((), ())),
                        preferred_element_type=jnp.float32) * inv_temp
    e = jnp.exp(s)
    if lane_dense:
        # Partial reduce over aligned 128-lane groups (VPU adds only); the final
        # 128-lane reduce happens outside on the tiny (B, 128) output.
        ng = e.shape[1] // 128
        part = e[:, :128]
        for g in range(1, ng):
            part = part + e[:, g * 128:(g + 1) * 128]
        acc_ref[...] += part
    else:
        acc_ref[...] += e.sum(axis=1, keepdims=True)

    @pl.when(pl.program_id(1) == pl.num_programs(1) - 1)
    def _():
        o_ref[...] = acc_ref[...]


def expsum_pallas(x, w, temp, *, tb=256, tn=512):
    """Returns sum_j exp((x @ w.T)[i, j] / temp) with shape (B,).  f32 only
    (kernel is EUP/exp-bound, not MXU-bound)."""
    B, d = x.shape
    N, d2 = w.shape
    assert d == d2
    x = x.astype(jnp.float32)
    w = w.astype(jnp.float32)

    tb = _fit_tile(B, tb, 8)
    if tb == B and B >= 16 and (B // 2) % 8 == 0:
        tb = B // 2              # >= 2 parallel tiles so both v7x TCs run
    tn = _fit_tile(N, tn, 128)
    lane_dense = (tn % 128 == 0)
    out_w = 128 if lane_dense else 1

    kern = functools.partial(_expsum_kernel, inv_temp=float(1.0 / temp),
                             lane_dense=lane_dense)
    out = pl.pallas_call(
        kern,
        out_shape=jax.ShapeDtypeStruct((B, out_w), jnp.float32),
        grid_spec=pltpu.PrefetchScalarGridSpec(
            num_scalar_prefetch=0,
            grid=(B // tb, N // tn),
            in_specs=[pl.BlockSpec((tb, d), lambda i, j: (i, 0)),
                      pl.BlockSpec((tn, d), lambda i, j: (j, 0))],
            out_specs=pl.BlockSpec((tb, out_w), lambda i, j: (i, 0)),
            scratch_shapes=[pltpu.VMEM((tb, out_w), jnp.float32)]),
        compiler_params=pltpu.CompilerParams(
            dimension_semantics=("parallel", "arbitrary")),
    )(x, w)
    return out.sum(axis=1) if lane_dense else out[:, 0]


def _rowdot(a, b):
    # Tiny (B, d) row-wise dot: plain jnp so XLA fuses it with the gathers.
    return jnp.sum(a * b, axis=-1)


# ----------------------------------------------------------------------------
# LightGCL training-loss forward (equivalent to _LightGCL.forward, test=False)
# ----------------------------------------------------------------------------

def lightgcl_loss(E_u_0, E_i_0, adj_norm, u_mul_s, v_mul_s, ut, vt,
                  uids, iids, pos, neg,
                  l, temp, lambda_1, lambda_2, mxu_dtype=None):
    f32 = jnp.float32
    if mxu_dtype is not None:
        # Hoisted, one-time cast of loop-invariant MXU operands: the propagation
        # matmuls are HBM-bound, so reading adj / factors in bf16 halves the
        # dominant HBM stream.  Running sums stay f32.
        adj_mm = adj_norm.astype(mxu_dtype)
        u_mul_s_mm = u_mul_s.astype(mxu_dtype)
        v_mul_s_mm = v_mul_s.astype(mxu_dtype)
        ut_mm = ut.astype(mxu_dtype)
        vt_mm = vt.astype(mxu_dtype)
        E_u_prev = E_u_0.astype(mxu_dtype)
        E_i_prev = E_i_0.astype(mxu_dtype)
        z_dtype = mxu_dtype
    else:
        adj_mm, u_mul_s_mm, v_mul_s_mm = adj_norm, u_mul_s, v_mul_s
        ut_mm, vt_mm = ut, vt
        E_u_prev, E_i_prev = E_u_0, E_i_0
        z_dtype = f32

    E_u_sum, E_i_sum = E_u_0, E_i_0   # E_*_list[0]
    G_u_sum, G_i_sum = E_u_0, E_i_0   # G_*_list[0]

    for _ in range(l):
        # dropout == 0.0  =>  sparse_dropout(adj) == adj (identity)
        # Z_u = adj @ E_i ; E_u_sum += Z_u  (fused, Z emitted in z_dtype)
        Z_u, E_u_sum = matmul_pallas(adj_mm, E_i_prev, add_to=E_u_sum,
                                     z_dtype=z_dtype)
        # Z_i = adj.T @ E_u ; E_i_sum += Z_i  (transposed read, no adj_T copy)
        Z_i, E_i_sum = matmul_pallas(adj_mm, E_u_prev, add_to=E_i_sum,
                                     z_dtype=z_dtype, transpose_a=True)

        # Low-rank propagation, split into a tiny (q, d) matmul plus an
        # M-tiled fused matmul+add (VMEM-bounded; parallel over M on v7x).
        T_u = matmul_pallas(vt_mm, E_i_prev, out_dtype=z_dtype)            # (q, d)
        G_u_sum = matmul_pallas(u_mul_s_mm, T_u, add_to=G_u_sum,
                                return_z=False)
        T_i = matmul_pallas(ut_mm, E_u_prev, out_dtype=z_dtype)            # (q, d)
        G_i_sum = matmul_pallas(v_mul_s_mm, T_i, add_to=G_i_sum,
                                return_z=False)

        E_u_prev, E_i_prev = Z_u, Z_i

    E_u, E_i, G_u, G_i = E_u_sum, E_i_sum, G_u_sum, G_i_sum

    # ---- contrastive loss (lambda_1 branch) ----
    loss_s = jnp.float32(0.0)
    if lambda_1 > 0:
        Gu_b = jnp.take(G_u, uids, axis=0)
        Gi_b = jnp.take(G_i, iids, axis=0)
        Eu_b = jnp.take(E_u, uids, axis=0)
        Ei_b = jnp.take(E_i, iids, axis=0)

        neg_score = jnp.log(expsum_pallas(Gu_b, E_u, temp) + 1e-8).mean()
        neg_score = neg_score + jnp.log(expsum_pallas(Gi_b, E_i, temp) + 1e-8).mean()

        pos_score = jnp.clip(_rowdot(Gu_b, Eu_b) / temp, -5.0, 5.0).mean()
        pos_score = pos_score + jnp.clip(_rowdot(Gi_b, Ei_b) / temp, -5.0, 5.0).mean()

        loss_s = lambda_1 * (-pos_score + neg_score)

    # ---- BPR loss ----
    u_emb = jnp.take(E_u, uids, axis=0)
    pos_emb = jnp.take(E_i, pos, axis=0)
    neg_emb = jnp.take(E_i, neg, axis=0)
    diff = _rowdot(u_emb, pos_emb) - _rowdot(u_emb, neg_emb)
    loss_r = -jnp.mean(jax.nn.log_sigmoid(diff))

    # ---- L2 regularization over the two nn.Parameters ----
    loss_reg = lambda_2 * (jnp.sum(E_u_0 ** 2) + jnp.sum(E_i_0 ** 2))

    return loss_r + loss_s + loss_reg


# Pure-JAX reference (same math, no Pallas) for a correctness check.
def lightgcl_loss_ref(E_u_0, E_i_0, adj_norm, u_mul_s, v_mul_s, ut, vt,
                      uids, iids, pos, neg, l, temp, lambda_1, lambda_2):
    E_u_prev, E_i_prev = E_u_0, E_i_0
    E_u, E_i, G_u, G_i = E_u_0, E_i_0, E_u_0, E_i_0
    for _ in range(l):
        Z_u = adj_norm @ E_i_prev
        Z_i = adj_norm.T @ E_u_prev
        G_u_l = u_mul_s @ (vt @ E_i_prev)
        G_i_l = v_mul_s @ (ut @ E_u_prev)
        E_u, E_i = E_u + Z_u, E_i + Z_i
        G_u, G_i = G_u + G_u_l, G_i + G_i_l
        E_u_prev, E_i_prev = Z_u, Z_i

    neg_score = jnp.log(jnp.exp(G_u[uids] @ E_u.T / temp).sum(1) + 1e-8).mean()
    neg_score += jnp.log(jnp.exp(G_i[iids] @ E_i.T / temp).sum(1) + 1e-8).mean()
    pos_score = jnp.clip((G_u[uids] * E_u[uids]).sum(1) / temp, -5.0, 5.0).mean()
    pos_score += jnp.clip((G_i[iids] * E_i[iids]).sum(1) / temp, -5.0, 5.0).mean()
    loss_s = lambda_1 * (-pos_score + neg_score)

    diff = (E_u[uids] * E_i[pos]).sum(-1) - (E_u[uids] * E_i[neg]).sum(-1)
    loss_r = -jnp.mean(jax.nn.log_sigmoid(diff))
    loss_reg = lambda_2 * (jnp.sum(E_u_0 ** 2) + jnp.sum(E_i_0 ** 2))
    return loss_r + loss_s + loss_reg


if __name__ == "__main__":
    n_u, n_i, d, q = 256, 256, 128, 128
    l, temp, lambda_1, lambda_2 = 2, 0.2, 0.2, 1e-7
    batch = 64

    key = jax.random.PRNGKey(0)
    keys = jax.random.split(key, 12)

    # Xavier-uniform init of the two nn.Parameters.
    bu = float(jnp.sqrt(6.0 / (n_u + d)))
    bi = float(jnp.sqrt(6.0 / (n_i + d)))
    E_u_0 = jax.random.uniform(keys[0], (n_u, d), jnp.float32, -bu, bu)
    E_i_0 = jax.random.uniform(keys[1], (n_i, d), jnp.float32, -bi, bi)

    # Synthetic symmetrically-normalized interaction graph (dense stand-in for
    # the sparse adj_norm; torch.spmm(sparse, dense) == dense matmul semantics).
    mask = jax.random.bernoulli(keys[2], 0.05, (n_u, n_i)).astype(jnp.float32)
    deg_u = mask.sum(axis=1, keepdims=True) + 1e-8
    deg_i = mask.sum(axis=0, keepdims=True) + 1e-8
    adj_norm = mask / jnp.sqrt(deg_u * deg_i)

    # Synthetic truncated-SVD factors.
    u_mul_s = 0.05 * jax.random.normal(keys[3], (n_u, q), jnp.float32)
    v_mul_s = 0.05 * jax.random.normal(keys[4], (n_i, q), jnp.float32)
    ut = 0.05 * jax.random.normal(keys[5], (q, n_u), jnp.float32)
    vt = 0.05 * jax.random.normal(keys[6], (q, n_i), jnp.float32)

    uids = jax.random.randint(keys[7], (batch,), 0, n_u)
    iids = jax.random.randint(keys[8], (batch,), 0, n_i)
    pos = jax.random.randint(keys[9], (batch,), 0, n_i)
    neg = jax.random.randint(keys[10], (batch,), 0, n_i)

    loss_fn = jax.jit(lightgcl_loss,
                      static_argnames=("l", "temp", "lambda_1", "lambda_2",
                                       "mxu_dtype"))

    # f32 path
    loss = loss_fn(E_u_0, E_i_0, adj_norm, u_mul_s, v_mul_s, ut, vt,
                   uids, iids, pos, neg,
                   l=l, temp=temp, lambda_1=lambda_1, lambda_2=lambda_2)
    loss = jax.block_until_ready(loss)

    loss_ref = jax.block_until_ready(
        lightgcl_loss_ref(E_u_0, E_i_0, adj_norm, u_mul_s, v_mul_s, ut, vt,
                          uids, iids, pos, neg, l, temp, lambda_1, lambda_2))

    assert jnp.isfinite(loss), "loss is not finite"
    assert jnp.allclose(loss, loss_ref, rtol=1e-3, atol=1e-3), (loss, loss_ref)

    # bf16-MXU / bf16-HBM path (f32 accumulation, looser tolerance).
    loss_bf16 = loss_fn(E_u_0, E_i_0, adj_norm, u_mul_s, v_mul_s, ut, vt,
                        uids, iids, pos, neg,
                        l=l, temp=temp, lambda_1=lambda_1, lambda_2=lambda_2,
                        mxu_dtype=jnp.bfloat16)
    loss_bf16 = jax.block_until_ready(loss_bf16)
    assert jnp.isfinite(loss_bf16), "bf16 loss is not finite"
    assert jnp.allclose(loss_bf16, loss_ref, rtol=5e-2, atol=5e-2), (loss_bf16, loss_ref)

    # Exercise paths the main sizes miss: K-tiled accumulator kernels and the
    # transposed-A read (single-K + K-tiled), plus the fused-add K-tiled kernel.
    p_chk = matmul_pallas(adj_norm, E_i_0, tk=128)
    t_chk = matmul_pallas(adj_norm, E_u_0, transpose_a=True)
    t2_chk = matmul_pallas(adj_norm, E_u_0, transpose_a=True, tk=128)
    z_chk, s_chk = matmul_pallas(adj_norm, E_i_0, add_to=E_u_0, tk=128)
    jax.block_until_ready((p_chk, t_chk, t2_chk, z_chk, s_chk))
    assert jnp.allclose(p_chk, adj_norm @ E_i_0, rtol=1e-4, atol=1e-4)
    assert jnp.allclose(t_chk, adj_norm.T @ E_u_0, rtol=1e-4, atol=1e-4)
    assert jnp.allclose(t2_chk, adj_norm.T @ E_u_0, rtol=1e-4, atol=1e-4)
    assert jnp.allclose(z_chk, adj_norm @ E_i_0, rtol=1e-4, atol=1e-4)
    assert jnp.allclose(s_chk, E_u_0 + adj_norm @ E_i_0, rtol=1e-4, atol=1e-4)

    print("KERNEL_OK")
</pallas_src>

<mosaic_0001>
module attributes {stable_mosaic.version = 11 : i64} {
  func.func @kern(%arg0: i32, %arg1: i32, %arg2: memref<256x256xf32, #tpu.memory_space<vmem>>, %arg3: memref<256x128xf32, #tpu.memory_space<vmem>>, %arg4: memref<256x128xf32, #tpu.memory_space<vmem>>, %arg5: memref<256x128xf32, #tpu.memory_space<vmem>>, %arg6: memref<256x128xf32, #tpu.memory_space<vmem>>) attributes {dimension_semantics = [#tpu.dimension_semantics<parallel>, #tpu.dimension_semantics<parallel>], iteration_bounds = array<i64: 1, 1>, scalar_prefetch = 0 : i64, scratch_operands = 0 : i64, tpu.core_type = #tpu.core_type<tc>, window_params = [{transform_indices = @transform_0, window_bounds = array<i64: 256, 256>}, {transform_indices = @transform_1, window_bounds = array<i64: 256, 128>}, {transform_indices = @transform_2, window_bounds = array<i64: 256, 128>}, {transform_indices = @transform_3, window_bounds = array<i64: 256, 128>}, {transform_indices = @transform_4, window_bounds = array<i64: 256, 128>}]} {
    %c0 = arith.constant 0 : index
    %c0_0 = arith.constant 0 : index
    %0 = vector.load %arg2[%c0, %c0_0] : memref<256x256xf32, #tpu.memory_space<vmem>>, vector<256x256xf32>
    %c0_1 = arith.constant 0 : index
    %c0_2 = arith.constant 0 : index
    %1 = vector.load %arg3[%c0_1, %c0_2] : memref<256x128xf32, #tpu.memory_space<vmem>>, vector<256x128xf32>
    %cst = arith.constant dense<0.000000e+00> : vector<256x128xf32>
    %2 = tpu.matmul %0, %1, %cst {dimension_numbers = #tpu.dot_dimension_numbers<[1], [0], [0], [1], [0, 0, 1, 1], [], []>} : vector<256x256xf32>, vector<256x128xf32>, vector<256x128xf32> -> vector<256x128xf32>
    %c0_3 = arith.constant 0 : index
    %c0_4 = arith.constant 0 : index
    %3 = vector.load %arg5[%c0_3, %c0_4] : memref<256x128xf32, #tpu.memory_space<vmem>>, vector<256x128xf32>
    tpu.vector_store %arg5[%c0_3, %c0_4], %2 {strides = array<i32>} : memref<256x128xf32, #tpu.memory_space<vmem>>, vector<256x128xf32>,
    %c0_5 = arith.constant 0 : index
    %c0_6 = arith.constant 0 : index
    %4 = vector.load %arg4[%c0_5, %c0_6] : memref<256x128xf32, #tpu.memory_space<vmem>>, vector<256x128xf32>
    %5 = arith.addf %2, %4 : vector<256x128xf32>
    %c0_7 = arith.constant 0 : index
    %c0_8 = arith.constant 0 : index
    %6 = vector.load %arg6[%c0_7, %c0_8] : memref<256x128xf32, #tpu.memory_space<vmem>>, vector<256x128xf32>
    tpu.vector_store %arg6[%c0_7, %c0_8], %5 {strides = array<i32>} : memref<256x128xf32, #tpu.memory_space<vmem>>, vector<256x128xf32>,
    return
  }
  func.func @transform_0(%arg0: i32, %arg1: i32) -> (i32, i32) {
    %c0_i32 = arith.constant 0 : i32
    %c0_i32_0 = arith.constant 0 : i32
    return %arg0, %c0_i32 : i32, i32
  }
  func.func @transform_1(%arg0: i32, %arg1: i32) -> (i32, i32) {
    %c0_i32 = arith.constant 0 : i32
    %c0_i32_0 = arith.constant 0 : i32
    return %c0_i32, %arg1 : i32, i32
  }
  func.func @transform_2(%arg0: i32, %arg1: i32) -> (i32, i32) {
    %c0_i32 = arith.constant 0 : i32
    return %arg0, %arg1 : i32, i32
  }
  func.func @transform_3(%arg0: i32, %arg1: i32) -> (i32, i32) {
    %c0_i32 = arith.constant 0 : i32
    return %arg0, %arg1 : i32, i32
  }
  func.func @transform_4(%arg0: i32, %arg1: i32) -> (i32, i32) {
    %c0_i32 = arith.constant 0 : i32
    return %arg0, %arg1 : i32, i32
  }
}

module attributes {stable_mosaic.version = 11 : i64} {
  func.func @kern(%arg0: i32, %arg1: i32, %arg2: memref<256x256xf32, #tpu.memory_space<vmem>>, %arg3: memref<256x128xf32, #tpu.memory_space<vmem>>, %arg4: memref<256x128xf32, #tpu.memory_space<vmem>>, %arg5: memref<256x128xf32, #tpu.memory_space<vmem>>, %arg6: memref<256x128xf32, #tpu.memory_space<vmem>>) attributes {dimension_semantics = [#tpu.dimension_semantics<parallel>, #tpu.dimension_semantics<parallel>], iteration_bounds = array<i64: 1, 1>, scalar_prefetch = 0 : i64, scratch_operands = 0 : i64, tpu.core_type = #tpu.core_type<tc>, window_params = [{transform_indices = @transform_0, window_bounds = array<i64: 256, 256>}, {transform_indices = @transform_1, window_bounds = array<i64: 256, 128>}, {transform_indices = @transform_2, window_bounds = array<i64: 256, 128>}, {transform_indices = @transform_3, window_bounds = array<i64: 256, 128>}, {transform_indices = @transform_4, window_bounds = array<i64: 256, 128>}]} {
    %c0 = arith.constant 0 : index
    %c0_0 = arith.constant 0 : index
    %0 = vector.load %arg2[%c0, %c0_0] : memref<256x256xf32, #tpu.memory_space<vmem>>, vector<256x256xf32>
    %c0_1 = arith.constant 0 : index
    %c0_2 = arith.constant 0 : index
    %1 = vector.load %arg3[%c0_1, %c0_2] : memref<256x128xf32, #tpu.memory_space<vmem>>, vector<256x128xf32>
    %cst = arith.constant dense<0.000000e+00> : vector<256x128xf32>
    %2 = tpu.matmul %0, %1, %cst {dimension_numbers = #tpu.dot_dimension_numbers<[0], [0], [1], [1], [0, 1, 1, 1], [], []>} : vector<256x256xf32>, vector<256x128xf32>, vector<256x128xf32> -> vector<256x128xf32>
    %c0_3 = arith.constant 0 : index
    %c0_4 = arith.constant 0 : index
    %3 = vector.load %arg5[%c0_3, %c0_4] : memref<256x128xf32, #tpu.memory_space<vmem>>, vector<256x128xf32>
    tpu.vector_store %arg5[%c0_3, %c0_4], %2 {strides = array<i32>} : memref<256x128xf32, #tpu.memory_space<vmem>>, vector<256x128xf32>,
    %c0_5 = arith.constant 0 : index
    %c0_6 = arith.constant 0 : index
    %4 = vector.load %arg4[%c0_5, %c0_6] : memref<256x128xf32, #tpu.memory_space<vmem>>, vector<256x128xf32>
    %5 = arith.addf %2, %4 : vector<256x128xf32>
    %c0_7 = arith.constant 0 : index
    %c0_8 = arith.constant 0 : index
    %6 = vector.load %arg6[%c0_7, %c0_8] : memref<256x128xf32, #tpu.memory_space<vmem>>, vector<256x128xf32>
    tpu.vector_store %arg6[%c0_7, %c0_8], %5 {strides = array<i32>} : memref<256x128xf32, #tpu.memory_space<vmem>>, vector<256x128xf32>,
    return
  }
  func.func @transform_0(%arg0: i32, %arg1: i32) -> (i32, i32) {
    %c0_i32 = arith.constant 0 : i32
    %c0_i32_0 = arith.constant 0 : i32
    return %c0_i32, %arg0 : i32, i32
  }
  func.func @transform_1(%arg0: i32, %arg1: i32) -> (i32, i32) {
    %c0_i32 = arith.constant 0 : i32
    %c0_i32_0 = arith.constant 0 : i32
    return %c0_i32, %arg1 : i32, i32
  }
  func.func @transform_2(%arg0: i32, %arg1: i32) -> (i32, i32) {
    %c0_i32 = arith.constant 0 : i32
    return %arg0, %arg1 : i32, i32
  }
  func.func @transform_3(%arg0: i32, %arg1: i32) -> (i32, i32) {
    %c0_i32 = arith.constant 0 : i32
    return %arg0, %arg1 : i32, i32
  }
  func.func @transform_4(%arg0: i32, %arg1: i32) -> (i32, i32) {
    %c0_i32 = arith.constant 0 : i32
    return %arg0, %arg1 : i32, i32
  }
}

module attributes {stable_mosaic.version = 11 : i64} {
  func.func @kern(%arg0: i32, %arg1: i32, %arg2: memref<256x256xf32, #tpu.memory_space<vmem>>, %arg3: memref<256x128xf32, #tpu.memory_space<vmem>>, %arg4: memref<256x128xf32, #tpu.memory_space<vmem>>, %arg5: memref<256x128xf32, #tpu.memory_space<vmem>>, %arg6: memref<256x128xf32, #tpu.memory_space<vmem>>) attributes {dimension_semantics = [#tpu.dimension_semantics<parallel>, #tpu.dimension_semantics<parallel>], iteration_bounds = array<i64: 1, 1>, scalar_prefetch = 0 : i64, scratch_operands = 0 : i64, tpu.core_type = #tpu.core_type<tc>, window_params = [{transform_indices = @transform_0, window_bounds = array<i64: 256, 256>}, {transform_indices = @transform_1, window_bounds = array<i64: 256, 128>}, {transform_indices = @transform_2, window_bounds = array<i64: 256, 128>}, {transform_indices = @transform_3, window_bounds = array<i64: 256, 128>}, {transform_indices = @transform_4, window_bounds = array<i64: 256, 128>}]} {
    %c0 = arith.constant 0 : index
    %c0_0 = arith.constant 0 : index
    %0 = vector.load %arg2[%c0, %c0_0] : memref<256x256xf32, #tpu.memory_space<vmem>>, vector<256x256xf32>
    %c0_1 = arith.constant 0 : index
    %c0_2 = arith.constant 0 : index
    %1 = vector.load %arg3[%c0_1, %c0_2] : memref<256x128xf32, #tpu.memory_space<vmem>>, vector<256x128xf32>
    %cst = arith.constant dense<0.000000e+00> : vector<256x128xf32>
    %2 = tpu.matmul %0, %1, %cst {dimension_numbers = #tpu.dot_dimension_numbers<[1], [0], [0], [1], [0, 0, 1, 1], [], []>} : vector<256x256xf32>, vector<256x128xf32>, vector<256x128xf32> -> vector<256x128xf32>
    %c0_3 = arith.constant 0 : index
    %c0_4 = arith.constant 0 : index
    %3 = vector.load %arg5[%c0_3, %c0_4] : memref<256x128xf32, #tpu.memory_space<vmem>>, vector<256x128xf32>
    tpu.vector_store %arg5[%c0_3, %c0_4], %2 {strides = array<i32>} : memref<256x128xf32, #tpu.memory_space<vmem>>, vector<256x128xf32>,
    %c0_5 = arith.constant 0 : index
    %c0_6 = arith.constant 0 : index
    %4 = vector.load %arg4[%c0_5, %c0_6] : memref<256x128xf32, #tpu.memory_space<vmem>>, vector<256x128xf32>
    %5 = arith.addf %2, %4 : vector<256x128xf32>
    %c0_7 = arith.constant 0 : index
    %c0_8 = arith.constant 0 : index
    %6 = vector.load %arg6[%c0_7, %c0_8] : memref<256x128xf32, #tpu.memory_space<vmem>>, vector<256x128xf32>
    tpu.vector_store %arg6[%c0_7, %c0_8], %5 {strides = array<i32>} : memref<256x128xf32, #tpu.memory_space<vmem>>, vector<256x128xf32>,
    return
  }
  func.func @transform_0(%arg0: i32, %arg1: i32) -> (i32, i32) {
    %c0_i32 = arith.constant 0 : i32
    %c0_i32_0 = arith.constant 0 : i32
    return %arg0, %c0_i32 : i32, i32
  }
  func.func @transform_1(%arg0: i32, %arg1: i32) -> (i32, i32) {
    %c0_i32 = arith.constant 0 : i32
    %c0_i32_0 = arith.constant 0 : i32
    return %c0_i32, %arg1 : i32, i32
  }
  func.func @transform_2(%arg0: i32, %arg1: i32) -> (i32, i32) {
    %c0_i32 = arith.constant 0 : i32
    return %arg0, %arg1 : i32, i32
  }
  func.func @transform_3(%arg0: i32, %arg1: i32) -> (i32, i32) {
    %c0_i32 = arith.constant 0 : i32
    return %arg0, %arg1 : i32, i32
  }
  func.func @transform_4(%arg0: i32, %arg1: i32) -> (i32, i32) {
    %c0_i32 = arith.constant 0 : i32
    return %arg0, %arg1 : i32, i32
  }
}

module attributes {stable_mosaic.version = 11 : i64} {
  func.func @kern(%arg0: i32, %arg1: i32, %arg2: memref<128x256xf32, #tpu.memory_space<vmem>>, %arg3: memref<256x128xf32, #tpu.memory_space<vmem>>, %arg4: memref<128x128xf32, #tpu.memory_space<vmem>>) attributes {dimension_semantics = [#tpu.dimension_semantics<parallel>, #tpu.dimension_semantics<parallel>], iteration_bounds = array<i64: 1, 1>, scalar_prefetch = 0 : i64, scratch_operands = 0 : i64, tpu.core_type = #tpu.core_type<tc>, window_params = [{transform_indices = @transform_0, window_bounds = array<i64: 128, 256>}, {transform_indices = @transform_1, window_bounds = array<i64: 256, 128>}, {transform_indices = @transform_2, window_bounds = array<i64: 128, 128>}]} {
    %c0 = arith.constant 0 : index
    %c0_0 = arith.constant 0 : index
    %0 = vector.load %arg2[%c0, %c0_0] : memref<128x256xf32, #tpu.memory_space<vmem>>, vector<128x256xf32>
    %c0_1 = arith.constant 0 : index
    %c0_2 = arith.constant 0 : index
    %1 = vector.load %arg3[%c0_1, %c0_2] : memref<256x128xf32, #tpu.memory_space<vmem>>, vector<256x128xf32>
    %cst = arith.constant dense<0.000000e+00> : vector<128x128xf32>
    %2 = tpu.matmul %0, %1, %cst {dimension_numbers = #tpu.dot_dimension_numbers<[1], [0], [0], [1], [0, 0, 1, 1], [], []>} : vector<128x256xf32>, vector<256x128xf32>, vector<128x128xf32> -> vector<128x128xf32>
    %c0_3 = arith.constant 0 : index
    %c0_4 = arith.constant 0 : index
    %3 = vector.load %arg4[%c0_3, %c0_4] : memref<128x128xf32, #tpu.memory_space<vmem>>, vector<128x128xf32>
    tpu.vector_store %arg4[%c0_3, %c0_4], %2 {strides = array<i32>} : memref<128x128xf32, #tpu.memory_space<vmem>>, vector<128x128xf32>,
    return
  }
  func.func @transform_0(%arg0: i32, %arg1: i32) -> (i32, i32) {
    %c0_i32 = arith.constant 0 : i32
    %c0_i32_0 = arith.constant 0 : i32
    return %arg0, %c0_i32 : i32, i32
  }
  func.func @transform_1(%arg0: i32, %arg1: i32) -> (i32, i32) {
    %c0_i32 = arith.constant 0 : i32
    %c0_i32_0 = arith.constant 0 : i32
    return %c0_i32, %arg1 : i32, i32
  }
  func.func @transform_2(%arg0: i32, %arg1: i32) -> (i32, i32) {
    %c0_i32 = arith.constant 0 : i32
    return %arg0, %arg1 : i32, i32
  }
}

module attributes {stable_mosaic.version = 11 : i64} {
  func.func @kern(%arg0: i32, %arg1: i32, %arg2: memref<256x128xf32, #tpu.memory_space<vmem>>, %arg3: memref<128x128xf32, #tpu.memory_space<vmem>>, %arg4: memref<256x128xf32, #tpu.memory_space<vmem>>, %arg5: memref<256x128xf32, #tpu.memory_space<vmem>>) attributes {dimension_semantics = [#tpu.dimension_semantics<parallel>, #tpu.dimension_semantics<parallel>], iteration_bounds = array<i64: 1, 1>, scalar_prefetch = 0 : i64, scratch_operands = 0 : i64, tpu.core_type = #tpu.core_type<tc>, window_params = [{transform_indices = @transform_0, window_bounds = array<i64: 256, 128>}, {transform_indices = @transform_1, window_bounds = array<i64: 128, 128>}, {transform_indices = @transform_2, window_bounds = array<i64: 256, 128>}, {transform_indices = @transform_3, window_bounds = array<i64: 256, 128>}]} {
    %c0 = arith.constant 0 : index
    %c0_0 = arith.constant 0 : index
    %0 = vector.load %arg2[%c0, %c0_0] : memref<256x128xf32, #tpu.memory_space<vmem>>, vector<256x128xf32>
    %c0_1 = arith.constant 0 : index
    %c0_2 = arith.constant 0 : index
    %1 = vector.load %arg3[%c0_1, %c0_2] : memref<128x128xf32, #tpu.memory_space<vmem>>, vector<128x128xf32>
    %cst = arith.constant dense<0.000000e+00> : vector<256x128xf32>
    %2 = tpu.matmul %0, %1, %cst {dimension_numbers = #tpu.dot_dimension_numbers<[1], [0], [0], [1], [0, 0, 1, 1], [], []>} : vector<256x128xf32>, vector<128x128xf32>, vector<256x128xf32> -> vector<256x128xf32>
    %c0_3 = arith.constant 0 : index
    %c0_4 = arith.constant 0 : index
    %3 = vector.load %arg4[%c0_3, %c0_4] : memref<256x128xf32, #tpu.memory_space<vmem>>, vector<256x128xf32>
    %4 = arith.addf %2, %3 : vector<256x128xf32>
    %c0_5 = arith.constant 0 : index
    %c0_6 = arith.constant 0 : index
    %5 = vector.load %arg5[%c0_5, %c0_6] : memref<256x128xf32, #tpu.memory_space<vmem>>, vector<256x128xf32>
    tpu.vector_store %arg5[%c0_5, %c0_6], %4 {strides = array<i32>} : memref<256x128xf32, #tpu.memory_space<vmem>>, vector<256x128xf32>,
    return
  }
  func.func @transform_0(%arg0: i32, %arg1: i32) -> (i32, i32) {
    %c0_i32 = arith.constant 0 : i32
    %c0_i32_0 = arith.constant 0 : i32
    return %arg0, %c0_i32 : i32, i32
  }
  func.func @transform_1(%arg0: i32, %arg1: i32) -> (i32, i32) {
    %c0_i32 = arith.constant 0 : i32
    %c0_i32_0 = arith.constant 0 : i32
    return %c0_i32, %arg1 : i32, i32
  }
  func.func @transform_2(%arg0: i32, %arg1: i32) -> (i32, i32) {
    %c0_i32 = arith.constant 0 : i32
    return %arg0, %arg1 : i32, i32
  }
  func.func @transform_3(%arg0: i32, %arg1: i32) -> (i32, i32) {
    %c0_i32 = arith.constant 0 : i32
    return %arg0, %arg1 : i32, i32
  }
}

module attributes {stable_mosaic.version = 11 : i64} {
  func.func @kern(%arg0: i32, %arg1: i32, %arg2: memref<256x256xf32, #tpu.memory_space<vmem>>, %arg3: memref<256x128xf32, #tpu.memory_space<vmem>>, %arg4: memref<256x128xf32, #tpu.memory_space<vmem>>, %arg5: memref<256x128xf32, #tpu.memory_space<vmem>>, %arg6: memref<256x128xf32, #tpu.memory_space<vmem>>) attributes {dimension_semantics = [#tpu.dimension_semantics<parallel>, #tpu.dimension_semantics<parallel>], iteration_bounds = array<i64: 1, 1>, scalar_prefetch = 0 : i64, scratch_operands = 0 : i64, tpu.core_type = #tpu.core_type<tc>, window_params = [{transform_indices = @transform_0, window_bounds = array<i64: 256, 256>}, {transform_indices = @transform_1, window_bounds = array<i64: 256, 128>}, {transform_indices = @transform_2, window_bounds = array<i64: 256, 128>}, {transform_indices = @transform_3, window_bounds = array<i64: 256, 128>}, {transform_indices = @transform_4, window_bounds = array<i64: 256, 128>}]} {
    %c0 = arith.constant 0 : index
    %c0_0 = arith.constant 0 : index
    %0 = vector.load %arg2[%c0, %c0_0] : memref<256x256xf32, #tpu.memory_space<vmem>>, vector<256x256xf32>
    %c0_1 = arith.constant 0 : index
    %c0_2 = arith.constant 0 : index
    %1 = vector.load %arg3[%c0_1, %c0_2] : memref<256x128xf32, #tpu.memory_space<vmem>>, vector<256x128xf32>
    %cst = arith.constant dense<0.000000e+00> : vector<256x128xf32>
    %2 = tpu.matmul %0, %1, %cst {dimension_numbers = #tpu.dot_dimension_numbers<[0], [0], [1], [1], [0, 1, 1, 1], [], []>} : vector<256x256xf32>, vector<256x128xf32>, vector<256x128xf32> -> vector<256x128xf32>
    %c0_3 = arith.constant 0 : index
    %c0_4 = arith.constant 0 : index
    %3 = vector.load %arg5[%c0_3, %c0_4] : memref<256x128xf32, #tpu.memory_space<vmem>>, vector<256x128xf32>
    tpu.vector_store %arg5[%c0_3, %c0_4], %2 {strides = array<i32>} : memref<256x128xf32, #tpu.memory_space<vmem>>, vector<256x128xf32>,
    %c0_5 = arith.constant 0 : index
    %c0_6 = arith.constant 0 : index
    %4 = vector.load %arg4[%c0_5, %c0_6] : memref<256x128xf32, #tpu.memory_space<vmem>>, vector<256x128xf32>
    %5 = arith.addf %2, %4 : vector<256x128xf32>
    %c0_7 = arith.constant 0 : index
    %c0_8 = arith.constant 0 : index
    %6 = vector.load %arg6[%c0_7, %c0_8] : memref<256x128xf32, #tpu.memory_space<vmem>>, vector<256x128xf32>
    tpu.vector_store %arg6[%c0_7, %c0_8], %5 {strides = array<i32>} : memref<256x128xf32, #tpu.memory_space<vmem>>, vector<256x128xf32>,
    return
  }
  func.func @transform_0(%arg0: i32, %arg1: i32) -> (i32, i32) {
    %c0_i32 = arith.constant 0 : i32
    %c0_i32_0 = arith.constant 0 : i32
    return %c0_i32, %arg0 : i32, i32
  }
  func.func @transform_1(%arg0: i32, %arg1: i32) -> (i32, i32) {
    %c0_i32 = arith.constant 0 : i32
    %c0_i32_0 = arith.constant 0 : i32
    return %c0_i32, %arg1 : i32, i32
  }
  func.func @transform_2(%arg0: i32, %arg1: i32) -> (i32, i32) {
    %c0_i32 = arith.constant 0 : i32
    return %arg0, %arg1 : i32, i32
  }
  func.func @transform_3(%arg0: i32, %arg1: i32) -> (i32, i32) {
    %c0_i32 = arith.constant 0 : i32
    return %arg0, %arg1 : i32, i32
  }
  func.func @transform_4(%arg0: i32, %arg1: i32) -> (i32, i32) {
    %c0_i32 = arith.constant 0 : i32
    return %arg0, %arg1 : i32, i32
  }
}

module attributes {stable_mosaic.version = 11 : i64} {
  func.func @_expsum_kernel(%arg0: i32, %arg1: i32, %arg2: memref<32x128xf32, #tpu.memory_space<vmem>>, %arg3: memref<256x128xf32, #tpu.memory_space<vmem>>, %arg4: memref<32x128xf32, #tpu.memory_space<vmem>>, %arg5: memref<32x128xf32, #tpu.memory_space<vmem>>) attributes {dimension_semantics = [#tpu.dimension_semantics<parallel>, #tpu.dimension_semantics<arbitrary>], iteration_bounds = array<i64: 2, 1>, scalar_prefetch = 0 : i64, scratch_operands = 1 : i64, tpu.core_type = #tpu.core_type<tc>, window_params = [{transform_indices = @transform_0, window_bounds = array<i64: 32, 128>}, {transform_indices = @transform_1, window_bounds = array<i64: 256, 128>}, {transform_indices = @transform_2, window_bounds = array<i64: 32, 128>}]} {
    %c0_i32 = arith.constant 0 : i32
    %0 = arith.cmpi eq, %arg1, %c0_i32 : i32
    %1 = arith.extui %0 : i1 to i32
    %c0_i32_0 = arith.constant 0 : i32
    %2 = arith.cmpi ne, %1, %c0_i32_0 : i32
    scf.if %2 {
      %cst_11 = arith.constant 0.000000e+00 : f32
      %18 = vector.broadcast %cst_11 : f32 to vector<32x128xf32>
      %c0_12 = arith.constant 0 : index
      %c0_13 = arith.constant 0 : index
      %19 = vector.load %arg5[%c0_12, %c0_13] : memref<32x128xf32, #tpu.memory_space<vmem>>, vector<32x128xf32>
      tpu.vector_store %arg5[%c0_12, %c0_13], %18 {strides = array<i32>} : memref<32x128xf32, #tpu.memory_space<vmem>>, vector<32x128xf32>,
    } else {
    }
    %c0 = arith.constant 0 : index
    %c0_1 = arith.constant 0 : index
    %3 = vector.load %arg2[%c0, %c0_1] : memref<32x128xf32, #tpu.memory_space<vmem>>, vector<32x128xf32>
    %c0_2 = arith.constant 0 : index
    %c0_3 = arith.constant 0 : index
    %4 = vector.load %arg3[%c0_2, %c0_3] : memref<256x128xf32, #tpu.memory_space<vmem>>, vector<256x128xf32>
    %cst = arith.constant dense<0.000000e+00> : vector<32x256xf32>
    %5 = tpu.matmul %3, %4, %cst {dimension_numbers = #tpu.dot_dimension_numbers<[1], [1], [0], [0], [0, 0, 1, 0], [], []>} : vector<32x128xf32>, vector<256x128xf32>, vector<32x256xf32> -> vector<32x256xf32>
    %cst_4 = arith.constant 5.000000e+00 : f32
    %6 = vector.broadcast %cst_4 : f32 to vector<32x256xf32>
    %7 = arith.mulf %5, %6 : vector<32x256xf32>
    %8 = math.exp %7 : vector<32x256xf32>
    %9 = vector.extract_strided_slice %8 {offsets = [0, 0], sizes = [32, 128], strides = [1, 1]} : vector<32x256xf32> to vector<32x128xf32>
    %10 = vector.extract_strided_slice %8 {offsets = [0, 128], sizes = [32, 128], strides = [1, 1]} : vector<32x256xf32> to vector<32x128xf32>
    %11 = arith.addf %9, %10 : vector<32x128xf32>
    %c0_5 = arith.constant 0 : index
    %c0_6 = arith.constant 0 : index
    %12 = vector.load %arg5[%c0_5, %c0_6] : memref<32x128xf32, #tpu.memory_space<vmem>>, vector<32x128xf32>
    %13 = arith.addf %12, %11 : vector<32x128xf32>
    %c0_7 = arith.constant 0 : index
    %c0_8 = arith.constant 0 : index
    %14 = vector.load %arg5[%c0_7, %c0_8] : memref<32x128xf32, #tpu.memory_space<vmem>>, vector<32x128xf32>
    tpu.vector_store %arg5[%c0_7, %c0_8], %13 {strides = array<i32>} : memref<32x128xf32, #tpu.memory_space<vmem>>, vector<32x128xf32>,
    %c0_i32_9 = arith.constant 0 : i32
    %15 = arith.cmpi eq, %arg1, %c0_i32_9 : i32
    %16 = arith.extui %15 : i1 to i32
    %c0_i32_10 = arith.constant 0 : i32
    %17 = arith.cmpi ne, %16, %c0_i32_10 : i32
    scf.if %17 {
      %c0_11 = arith.constant 0 : index
      %c0_12 = arith.constant 0 : index
      %18 = vector.load %arg5[%c0_11, %c0_12] : memref<32x128xf32, #tpu.memory_space<vmem>>, vector<32x128xf32>
      %c0_13 = arith.constant 0 : index
      %c0_14 = arith.constant 0 : index
      %19 = vector.load %arg4[%c0_13, %c0_14] : memref<32x128xf32, #tpu.memory_space<vmem>>, vector<32x128xf32>
      tpu.vector_store %arg4[%c0_13, %c0_14], %18 {strides = array<i32>} : memref<32x128xf32, #tpu.memory_space<vmem>>, vector<32x128xf32>,
    } else {
    }
    return
  }
  func.func @transform_0(%arg0: i32, %arg1: i32) -> (i32, i32) {
    %c0_i32 = arith.constant 0 : i32
    %c0_i32_0 = arith.constant 0 : i32
    return %arg0, %c0_i32 : i32, i32
  }
  func.func @transform_1(%arg0: i32, %arg1: i32) -> (i32, i32) {
    %c0_i32 = arith.constant 0 : i32
    %c0_i32_0 = arith.constant 0 : i32
    return %arg1, %c0_i32 : i32, i32
  }
  func.func @transform_2(%arg0: i32, %arg1: i32) -> (i32, i32) {
    %c0_i32 = arith.constant 0 : i32
    %c0_i32_0 = arith.constant 0 : i32
    return %arg0, %c0_i32 : i32, i32
  }
}

</mosaic_0001>

<llo_original>
// kernel: lightgcl_loss.15
$region0: #{lightgcl_loss.15}
  #allocation0 [shape = 'u32[]', space=smem, size = 0x4, offset = 0x4, fixed_abs, tag = 'smem constant byte address 0x4 - core index']
  #allocation1 [shape = 'u32[144,128]{1,0:T(1,128)}', space=vmem, size = 0x12000, scoped, tag = 'internal scratch']
  %s0 = inlined_call_operand.hbm [shape: f32[256,256], index: 0, kind: input, shape index: {}]
  %s1 = inlined_call_operand.hbm [shape: f32[256,128], index: 1, kind: input, shape index: {}]
  %s2 = inlined_call_operand.hbm [shape: f32[256,128], index: 2, kind: input, shape index: {}]
  %s3 = inlined_call_operand.vmem [shape: f32[256,128], index: 3, kind: output, shape index: {0}]
  %s4 = inlined_call_operand.vmem [shape: f32[256,128], index: 4, kind: output, shape index: {1}]
  %5 = xla_tuple %s3, %s4
  %s6 = sld [smem:[#allocation0]]
  $region42: #{lightgcl_loss.15} parent=0
    _
  %s8 = ssub.s32 1, %s6
  %s9 = scalar_select 0, %s8, %s6
  $region1: #{lightgcl_loss.15} parent=0
    #allocation2 [shape = 'u8[262144]{0}', space=vmem, size = 0x40000, scoped, tag = 'input window, operand 0, single buffered']
    #allocation3 [shape = 's32[1]{0}', space=sflag, size = 0x4, scoped, tag = 'scoped memory for lightgcl_loss.15']
    #allocation4 [shape = 'u8[131072]{0}', space=vmem, size = 0x20000, scoped, tag = 'input window, operand 1, single buffered']
    #allocation5 [shape = 's32[1]{0}', space=sflag, size = 0x4, scoped, tag = 'scoped memory for lightgcl_loss.15']
    #allocation6 [shape = 'u8[131072]{0}', space=vmem, size = 0x20000, scoped, tag = 'input window, operand 2, single buffered']
    %10 = vsyncpa [#allocation3], 0
    %11 = vsyncpa [#allocation5], 0
    // Predicated region
    $region2: #{lightgcl_loss.15} parent=1 // pred_check
      _
    $region3: #{lightgcl_loss.15} parent=1 // pred_check_branch
      %13 = sbr.rel (0) target = $region5
    $region4: #{lightgcl_loss.15} parent=1 // pred_region
      %s15 = ssub.s32 8192, 8192
      %16 = vsyncadd [#allocation3], %s15
      %s17 = sshll.u32 [#allocation2], 4
      %s18 = int_to_ptr.vmem [resolvable:$true] %s17
      %23 = dma.hbm_to_vmem [thread:$0]  %s0, 8192, %s18, [#allocation3], 256, 256, 16
    $region5: #{lightgcl_loss.15} parent=1 // pred_fallthru
      _
    // Predicated region
    $region6: #{lightgcl_loss.15} parent=1 // pred_check
      _
    $region7: #{lightgcl_loss.15} parent=1 // pred_check_branch
      %25 = sbr.rel (0) target = $region9
    $region8: #{lightgcl_loss.15} parent=1 // pred_region
      %s27 = ssub.s32 4096, 4096
      %28 = vsyncadd [#allocation5], %s27
      %s29 = sshll.u32 [#allocation4], 4
      %s30 = int_to_ptr.vmem [resolvable:$true] %s29
      %35 = dma.hbm_to_vmem [thread:$0]  %s1, 4096, %s30, [#allocation5], 128, 128, 8
    $region9: #{lightgcl_loss.15} parent=1 // pred_fallthru
      _
    // Predicated region
    $region10: #{lightgcl_loss.15} parent=1 // pred_check
      _
    $region11: #{lightgcl_loss.15} parent=1 // pred_check_branch
      %37 = sbr.rel (0) target = $region13
    $region12: #{lightgcl_loss.15} parent=1 // pred_region
      %s39 = ssub.s32 4096, 4096
      %40 = vsyncadd [#allocation5], %s39
      %s41 = sshll.u32 [#allocation6], 4
      %s42 = int_to_ptr.vmem [resolvable:$true] %s41
      %47 = dma.hbm_to_vmem [thread:$0]  %s2, 4096, %s42, [#allocation5], 128, 128, 8
    $region13: #{lightgcl_loss.15} parent=1 // pred_fallthru
      _
    // Predicated region
    $region14: #{lightgcl_loss.15} parent=1 // pred_check
      _
    $region15: #{lightgcl_loss.15} parent=1 // pred_check_branch
      %49 = sbr.rel (0) target = $region17
    $region16: #{lightgcl_loss.15} parent=1 // pred_region
      %50 = dma.done [#allocation3], 8192
    $region17: #{lightgcl_loss.15} parent=1 // pred_fallthru
      _
    // Predicated region
    $region18: #{lightgcl_loss.15} parent=1 // pred_check
      _
    $region19: #{lightgcl_loss.15} parent=1 // pred_check_branch
      %52 = sbr.rel (0) target = $region21
    $region20: #{lightgcl_loss.15} parent=1 // pred_region
      %53 = dma.done [#allocation5], 4096
    $region21: #{lightgcl_loss.15} parent=1 // pred_fallthru
      _
    // Predicated region
    $region22: #{lightgcl_loss.15} parent=1 // pred_check
      _
    $region23: #{lightgcl_loss.15} parent=1 // pred_check_branch
      %55 = sbr.rel (0) target = $region25
    $region24: #{lightgcl_loss.15} parent=1 // pred_region
      %56 = dma.done [#allocation5], 4096
    $region25: #{lightgcl_loss.15} parent=1 // pred_fallthru
      _
    %v57 = vld [vmem:[#allocation2] sm:$0xff]
    %v58 = vld [vmem:[#allocation2 + $0x8] sm:$0xff]
    %v59 = vld [vmem:[#allocation2 + $0x10] sm:$0xff]
    %v60 = vld [vmem:[#allocation2 + $0x18] sm:$0xff]
    %v61 = vld [vmem:[#allocation2 + $0x20] sm:$0xff]
    %v62 = vld [vmem:[#allocation2 + $0x28] sm:$0xff]
    %v63 = vld [vmem:[#allocation2 + $0x30] sm:$0xff]
    %v64 = vld [vmem:[#allocation2 + $0x38] sm:$0xff]
    %v65 = vld [vmem:[#allocation2 + $0x40] sm:$0xff]
    %v66 = vld [vmem:[#allocation2 + $0x48] sm:$0xff]
    %v67 = vld [vmem:[#allocation2 + $0x50] sm:$0xff]
    %v68 = vld [vmem:[#allocation2 + $0x58] sm:$0xff]
    %v69 = vld [vmem:[#allocation2 + $0x60] sm:$0xff]
    %v70 = vld [vmem:[#allocation2 + $0x68] sm:$0xff]
    %v71 = vld [vmem:[#allocation2 + $0x70] sm:$0xff]
    %v72 = vld [vmem:[#allocation2 + $0x78] sm:$0xff]
    %v73 = vld [vmem:[#allocation2 + $0x80] sm:$0xff]
    %v74 = vld [vmem:[#allocation2 + $0x88] sm:$0xff]
    %v75 = vld [vmem:[#allocation2 + $0x90] sm:$0xff]
    %v76 = vld [vmem:[#allocation2 + $0x98] sm:$0xff]
    %v77 = vld [vmem:[#allocation2 + $0xa0] sm:$0xff]
    %v78 = vld [vmem:[#allocation2 + $0xa8] sm:$0xff]
    %v79 = vld [vmem:[#allocation2 + $0xb0] sm:$0xff]
    %v80 = vld [vmem:[#allocation2 + $0xb8] sm:$0xff]
    %v81 = vld [vmem:[#allocation2 + $0xc0] sm:$0xff]
    %v82 = vld [vmem:[#allocation2 + $0xc8] sm:$0xff]
    %v83 = vld [vmem:[#allocation2 + $0xd0] sm:$0xff]
    %v84 = vld [vmem:[#allocation2 + $0xd8] sm:$0xff]
    %v85 = vld [vmem:[#allocation2 + $0xe0] sm:$0xff]
    %v86 = vld [vmem:[#allocation2 + $0xe8] sm:$0xff]
    %v87 = vld [vmem:[#allocation2 + $0xf0] sm:$0xff]
    %v88 = vld [vmem:[#allocation2 + $0xf8] sm:$0xff]
    %v89 = vld [vmem:[#allocation2 + $0x100] sm:$0xff]
    %v90 = vld [vmem:[#allocation2 + $0x108] sm:$0xff]
    %v91 = vld [vmem:[#allocation2 + $0x110] sm:$0xff]
    %v92 = vld [vmem:[#allocation2 + $0x118] sm:$0xff]
    %v93 = vld [vmem:[#allocation2 + $0x120] sm:$0xff]
    %v94 = vld [vmem:[#allocation2 + $0x128] sm:$0xff]
    %v95 = vld [vmem:[#allocation2 + $0x130] sm:$0xff]
    %v96 = vld [vmem:[#allocation2 + $0x138] sm:$0xff]
    %v97 = vld [vmem:[#allocation2 + $0x140] sm:$0xff]
    %v98 = vld [vmem:[#allocation2 + $0x148] sm:$0xff]
    %v99 = vld [vmem:[#allocation2 + $0x150] sm:$0xff]
    %v100 = vld [vmem:[#allocation2 + $0x158] sm:$0xff]
    %v101 = vld [vmem:[#allocation2 + $0x160] sm:$0xff]
    %v102 = vld [vmem:[#allocation2 + $0x168] sm:$0xff]
    %v103 = vld [vmem:[#allocation2 + $0x170] sm:$0xff]
    %v104 = vld [vmem:[#allocation2 + $0x178] sm:$0xff]
    %v105 = vld [vmem:[#allocation2 + $0x180] sm:$0xff]
    %v106 = vld [vmem:[#allocation2 + $0x188] sm:$0xff]
    %v107 = vld [vmem:[#allocation2 + $0x190] sm:$0xff]
    %v108 = vld [vmem:[#allocation2 + $0x198] sm:$0xff]
    %v109 = vld [vmem:[#allocation2 + $0x1a0] sm:$0xff]
    %v110 = vld [vmem:[#allocation2 + $0x1a8] sm:$0xff]
    %v111 = vld [vmem:[#allocation2 + $0x1b0] sm:$0xff]
    %v112 = vld [vmem:[#allocation2 + $0x1b8] sm:$0xff]
    %v113 = vld [vmem:[#allocation2 + $0x1c0] sm:$0xff]
    %v114 = vld [vmem:[#allocation2 + $0x1c8] sm:$0xff]
    %v115 = vld [vmem:[#allocation2 + $0x1d0] sm:$0xff]
    %v116 = vld [vmem:[#allocation2 + $0x1d8] sm:$0xff]
    %v117 = vld [vmem:[#allocation2 + $0x1e0] sm:$0xff]
    %v118 = vld [vmem:[#allocation2 + $0x1e8] sm:$0xff]
    %v119 = vld [vmem:[#allocation2 + $0x1f0] sm:$0xff]
    %v120 = vld [vmem:[#allocation2 + $0x1f8] sm:$0xff]
    %v121 = vld [vmem:[#allocation4] sm:$0xff]
    %v122 = vld [vmem:[#allocation4 + $0x8] sm:$0xff]
    %v123 = vld [vmem:[#allocation4 + $0x10] sm:$0xff]
    %v124 = vld [vmem:[#allocation4 + $0x18] sm:$0xff]
    %v125 = vld [vmem:[#allocation4 + $0x20] sm:$0xff]
    %v126 = vld [vmem:[#allocation4 + $0x28] sm:$0xff]
    %v127 = vld [vmem:[#allocation4 + $0x30] sm:$0xff]
    %v128 = vld [vmem:[#allocation4 + $0x38] sm:$0xff]
    %v129 = vld [vmem:[#allocation4 + $0x40] sm:$0xff]
    %v130 = vld [vmem:[#allocation4 + $0x48] sm:$0xff]
    %v131 = vld [vmem:[#allocation4 + $0x50] sm:$0xff]
    %v132 = vld [vmem:[#allocation4 + $0x58] sm:$0xff]
    %v133 = vld [vmem:[#allocation4 + $0x60] sm:$0xff]
    %v134 = vld [vmem:[#allocation4 + $0x68] sm:$0xff]
    %v135 = vld [vmem:[#allocation4 + $0x70] sm:$0xff]
    %v136 = vld [vmem:[#allocation4 + $0x78] sm:$0xff]
    %v137 = vld [vmem:[#allocation4 + $0x80] sm:$0xff]
    %v138 = vld [vmem:[#allocation4 + $0x88] sm:$0xff]
    %v139 = vld [vmem:[#allocation4 + $0x90] sm:$0xff]
    %v140 = vld [vmem:[#allocation4 + $0x98] sm:$0xff]
    %v141 = vld [vmem:[#allocation4 + $0xa0] sm:$0xff]
    %v142 = vld [vmem:[#allocation4 + $0xa8] sm:$0xff]
    %v143 = vld [vmem:[#allocation4 + $0xb0] sm:$0xff]
    %v144 = vld [vmem:[#allocation4 + $0xb8] sm:$0xff]
    %v145 = vld [vmem:[#allocation4 + $0xc0] sm:$0xff]
    %v146 = vld [vmem:[#allocation4 + $0xc8] sm:$0xff]
    %v147 = vld [vmem:[#allocation4 + $0xd0] sm:$0xff]
    %v148 = vld [vmem:[#allocation4 + $0xd8] sm:$0xff]
    %v149 = vld [vmem:[#allocation4 + $0xe0] sm:$0xff]
    %v150 = vld [vmem:[#allocation4 + $0xe8] sm:$0xff]
    %v151 = vld [vmem:[#allocation4 + $0xf0] sm:$0xff]
    %v152 = vld [vmem:[#allocation4 + $0xf8] sm:$0xff]
    %153 = vxpose.xlu0.b32.start [1/16] %v57, 128
    %154 = vxpose.xlu0.b32.cont [2/16] %v59, 128
    %155 = vxpose.xlu0.b32.cont [3/16] %v61, 128
    %156 = vxpose.xlu0.b32.cont [4/16] %v63, 128
    %157 = vxpose.xlu0.b32.cont [5/16] %v65, 128
    %158 = vxpose.xlu0.b32.cont [6/16] %v67, 128
    %159 = vxpose.xlu0.b32.cont [7/16] %v69, 128
    %160 = vxpose.xlu0.b32.cont [8/16] %v71, 128
    %161 = vxpose.xlu0.b32.cont [9/16] %v73, 128
    %162 = vxpose.xlu0.b32.cont [10/16] %v75, 128
    %163 = vxpose.xlu0.b32.cont [11/16] %v77, 128
    %164 = vxpose.xlu0.b32.cont [12/16] %v79, 128
    %165 = vxpose.xlu0.b32.cont [13/16] %v81, 128
    %166 = vxpose.xlu0.b32.cont [14/16] %v83, 128
    %167 = vxpose.xlu0.b32.cont [15/16] %v85, 128
    %168 = vxpose.xlu0.b32.end [16/16] %v87, 128
    %v169 = vpop.trf.xlu0
    %v170 = vpop.trf.xlu0
    %v171 = vpop.trf.xlu0
    %v172 = vpop.trf.xlu0
    %v173 = vpop.trf.xlu0
    %v174 = vpop.trf.xlu0
    %v175 = vpop.trf.xlu0
    %v176 = vpop.trf.xlu0
    %v177 = vpop.trf.xlu0
    %v178 = vpop.trf.xlu0
    %v179 = vpop.trf.xlu0
    %v180 = vpop.trf.xlu0
    %v181 = vpop.trf.xlu0
    %v182 = vpop.trf.xlu0
    %v183 = vpop.trf.xlu0
    %v184 = vpop.trf.xlu0
    %185 = vxpose.xlu0.b32.start [1/16] %v58, 128
    %186 = vxpose.xlu0.b32.cont [2/16] %v60, 128
    %187 = vxpose.xlu0.b32.cont [3/16] %v62, 128
    %188 = vxpose.xlu0.b32.cont [4/16] %v64, 128
    %189 = vxpose.xlu0.b32.cont [5/16] %v66, 128
    %190 = vxpose.xlu0.b32.cont [6/16] %v68, 128
    %191 = vxpose.xlu0.b32.cont [7/16] %v70, 128
    %192 = vxpose.xlu0.b32.cont [8/16] %v72, 128
    %193 = vxpose.xlu0.b32.cont [9/16] %v74, 128
    %194 = vxpose.xlu0.b32.cont [10/16] %v76, 128
    %195 = vxpose.xlu0.b32.cont [11/16] %v78, 128
    %196 = vxpose.xlu0.b32.cont [12/16] %v80, 128
    %197 = vxpose.xlu0.b32.cont [13/16] %v82, 128
    %198 = vxpose.xlu0.b32.cont [14/16] %v84, 128
    %199 = vxpose.xlu0.b32.cont [15/16] %v86, 128
    %200 = vxpose.xlu0.b32.end [16/16] %v88, 128
    %v201 = vpop.trf.xlu0
    %v202 = vpop.trf.xlu0
    %v203 = vpop.trf.xlu0
    %v204 = vpop.trf.xlu0
    %v205 = vpop.trf.xlu0
    %v206 = vpop.trf.xlu0
    %v207 = vpop.trf.xlu0
    %v208 = vpop.trf.xlu0
    %v209 = vpop.trf.xlu0
    %v210 = vpop.trf.xlu0
    %v211 = vpop.trf.xlu0
    %v212 = vpop.trf.xlu0
    %v213 = vpop.trf.xlu0
    %v214 = vpop.trf.xlu0
    %v215 = vpop.trf.xlu0
    %v216 = vpop.trf.xlu0
    %217 = vxpose.xlu0.b32.start [1/16] %v89, 128
    %218 = vxpose.xlu0.b32.cont [2/16] %v91, 128
    %219 = vxpose.xlu0.b32.cont [3/16] %v93, 128
    %220 = vxpose.xlu0.b32.cont [4/16] %v95, 128
    %221 = vxpose.xlu0.b32.cont [5/16] %v97, 128
    %222 = vxpose.xlu0.b32.cont [6/16] %v99, 128
    %223 = vxpose.xlu0.b32.cont [7/16] %v101, 128
    %224 = vxpose.xlu0.b32.cont [8/16] %v103, 128
    %225 = vxpose.xlu0.b32.cont [9/16] %v105, 128
    %226 = vxpose.xlu0.b32.cont [10/16] %v107, 128
    %227 = vxpose.xlu0.b32.cont [11/16] %v109, 128
    %228 = vxpose.xlu0.b32.cont [12/16] %v111, 128
    %229 = vxpose.xlu0.b32.cont [13/16] %v113, 128
    %230 = vxpose.xlu0.b32.cont [14/16] %v115, 128
    %231 = vxpose.xlu0.b32.cont [15/16] %v117, 128
    %232 = vxpose.xlu0.b32.end [16/16] %v119, 128
    %v233 = vpop.trf.xlu0
    %v234 = vpop.trf.xlu0
    %v235 = vpop.trf.xlu0
    %v236 = vpop.trf.xlu0
    %v237 = vpop.trf.xlu0
    %v238 = vpop.trf.xlu0
    %v239 = vpop.trf.xlu0
    %v240 = vpop.trf.xlu0
    %v241 = vpop.trf.xlu0
    %v242 = vpop.trf.xlu0
    %v243 = vpop.trf.xlu0
    %v244 = vpop.trf.xlu0
    %v245 = vpop.trf.xlu0
    %v246 = vpop.trf.xlu0
    %v247 = vpop.trf.xlu0
    %v248 = vpop.trf.xlu0
    %249 = vxpose.xlu0.b32.start [1/16] %v90, 128
    %250 = vxpose.xlu0.b32.cont [2/16] %v92, 128
    %251 = vxpose.xlu0.b32.cont [3/16] %v94, 128
    %252 = vxpose.xlu0.b32.cont [4/16] %v96, 128
    %253 = vxpose.xlu0.b32.cont [5/16] %v98, 128
    %254 = vxpose.xlu0.b32.cont [6/16] %v100, 128
    %255 = vxpose.xlu0.b32.cont [7/16] %v102, 128
    %256 = vxpose.xlu0.b32.cont [8/16] %v104, 128
    %257 = vxpose.xlu0.b32.cont [9/16] %v106, 128
    %258 = vxpose.xlu0.b32.cont [10/16] %v108, 128
    %259 = vxpose.xlu0.b32.cont [11/16] %v110, 128
    %260 = vxpose.xlu0.b32.cont [12/16] %v112, 128
    %261 = vxpose.xlu0.b32.cont [13/16] %v114, 128
    %262 = vxpose.xlu0.b32.cont [14/16] %v116, 128
    %263 = vxpose.xlu0.b32.cont [15/16] %v118, 128
    %264 = vxpose.xlu0.b32.end [16/16] %v120, 128
    %v265 = vpop.trf.xlu0
    %v266 = vpop.trf.xlu0
    %v267 = vpop.trf.xlu0
    %v268 = vpop.trf.xlu0
    %v269 = vpop.trf.xlu0
    %v270 = vpop.trf.xlu0
    %v271 = vpop.trf.xlu0
    %v272 = vpop.trf.xlu0
    %v273 = vpop.trf.xlu0
    %v274 = vpop.trf.xlu0
    %v275 = vpop.trf.xlu0
    %v276 = vpop.trf.xlu0
    %v277 = vpop.trf.xlu0
    %v278 = vpop.trf.xlu0
    %v279 = vpop.trf.xlu0
    %v280 = vpop.trf.xlu0
    %281 = vmatprep.subr.mxu0 0.0
    %282 = vmatpush1.msra.mxu0 %v136
    %283 = vmatprep.subr.mxu0 0.0
    %284 = vmatpush1.msra.mxu0 %v135
    %285 = vmatprep.subr.mxu0 0.0
    %286 = vmatpush1.msra.mxu0 %v134
    %287 = vmatprep.subr.mxu0 0.0
    %288 = vmatpush1.msra.mxu0 %v133
    %289 = vmatprep.subr.mxu0 0.0
    %290 = vmatpush1.msra.mxu0 %v132
    %291 = vmatprep.subr.mxu0 0.0
    %292 = vmatpush1.msra.mxu0 %v131
    %293 = vmatprep.subr.mxu0 0.0
    %294 = vmatpush1.msra.mxu0 %v130
    %295 = vmatprep.subr.mxu0 0.0
    %296 = vmatpush1.msra.mxu0 %v129
    %297 = vmatprep.subr.mxu0 0.0
    %298 = vmatpush1.msra.mxu0 %v128
    %299 = vmatprep.subr.mxu0 0.0
    %300 = vmatpush1.msra.mxu0 %v127
    %301 = vmatprep.subr.mxu0 0.0
    %302 = vmatpush1.msra.mxu0 %v126
    %303 = vmatprep.subr.mxu0 0.0
    %304 = vmatpush1.msra.mxu0 %v125
    %305 = vmatprep.subr.mxu0 0.0
    %306 = vmatpush1.msra.mxu0 %v124
    %307 = vmatprep.subr.mxu0 0.0
    %308 = vmatpush1.msra.mxu0 %v123
    %309 = vmatprep.subr.mxu0 0.0
    %310 = vmatpush1.msra.mxu0 %v122
    %311 = vmatprep.subr.mxu0 0.0
    %312 = vmatpush1.msra.mxu0 %v121
    %313 = vmatprep.subr.mxu0 0.0
    %314 = vmatpush2.msra.mxu0 %v152
    %315 = vmatprep.subr.mxu0 0.0
    %316 = vmatpush2.msra.mxu0 %v151
    %317 = vmatprep.subr.mxu0 0.0
    %318 = vmatpush2.msra.mxu0 %v150
    %319 = vmatprep.subr.mxu0 0.0
    %320 = vmatpush2.msra.mxu0 %v149
    %321 = vmatprep.subr.mxu0 0.0
    %322 = vmatpush2.msra.mxu0 %v148
    %323 = vmatprep.subr.mxu0 0.0
    %324 = vmatpush2.msra.mxu0 %v147
    %325 = vmatprep.subr.mxu0 0.0
    %326 = vmatpush2.msra.mxu0 %v146
    %327 = vmatprep.subr.mxu0 0.0
    %328 = vmatpush2.msra.mxu0 %v145
    %329 = vmatprep.subr.mxu0 0.0
    %330 = vmatpush2.msra.mxu0 %v144
    %331 = vmatprep.subr.mxu0 0.0
    %332 = vmatpush2.msra.mxu0 %v143
    %333 = vmatprep.subr.mxu0 0.0
    %334 = vmatpush2.msra.mxu0 %v142
    %335 = vmatprep.subr.mxu0 0.0
    %336 = vmatpush2.msra.mxu0 %v141
    %337 = vmatprep.subr.mxu0 0.0
    %338 = vmatpush2.msra.mxu0 %v140
    %339 = vmatprep.subr.mxu0 0.0
    %340 = vmatpush2.msra.mxu0 %v139
    %341 = vmatprep.subr.mxu0 0.0
    %342 = vmatpush2.msra.mxu0 %v138
    %343 = vmatprep.subr.mxu0 0.0
    %344 = vmatpush2.msra.mxu0 %v137
    %345 = vmatprep.mubr.f32.mxu0 %v233
    %346 = vmatmul.mubr.f32.gmra.mxu0 %v169
    %v347 = vpop.f32.mrf.mxu0
    %v348 = vadd.f32 0.0, %v347
    %v349 = vpop.f32.mrf.mxu0
    %350 = vmatprep.mubr.f32.mxu0 %v234
    %351 = vmatmul.mubr.f32.gmra.mxu0 %v170
    %v352 = vpop.f32.mrf.mxu0
    %v353 = vadd.f32 0.0, %v352
    %v354 = vpop.f32.mrf.mxu0
    %355 = vmatprep.mubr.f32.mxu0 %v235
    %356 = vmatmul.mubr.f32.gmra.mxu0 %v171
    %v357 = vpop.f32.mrf.mxu0
    %v358 = vadd.f32 0.0, %v357
    %v359 = vpop.f32.mrf.mxu0
    %360 = vmatprep.mubr.f32.mxu0 %v236
    %361 = vmatmul.mubr.f32.gmra.mxu0 %v172
    %v362 = vpop.f32.mrf.mxu0
    %v363 = vadd.f32 0.0, %v362
    %v364 = vpop.f32.mrf.mxu0
    %365 = vmatprep.mubr.f32.mxu0 %v237
    %366 = vmatmul.mubr.f32.gmra.mxu0 %v173
    %v367 = vpop.f32.mrf.mxu0
    %v368 = vadd.f32 0.0, %v367
    %v369 = vpop.f32.mrf.mxu0
    %370 = vmatprep.mubr.f32.mxu0 %v238
    %371 = vmatmul.mubr.f32.gmra.mxu0 %v174
    %v372 = vpop.f32.mrf.mxu0
    %v373 = vadd.f32 0.0, %v372
    %v374 = vpop.f32.mrf.mxu0
    %375 = vmatprep.mubr.f32.mxu0 %v239
    %376 = vmatmul.mubr.f32.gmra.mxu0 %v175
    %v377 = vpop.f32.mrf.mxu0
    %v378 = vadd.f32 0.0, %v377
    %v379 = vpop.f32.mrf.mxu0
    %380 = vmatprep.mubr.f32.mxu0 %v240
    %381 = vmatmul.mubr.f32.gmra.mxu0 %v176
    %v382 = vpop.f32.mrf.mxu0
    %v383 = vadd.f32 0.0, %v382
    %v384 = vpop.f32.mrf.mxu0
    %385 = vmatprep.mubr.f32.mxu0 %v241
    %386 = vmatmul.mubr.f32.gmra.mxu0 %v177
    %v387 = vpop.f32.mrf.mxu0
    %v388 = vadd.f32 0.0, %v387
    %v389 = vpop.f32.mrf.mxu0
    %390 = vmatprep.mubr.f32.mxu0 %v242
    %391 = vmatmul.mubr.f32.gmra.mxu0 %v178
    %v392 = vpop.f32.mrf.mxu0
    %v393 = vadd.f32 0.0, %v392
    %v394 = vpop.f32.mrf.mxu0
    %395 = vmatprep.mubr.f32.mxu0 %v243
    %396 = vmatmul.mubr.f32.gmra.mxu0 %v179
    %v397 = vpop.f32.mrf.mxu0
    %v398 = vadd.f32 0.0, %v397
    %v399 = vpop.f32.mrf.mxu0
    %400 = vmatprep.mubr.f32.mxu0 %v244
    %401 = vmatmul.mubr.f32.gmra.mxu0 %v180
    %v402 = vpop.f32.mrf.mxu0
    %v403 = vadd.f32 0.0, %v402
    %v404 = vpop.f32.mrf.mxu0
    %405 = vmatprep.mubr.f32.mxu0 %v245
    %406 = vmatmul.mubr.f32.gmra.mxu0 %v181
    %v407 = vpop.f32.mrf.mxu0
    %v408 = vadd.f32 0.0, %v407
    %v409 = vpop.f32.mrf.mxu0
    %410 = vmatprep.mubr.f32.mxu0 %v246
    %411 = vmatmul.mubr.f32.gmra.mxu0 %v182
    %v412 = vpop.f32.mrf.mxu0
    %v413 = vadd.f32 0.0, %v412
    %v414 = vpop.f32.mrf.mxu0
    %415 = vmatprep.mubr.f32.mxu0 %v247
    %416 = vmatmul.mubr.f32.gmra.mxu0 %v183
    %v417 = vpop.f32.mrf.mxu0
    %v418 = vadd.f32 0.0, %v417
    %v419 = vpop.f32.mrf.mxu0
    %420 = vmatprep.mubr.f32.mxu0 %v248
    %421 = vmatmul.mubr.f32.gmra.mxu0 %v184
    %v422 = vpop.f32.mrf.mxu0
    %v423 = vadd.f32 0.0, %v422
    %v424 = vpop.f32.mrf.mxu0
    %425 = vmatprep.mubr.f32.mxu0 %v265
    %426 = vmatmul.mubr.f32.gmra.mxu0 %v201
    %v427 = vpop.f32.mrf.mxu0
    %v428 = vadd.f32 0.0, %v427
    %v429 = vpop.f32.mrf.mxu0
    %430 = vmatprep.mubr.f32.mxu0 %v266
    %431 = vmatmul.mubr.f32.gmra.mxu0 %v202
    %v432 = vpop.f32.mrf.mxu0
    %v433 = vadd.f32 0.0, %v432
    %v434 = vpop.f32.mrf.mxu0
    %435 = vmatprep.mubr.f32.mxu0 %v267
    %436 = vmatmul.mubr.f32.gmra.mxu0 %v203
    %v437 = vpop.f32.mrf.mxu0
    %v438 = vadd.f32 0.0, %v437
    %v439 = vpop.f32.mrf.mxu0
    %440 = vmatprep.mubr.f32.mxu0 %v268
    %441 = vmatmul.mubr.f32.gmra.mxu0 %v204
    %v442 = vpop.f32.mrf.mxu0
    %v443 = vadd.f32 0.0, %v442
    %v444 = vpop.f32.mrf.mxu0
    %445 = vmatprep.mubr.f32.mxu0 %v269
    %446 = vmatmul.mubr.f32.gmra.mxu0 %v205
    %v447 = vpop.f32.mrf.mxu0
    %v448 = vadd.f32 0.0, %v447
    %v449 = vpop.f32.mrf.mxu0
    %450 = vmatprep.mubr.f32.mxu0 %v270
    %451 = vmatmul.mubr.f32.gmra.mxu0 %v206
    %v452 = vpop.f32.mrf.mxu0
    %v453 = vadd.f32 0.0, %v452
    %v454 = vpop.f32.mrf.mxu0
    %455 = vmatprep.mubr.f32.mxu0 %v271
    %456 = vmatmul.mubr.f32.gmra.mxu0 %v207
    %v457 = vpop.f32.mrf.mxu0
    %v458 = vadd.f32 0.0, %v457
    %v459 = vpop.f32.mrf.mxu0
    %460 = vmatprep.mubr.f32.mxu0 %v272
    %461 = vmatmul.mubr.f32.gmra.mxu0 %v208
    %v462 = vpop.f32.mrf.mxu0
    %v463 = vadd.f32 0.0, %v462
    %v464 = vpop.f32.mrf.mxu0
    %465 = vmatprep.mubr.f32.mxu0 %v273
    %466 = vmatmul.mubr.f32.gmra.mxu0 %v209
    %v467 = vpop.f32.mrf.mxu0
    %v468 = vadd.f32 0.0, %v467
    %v469 = vpop.f32.mrf.mxu0
    %470 = vmatprep.mubr.f32.mxu0 %v274
    %471 = vmatmul.mubr.f32.gmra.mxu0 %v210
    %v472 = vpop.f32.mrf.mxu0
    %v473 = vadd.f32 0.0, %v472
    %v474 = vpop.f32.mrf.mxu0
    %475 = vmatprep.mubr.f32.mxu0 %v275
    %476 = vmatmul.mubr.f32.gmra.mxu0 %v211
    %v477 = vpop.f32.mrf.mxu0
    %v478 = vadd.f32 0.0, %v477
    %v479 = vpop.f32.mrf.mxu0
    %480 = vmatprep.mubr.f32.mxu0 %v276
    %481 = vmatmul.mubr.f32.gmra.mxu0 %v212
    %v482 = vpop.f32.mrf.mxu0
    %v483 = vadd.f32 0.0, %v482
    %v484 = vpop.f32.mrf.mxu0
    %485 = vmatprep.mubr.f32.mxu0 %v277
    %486 = vmatmul.mubr.f32.gmra.mxu0 %v213
    %v487 = vpop.f32.mrf.mxu0
    %v488 = vadd.f32 0.0, %v487
    %v489 = vpop.f32.mrf.mxu0
    %490 = vmatprep.mubr.f32.mxu0 %v278
    %491 = vmatmul.mubr.f32.gmra.mxu0 %v214
    %v492 = vpop.f32.mrf.mxu0
    %v493 = vadd.f32 0.0, %v492
    %v494 = vpop.f32.mrf.mxu0
    %495 = vmatprep.mubr.f32.mxu0 %v279
    %496 = vmatmul.mubr.f32.gmra.mxu0 %v215
    %v497 = vpop.f32.mrf.mxu0
    %v498 = vadd.f32 0.0, %v497
    %v499 = vpop.f32.mrf.mxu0
    %500 = vmatprep.mubr.f32.mxu0 %v280
    %501 = vmatmul.mubr.f32.gmra.mxu0 %v216
    %v502 = vpop.f32.mrf.mxu0
    %v503 = vadd.f32 0.0, %v502
    %v504 = vpop.f32.mrf.mxu0
    %505 = vdwg.mxu0
    %506 = vst [vmem:[%s3] sm:$0xff] %v348
    %507 = vst [vmem:[%s3 + $0x8] sm:$0xff] %v353
    %508 = vst [vmem:[%s3 + $0x10] sm:$0xff] %v358
    %509 = vst [vmem:[%s3 + $0x18] sm:$0xff] %v363
    %510 = vst [vmem:[%s3 + $0x20] sm:$0xff] %v368
    %511 = vst [vmem:[%s3 + $0x28] sm:$0xff] %v373
    %512 = vst [vmem:[%s3 + $0x30] sm:$0xff] %v378
    %513 = vst [vmem:[%s3 + $0x38] sm:$0xff] %v383
    %514 = vst [vmem:[%s3 + $0x40] sm:$0xff] %v388
    %515 = vst [vmem:[%s3 + $0x48] sm:$0xff] %v393
    %516 = vst [vmem:[%s3 + $0x50] sm:$0xff] %v398
    %517 = vst [vmem:[%s3 + $0x58] sm:$0xff] %v403
    %518 = vst [vmem:[%s3 + $0x60] sm:$0xff] %v408
    %519 = vst [vmem:[%s3 + $0x68] sm:$0xff] %v413
    %520 = vst [vmem:[%s3 + $0x70] sm:$0xff] %v418
    %521 = vst [vmem:[%s3 + $0x78] sm:$0xff] %v423
    %522 = vst [vmem:[%s3 + $0x80] sm:$0xff] %v428
    %523 = vst [vmem:[%s3 + $0x88] sm:$0xff] %v433
    %524 = vst [vmem:[%s3 + $0x90] sm:$0xff] %v438
    %525 = vst [vmem:[%s3 + $0x98] sm:$0xff] %v443
    %526 = vst [vmem:[%s3 + $0xa0] sm:$0xff] %v448
    %527 = vst [vmem:[%s3 + $0xa8] sm:$0xff] %v453
    %528 = vst [vmem:[%s3 + $0xb0] sm:$0xff] %v458
    %529 = vst [vmem:[%s3 + $0xb8] sm:$0xff] %v463
    %530 = vst [vmem:[%s3 + $0xc0] sm:$0xff] %v468
    %531 = vst [vmem:[%s3 + $0xc8] sm:$0xff] %v473
    %532 = vst [vmem:[%s3 + $0xd0] sm:$0xff] %v478
    %533 = vst [vmem:[%s3 + $0xd8] sm:$0xff] %v483
    %534 = vst [vmem:[%s3 + $0xe0] sm:$0xff] %v488
    %535 = vst [vmem:[%s3 + $0xe8] sm:$0xff] %v493
    %536 = vst [vmem:[%s3 + $0xf0] sm:$0xff] %v498
    %537 = vst [vmem:[%s3 + $0xf8] sm:$0xff] %v503
    %v538 = vld [vmem:[#allocation6] sm:$0xff]
    %v539 = vld [vmem:[#allocation6 + $0x8] sm:$0xff]
    %v540 = vld [vmem:[#allocation6 + $0x10] sm:$0xff]
    %v541 = vld [vmem:[#allocation6 + $0x18] sm:$0xff]
    %v542 = vld [vmem:[#allocation6 + $0x20] sm:$0xff]
    %v543 = vld [vmem:[#allocation6 + $0x28] sm:$0xff]
    %v544 = vld [vmem:[#allocation6 + $0x30] sm:$0xff]
    %v545 = vld [vmem:[#allocation6 + $0x38] sm:$0xff]
    %v546 = vld [vmem:[#allocation6 + $0x40] sm:$0xff]
    %v547 = vld [vmem:[#allocation6 + $0x48] sm:$0xff]
    %v548 = vld [vmem:[#allocation6 + $0x50] sm:$0xff]
    %v549 = vld [vmem:[#allocation6 + $0x58] sm:$0xff]
    %v550 = vld [vmem:[#allocation6 + $0x60] sm:$0xff]
    %v551 = vld [vmem:[#allocation6 + $0x68] sm:$0xff]
    %v552 = vld [vmem:[#allocation6 + $0x70] sm:$0xff]
    %v553 = vld [vmem:[#allocation6 + $0x78] sm:$0xff]
    %v554 = vld [vmem:[#allocation6 + $0x80] sm:$0xff]
    %v555 = vld [vmem:[#allocation6 + $0x88] sm:$0xff]
    %v556 = vld [vmem:[#allocation6 + $0x90] sm:$0xff]
    %v557 = vld [vmem:[#allocation6 + $0x98] sm:$0xff]
    %v558 = vld [vmem:[#allocation6 + $0xa0] sm:$0xff]
    %v559 = vld [vmem:[#allocation6 + $0xa8] sm:$0xff]
    %v560 = vld [vmem:[#allocation6 + $0xb0] sm:$0xff]
    %v561 = vld [vmem:[#allocation6 + $0xb8] sm:$0xff]
    %v562 = vld [vmem:[#allocation6 + $0xc0] sm:$0xff]
    %v563 = vld [vmem:[#allocation6 + $0xc8] sm:$0xff]
    %v564 = vld [vmem:[#allocation6 + $0xd0] sm:$0xff]
    %v565 = vld [vmem:[#allocation6 + $0xd8] sm:$0xff]
    %v566 = vld [vmem:[#allocation6 + $0xe0] sm:$0xff]
    %v567 = vld [vmem:[#allocation6 + $0xe8] sm:$0xff]
    %v568 = vld [vmem:[#allocation6 + $0xf0] sm:$0xff]
    %v569 = vld [vmem:[#allocation6 + $0xf8] sm:$0xff]
    %v570 = vadd.f32 %v348, %v538
    %v571 = vadd.f32 %v353, %v539
    %v572 = vadd.f32 %v358, %v540
    %v573 = vadd.f32 %v363, %v541
    %v574 = vadd.f32 %v368, %v542
    %v575 = vadd.f32 %v373, %v543
    %v576 = vadd.f32 %v378, %v544
    %v577 = vadd.f32 %v383, %v545
    %v578 = vadd.f32 %v388, %v546
    %v579 = vadd.f32 %v393, %v547
    %v580 = vadd.f32 %v398, %v548
    %v581 = vadd.f32 %v403, %v549
    %v582 = vadd.f32 %v408, %v550
    %v583 = vadd.f32 %v413, %v551
    %v584 = vadd.f32 %v418, %v552
    %v585 = vadd.f32 %v423, %v553
    %v586 = vadd.f32 %v428, %v554
    %v587 = vadd.f32 %v433, %v555
    %v588 = vadd.f32 %v438, %v556
    %v589 = vadd.f32 %v443, %v557
    %v590 = vadd.f32 %v448, %v558
    %v591 = vadd.f32 %v453, %v559
    %v592 = vadd.f32 %v458, %v560
    %v593 = vadd.f32 %v463, %v561
    %v594 = vadd.f32 %v468, %v562
    %v595 = vadd.f32 %v473, %v563
    %v596 = vadd.f32 %v478, %v564
    %v597 = vadd.f32 %v483, %v565
    %v598 = vadd.f32 %v488, %v566
    %v599 = vadd.f32 %v493, %v567
    %v600 = vadd.f32 %v498, %v568
    %v601 = vadd.f32 %v503, %v569
    %602 = vst [vmem:[%s4] sm:$0xff] %v570
    %603 = vst [vmem:[%s4 + $0x8] sm:$0xff] %v571
    %604 = vst [vmem:[%s4 + $0x10] sm:$0xff] %v572
    %605 = vst [vmem:[%s4 + $0x18] sm:$0xff] %v573
    %606 = vst [vmem:[%s4 + $0x20] sm:$0xff] %v574
    %607 = vst [vmem:[%s4 + $0x28] sm:$0xff] %v575
    %608 = vst [vmem:[%s4 + $0x30] sm:$0xff] %v576
    %609 = vst [vmem:[%s4 + $0x38] sm:$0xff] %v577
    %610 = vst [vmem:[%s4 + $0x40] sm:$0xff] %v578
    %611 = vst [vmem:[%s4 + $0x48] sm:$0xff] %v579
    %612 = vst [vmem:[%s4 + $0x50] sm:$0xff] %v580
    %613 = vst [vmem:[%s4 + $0x58] sm:$0xff] %v581
    %614 = vst [vmem:[%s4 + $0x60] sm:$0xff] %v582
    %615 = vst [vmem:[%s4 + $0x68] sm:$0xff] %v583
    %616 = vst [vmem:[%s4 + $0x70] sm:$0xff] %v584
    %617 = vst [vmem:[%s4 + $0x78] sm:$0xff] %v585
    %618 = vst [vmem:[%s4 + $0x80] sm:$0xff] %v586
    %619 = vst [vmem:[%s4 + $0x88] sm:$0xff] %v587
    %620 = vst [vmem:[%s4 + $0x90] sm:$0xff] %v588
    %621 = vst [vmem:[%s4 + $0x98] sm:$0xff] %v589
    %622 = vst [vmem:[%s4 + $0xa0] sm:$0xff] %v590
    %623 = vst [vmem:[%s4 + $0xa8] sm:$0xff] %v591
    %624 = vst [vmem:[%s4 + $0xb0] sm:$0xff] %v592
    %625 = vst [vmem:[%s4 + $0xb8] sm:$0xff] %v593
    %626 = vst [vmem:[%s4 + $0xc0] sm:$0xff] %v594
    %627 = vst [vmem:[%s4 + $0xc8] sm:$0xff] %v595
    %628 = vst [vmem:[%s4 + $0xd0] sm:$0xff] %v596
    %629 = vst [vmem:[%s4 + $0xd8] sm:$0xff] %v597
    %630 = vst [vmem:[%s4 + $0xe0] sm:$0xff] %v598
    %631 = vst [vmem:[%s4 + $0xe8] sm:$0xff] %v599
    %632 = vst [vmem:[%s4 + $0xf0] sm:$0xff] %v600
    %633 = vst [vmem:[%s4 + $0xf8] sm:$0xff] %v601
    // Predicated region
    $region26: #{lightgcl_loss.15} parent=1 // pred_check
      _
    $region27: #{lightgcl_loss.15} parent=1 // pred_check_branch
      %635 = sbr.rel (0) target = $region29
    $region28: #{lightgcl_loss.15} parent=1 // pred_region
      _
    $region29: #{lightgcl_loss.15} parent=1 // pred_fallthru
      _
    // Predicated region
    $region30: #{lightgcl_loss.15} parent=1 // pred_check
      _
    $region31: #{lightgcl_loss.15} parent=1 // pred_check_branch
      %637 = sbr.rel (0) target = $region33
    $region32: #{lightgcl_loss.15} parent=1 // pred_region
      _
    $region33: #{lightgcl_loss.15} parent=1 // pred_fallthru
      _
    // Predicated region
    $region34: #{lightgcl_loss.15} parent=1 // pred_check
      _
    $region35: #{lightgcl_loss.15} parent=1 // pred_check_branch
      %639 = sbr.rel (0) target = $region37
    $region36: #{lightgcl_loss.15} parent=1 // pred_region
      _
    $region37: #{lightgcl_loss.15} parent=1 // pred_fallthru
      _
    // Predicated region
    $region38: #{lightgcl_loss.15} parent=1 // pred_check
      _
    $region39: #{lightgcl_loss.15} parent=1 // pred_check_branch
      %641 = sbr.rel (0) target = $region41
    $region40: #{lightgcl_loss.15} parent=1 // pred_region
      _
    $region41: #{lightgcl_loss.15} parent=1 // pred_fallthru
      _
    %642 = vsyncpa [#allocation3], 1
    %643 = vsyncpa [#allocation5], 1

// kernel: lightgcl_loss.14
$region0: #{lightgcl_loss.14}
  #allocation0 [shape = 'u32[]', space=smem, size = 0x4, offset = 0x4, fixed_abs, tag = 'smem constant byte address 0x4 - core index']
  #allocation1 [shape = 'u32[144,128]{1,0:T(1,128)}', space=vmem, size = 0x12000, scoped, tag = 'internal scratch']
  %s0 = inlined_call_operand.vmem [shape: f32[256,256], index: 0, kind: input, shape index: {}]
  %s1 = inlined_call_operand.vmem [shape: f32[256,128], index: 1, kind: input, shape index: {}]
  %s2 = inlined_call_operand.vmem [shape: f32[256,128], index: 2, kind: input, shape index: {}]
  %s3 = inlined_call_operand.vmem [shape: f32[256,128], index: 3, kind: output, shape index: {0}]
  %s4 = inlined_call_operand.vmem [shape: f32[256,128], index: 4, kind: output, shape index: {1}]
  %5 = xla_tuple %s3, %s4
  %s6 = sld [smem:[#allocation0]]
  $region30: #{lightgcl_loss.14} parent=0
    _
  %s8 = ssub.s32 1, %s6
  %s9 = scalar_select 0, %s8, %s6
  // Predicated region
  $region2: #{lightgcl_loss.14} parent=0 // pred_check
    _
  $region3: #{lightgcl_loss.14} parent=0 // pred_check_branch
    %11 = sbr.rel (0) target = $region5
  $region4: #{lightgcl_loss.14} parent=0 // pred_region
    _
  $region5: #{lightgcl_loss.14} parent=0 // pred_fallthru
    _
  // Predicated region
  $region6: #{lightgcl_loss.14} parent=0 // pred_check
    _
  $region7: #{lightgcl_loss.14} parent=0 // pred_check_branch
    %13 = sbr.rel (0) target = $region9
  $region8: #{lightgcl_loss.14} parent=0 // pred_region
    _
  $region9: #{lightgcl_loss.14} parent=0 // pred_fallthru
    _
  // Predicated region
  $region10: #{lightgcl_loss.14} parent=0 // pred_check
    _
  $region11: #{lightgcl_loss.14} parent=0 // pred_check_branch
    %15 = sbr.rel (0) target = $region13
  $region12: #{lightgcl_loss.14} parent=0 // pred_region
    _
  $region13: #{lightgcl_loss.14} parent=0 // pred_fallthru
    _
  %v16 = vld [vmem:[%s0] sm:$0xff]
  %v17 = vld [vmem:[%s0 + $0x8] sm:$0xff]
  %v18 = vld [vmem:[%s0 + $0x10] sm:$0xff]
  %v19 = vld [vmem:[%s0 + $0x18] sm:$0xff]
  %v20 = vld [vmem:[%s0 + $0x20] sm:$0xff]
  %v21 = vld [vmem:[%s0 + $0x28] sm:$0xff]
  %v22 = vld [vmem:[%s0 + $0x30] sm:$0xff]
  %v23 = vld [vmem:[%s0 + $0x38] sm:$0xff]
  %v24 = vld [vmem:[%s0 + $0x40] sm:$0xff]
  %v25 = vld [vmem:[%s0 + $0x48] sm:$0xff]
  %v26 = vld [vmem:[%s0 + $0x50] sm:$0xff]
  %v27 = vld [vmem:[%s0 + $0x58] sm:$0xff]
  %v28 = vld [vmem:[%s0 + $0x60] sm:$0xff]
  %v29 = vld [vmem:[%s0 + $0x68] sm:$0xff]
  %v30 = vld [vmem:[%s0 + $0x70] sm:$0xff]
  %v31 = vld [vmem:[%s0 + $0x78] sm:$0xff]
  %v32 = vld [vmem:[%s0 + $0x80] sm:$0xff]
  %v33 = vld [vmem:[%s0 + $0x88] sm:$0xff]
  %v34 = vld [vmem:[%s0 + $0x90] sm:$0xff]
  %v35 = vld [vmem:[%s0 + $0x98] sm:$0xff]
  %v36 = vld [vmem:[%s0 + $0xa0] sm:$0xff]
  %v37 = vld [vmem:[%s0 + $0xa8] sm:$0xff]
  %v38 = vld [vmem:[%s0 + $0xb0] sm:$0xff]
  %v39 = vld [vmem:[%s0 + $0xb8] sm:$0xff]
  %v40 = vld [vmem:[%s0 + $0xc0] sm:$0xff]
  %v41 = vld [vmem:[%s0 + $0xc8] sm:$0xff]
  %v42 = vld [vmem:[%s0 + $0xd0] sm:$0xff]
  %v43 = vld [vmem:[%s0 + $0xd8] sm:$0xff]
  %v44 = vld [vmem:[%s0 + $0xe0] sm:$0xff]
  %v45 = vld [vmem:[%s0 + $0xe8] sm:$0xff]
  %v46 = vld [vmem:[%s0 + $0xf0] sm:$0xff]
  %v47 = vld [vmem:[%s0 + $0xf8] sm:$0xff]
  %v48 = vld [vmem:[%s0 + $0x100] sm:$0xff]
  %v49 = vld [vmem:[%s0 + $0x108] sm:$0xff]
  %v50 = vld [vmem:[%s0 + $0x110] sm:$0xff]
  %v51 = vld [vmem:[%s0 + $0x118] sm:$0xff]
  %v52 = vld [vmem:[%s0 + $0x120] sm:$0xff]
  %v53 = vld [vmem:[%s0 + $0x128] sm:$0xff]
  %v54 = vld [vmem:[%s0 + $0x130] sm:$0xff]
  %v55 = vld [vmem:[%s0 + $0x138] sm:$0xff]
  %v56 = vld [vmem:[%s0 + $0x140] sm:$0xff]
  %v57 = vld [vmem:[%s0 + $0x148] sm:$0xff]
  %v58 = vld [vmem:[%s0 + $0x150] sm:$0xff]
  %v59 = vld [vmem:[%s0 + $0x158] sm:$0xff]
  %v60 = vld [vmem:[%s0 + $0x160] sm:$0xff]
  %v61 = vld [vmem:[%s0 + $0x168] sm:$0xff]
  %v62 = vld [vmem:[%s0 + $0x170] sm:$0xff]
  %v63 = vld [vmem:[%s0 + $0x178] sm:$0xff]
  %v64 = vld [vmem:[%s0 + $0x180] sm:$0xff]
  %v65 = vld [vmem:[%s0 + $0x188] sm:$0xff]
  %v66 = vld [vmem:[%s0 + $0x190] sm:$0xff]
  %v67 = vld [vmem:[%s0 + $0x198] sm:$0xff]
  %v68 = vld [vmem:[%s0 + $0x1a0] sm:$0xff]
  %v69 = vld [vmem:[%s0 + $0x1a8] sm:$0xff]
  %v70 = vld [vmem:[%s0 + $0x1b0] sm:$0xff]
  %v71 = vld [vmem:[%s0 + $0x1b8] sm:$0xff]
  %v72 = vld [vmem:[%s0 + $0x1c0] sm:$0xff]
  %v73 = vld [vmem:[%s0 + $0x1c8] sm:$0xff]
  %v74 = vld [vmem:[%s0 + $0x1d0] sm:$0xff]
  %v75 = vld [vmem:[%s0 + $0x1d8] sm:$0xff]
  %v76 = vld [vmem:[%s0 + $0x1e0] sm:$0xff]
  %v77 = vld [vmem:[%s0 + $0x1e8] sm:$0xff]
  %v78 = vld [vmem:[%s0 + $0x1f0] sm:$0xff]
  %v79 = vld [vmem:[%s0 + $0x1f8] sm:$0xff]
  %v80 = vld [vmem:[%s1] sm:$0xff]
  %v81 = vld [vmem:[%s1 + $0x8] sm:$0xff]
  %v82 = vld [vmem:[%s1 + $0x10] sm:$0xff]
  %v83 = vld [vmem:[%s1 + $0x18] sm:$0xff]
  %v84 = vld [vmem:[%s1 + $0x20] sm:$0xff]
  %v85 = vld [vmem:[%s1 + $0x28] sm:$0xff]
  %v86 = vld [vmem:[%s1 + $0x30] sm:$0xff]
  %v87 = vld [vmem:[%s1 + $0x38] sm:$0xff]
  %v88 = vld [vmem:[%s1 + $0x40] sm:$0xff]
  %v89 = vld [vmem:[%s1 + $0x48] sm:$0xff]
  %v90 = vld [vmem:[%s1 + $0x50] sm:$0xff]
  %v91 = vld [vmem:[%s1 + $0x58] sm:$0xff]
  %v92 = vld [vmem:[%s1 + $0x60] sm:$0xff]
  %v93 = vld [vmem:[%s1 + $0x68] sm:$0xff]
  %v94 = vld [vmem:[%s1 + $0x70] sm:$0xff]
  %v95 = vld [vmem:[%s1 + $0x78] sm:$0xff]
  %v96 = vld [vmem:[%s1 + $0x80] sm:$0xff]
  %v97 = vld [vmem:[%s1 + $0x88] sm:$0xff]
  %v98 = vld [vmem:[%s1 + $0x90] sm:$0xff]
  %v99 = vld [vmem:[%s1 + $0x98] sm:$0xff]
  %v100 = vld [vmem:[%s1 + $0xa0] sm:$0xff]
  %v101 = vld [vmem:[%s1 + $0xa8] sm:$0xff]
  %v102 = vld [vmem:[%s1 + $0xb0] sm:$0xff]
  %v103 = vld [vmem:[%s1 + $0xb8] sm:$0xff]
  %v104 = vld [vmem:[%s1 + $0xc0] sm:$0xff]
  %v105 = vld [vmem:[%s1 + $0xc8] sm:$0xff]
  %v106 = vld [vmem:[%s1 + $0xd0] sm:$0xff]
  %v107 = vld [vmem:[%s1 + $0xd8] sm:$0xff]
  %v108 = vld [vmem:[%s1 + $0xe0] sm:$0xff]
  %v109 = vld [vmem:[%s1 + $0xe8] sm:$0xff]
  %v110 = vld [vmem:[%s1 + $0xf0] sm:$0xff]
  %v111 = vld [vmem:[%s1 + $0xf8] sm:$0xff]
  %112 = vmatprep.subr.mxu0 0.0
  %113 = vmatpush1.msra.mxu0 %v95
  %114 = vmatprep.subr.mxu0 0.0
  %115 = vmatpush1.msra.mxu0 %v94
  %116 = vmatprep.subr.mxu0 0.0
  %117 = vmatpush1.msra.mxu0 %v93
  %118 = vmatprep.subr.mxu0 0.0
  %119 = vmatpush1.msra.mxu0 %v92
  %120 = vmatprep.subr.mxu0 0.0
  %121 = vmatpush1.msra.mxu0 %v91
  %122 = vmatprep.subr.mxu0 0.0
  %123 = vmatpush1.msra.mxu0 %v90
  %124 = vmatprep.subr.mxu0 0.0
  %125 = vmatpush1.msra.mxu0 %v89
  %126 = vmatprep.subr.mxu0 0.0
  %127 = vmatpush1.msra.mxu0 %v88
  %128 = vmatprep.subr.mxu0 0.0
  %129 = vmatpush1.msra.mxu0 %v87
  %130 = vmatprep.subr.mxu0 0.0
  %131 = vmatpush1.msra.mxu0 %v86
  %132 = vmatprep.subr.mxu0 0.0
  %133 = vmatpush1.msra.mxu0 %v85
  %134 = vmatprep.subr.mxu0 0.0
  %135 = vmatpush1.msra.mxu0 %v84
  %136 = vmatprep.subr.mxu0 0.0
  %137 = vmatpush1.msra.mxu0 %v83
  %138 = vmatprep.subr.mxu0 0.0
  %139 = vmatpush1.msra.mxu0 %v82
  %140 = vmatprep.subr.mxu0 0.0
  %141 = vmatpush1.msra.mxu0 %v81
  %142 = vmatprep.subr.mxu0 0.0
  %143 = vmatpush1.msra.mxu0 %v80
  %144 = vmatprep.subr.mxu0 0.0
  %145 = vmatpush2.msra.mxu0 %v111
  %146 = vmatprep.subr.mxu0 0.0
  %147 = vmatpush2.msra.mxu0 %v110
  %148 = vmatprep.subr.mxu0 0.0
  %149 = vmatpush2.msra.mxu0 %v109
  %150 = vmatprep.subr.mxu0 0.0
  %151 = vmatpush2.msra.mxu0 %v108
  %152 = vmatprep.subr.mxu0 0.0
  %153 = vmatpush2.msra.mxu0 %v107
  %154 = vmatprep.subr.mxu0 0.0
  %155 = vmatpush2.msra.mxu0 %v106
  %156 = vmatprep.subr.mxu0 0.0
  %157 = vmatpush2.msra.mxu0 %v105
  %158 = vmatprep.subr.mxu0 0.0
  %159 = vmatpush2.msra.mxu0 %v104
  %160 = vmatprep.subr.mxu0 0.0
  %161 = vmatpush2.msra.mxu0 %v103
  %162 = vmatprep.subr.mxu0 0.0
  %163 = vmatpush2.msra.mxu0 %v102
  %164 = vmatprep.subr.mxu0 0.0
  %165 = vmatpush2.msra.mxu0 %v101
  %166 = vmatprep.subr.mxu0 0.0
  %167 = vmatpush2.msra.mxu0 %v100
  %168 = vmatprep.subr.mxu0 0.0
  %169 = vmatpush2.msra.mxu0 %v99
  %170 = vmatprep.subr.mxu0 0.0
  %171 = vmatpush2.msra.mxu0 %v98
  %172 = vmatprep.subr.mxu0 0.0
  %173 = vmatpush2.msra.mxu0 %v97
  %174 = vmatprep.subr.mxu0 0.0
  %175 = vmatpush2.msra.mxu0 %v96
  %176 = vmatprep.mubr.f32.mxu0 %v17
  %177 = vmatmul.mubr.f32.gmra.mxu0 %v16
  %v178 = vpop.f32.mrf.mxu0
  %v179 = vadd.f32 0.0, %v178
  %v180 = vpop.f32.mrf.mxu0
  %181 = vmatprep.mubr.f32.mxu0 %v19
  %182 = vmatmul.mubr.f32.gmra.mxu0 %v18
  %v183 = vpop.f32.mrf.mxu0
  %v184 = vadd.f32 0.0, %v183
  %v185 = vpop.f32.mrf.mxu0
  %186 = vmatprep.mubr.f32.mxu0 %v21
  %187 = vmatmul.mubr.f32.gmra.mxu0 %v20
  %v188 = vpop.f32.mrf.mxu0
  %v189 = vadd.f32 0.0, %v188
  %v190 = vpop.f32.mrf.mxu0
  %191 = vmatprep.mubr.f32.mxu0 %v23
  %192 = vmatmul.mubr.f32.gmra.mxu0 %v22
  %v193 = vpop.f32.mrf.mxu0
  %v194 = vadd.f32 0.0, %v193
  %v195 = vpop.f32.mrf.mxu0
  %196 = vmatprep.mubr.f32.mxu0 %v25
  %197 = vmatmul.mubr.f32.gmra.mxu0 %v24
  %v198 = vpop.f32.mrf.mxu0
  %v199 = vadd.f32 0.0, %v198
  %v200 = vpop.f32.mrf.mxu0
  %201 = vmatprep.mubr.f32.mxu0 %v27
  %202 = vmatmul.mubr.f32.gmra.mxu0 %v26
  %v203 = vpop.f32.mrf.mxu0
  %v204 = vadd.f32 0.0, %v203
  %v205 = vpop.f32.mrf.mxu0
  %206 = vmatprep.mubr.f32.mxu0 %v29
  %207 = vmatmul.mubr.f32.gmra.mxu0 %v28
  %v208 = vpop.f32.mrf.mxu0
  %v209 = vadd.f32 0.0, %v208
  %v210 = vpop.f32.mrf.mxu0
  %211 = vmatprep.mubr.f32.mxu0 %v31
  %212 = vmatmul.mubr.f32.gmra.mxu0 %v30
  %v213 = vpop.f32.mrf.mxu0
  %v214 = vadd.f32 0.0, %v213
  %v215 = vpop.f32.mrf.mxu0
  %216 = vmatprep.mubr.f32.mxu0 %v33
  %217 = vmatmul.mubr.f32.gmra.mxu0 %v32
  %v218 = vpop.f32.mrf.mxu0
  %v219 = vadd.f32 0.0, %v218
  %v220 = vpop.f32.mrf.mxu0
  %221 = vmatprep.mubr.f32.mxu0 %v35
  %222 = vmatmul.mubr.f32.gmra.mxu0 %v34
  %v223 = vpop.f32.mrf.mxu0
  %v224 = vadd.f32 0.0, %v223
  %v225 = vpop.f32.mrf.mxu0
  %226 = vmatprep.mubr.f32.mxu0 %v37
  %227 = vmatmul.mubr.f32.gmra.mxu0 %v36
  %v228 = vpop.f32.mrf.mxu0
  %v229 = vadd.f32 0.0, %v228
  %v230 = vpop.f32.mrf.mxu0
  %231 = vmatprep.mubr.f32.mxu0 %v39
  %232 = vmatmul.mubr.f32.gmra.mxu0 %v38
  %v233 = vpop.f32.mrf.mxu0
  %v234 = vadd.f32 0.0, %v233
  %v235 = vpop.f32.mrf.mxu0
  %236 = vmatprep.mubr.f32.mxu0 %v41
  %237 = vmatmul.mubr.f32.gmra.mxu0 %v40
  %v238 = vpop.f32.mrf.mxu0
  %v239 = vadd.f32 0.0, %v238
  %v240 = vpop.f32.mrf.mxu0
  %241 = vmatprep.mubr.f32.mxu0 %v43
  %242 = vmatmul.mubr.f32.gmra.mxu0 %v42
  %v243 = vpop.f32.mrf.mxu0
  %v244 = vadd.f32 0.0, %v243
  %v245 = vpop.f32.mrf.mxu0
  %246 = vmatprep.mubr.f32.mxu0 %v45
  %247 = vmatmul.mubr.f32.gmra.mxu0 %v44
  %v248 = vpop.f32.mrf.mxu0
  %v249 = vadd.f32 0.0, %v248
  %v250 = vpop.f32.mrf.mxu0
  %251 = vmatprep.mubr.f32.mxu0 %v47
  %252 = vmatmul.mubr.f32.gmra.mxu0 %v46
  %v253 = vpop.f32.mrf.mxu0
  %v254 = vadd.f32 0.0, %v253
  %v255 = vpop.f32.mrf.mxu0
  %256 = vmatprep.mubr.f32.mxu0 %v49
  %257 = vmatmul.mubr.f32.gmra.mxu0 %v48
  %v258 = vpop.f32.mrf.mxu0
  %v259 = vadd.f32 0.0, %v258
  %v260 = vpop.f32.mrf.mxu0
  %261 = vmatprep.mubr.f32.mxu0 %v51
  %262 = vmatmul.mubr.f32.gmra.mxu0 %v50
  %v263 = vpop.f32.mrf.mxu0
  %v264 = vadd.f32 0.0, %v263
  %v265 = vpop.f32.mrf.mxu0
  %266 = vmatprep.mubr.f32.mxu0 %v53
  %267 = vmatmul.mubr.f32.gmra.mxu0 %v52
  %v268 = vpop.f32.mrf.mxu0
  %v269 = vadd.f32 0.0, %v268
  %v270 = vpop.f32.mrf.mxu0
  %271 = vmatprep.mubr.f32.mxu0 %v55
  %272 = vmatmul.mubr.f32.gmra.mxu0 %v54
  %v273 = vpop.f32.mrf.mxu0
  %v274 = vadd.f32 0.0, %v273
  %v275 = vpop.f32.mrf.mxu0
  %276 = vmatprep.mubr.f32.mxu0 %v57
  %277 = vmatmul.mubr.f32.gmra.mxu0 %v56
  %v278 = vpop.f32.mrf.mxu0
  %v279 = vadd.f32 0.0, %v278
  %v280 = vpop.f32.mrf.mxu0
  %281 = vmatprep.mubr.f32.mxu0 %v59
  %282 = vmatmul.mubr.f32.gmra.mxu0 %v58
  %v283 = vpop.f32.mrf.mxu0
  %v284 = vadd.f32 0.0, %v283
  %v285 = vpop.f32.mrf.mxu0
  %286 = vmatprep.mubr.f32.mxu0 %v61
  %287 = vmatmul.mubr.f32.gmra.mxu0 %v60
  %v288 = vpop.f32.mrf.mxu0
  %v289 = vadd.f32 0.0, %v288
  %v290 = vpop.f32.mrf.mxu0
  %291 = vmatprep.mubr.f32.mxu0 %v63
  %292 = vmatmul.mubr.f32.gmra.mxu0 %v62
  %v293 = vpop.f32.mrf.mxu0
  %v294 = vadd.f32 0.0, %v293
  %v295 = vpop.f32.mrf.mxu0
  %296 = vmatprep.mubr.f32.mxu0 %v65
  %297 = vmatmul.mubr.f32.gmra.mxu0 %v64
  %v298 = vpop.f32.mrf.mxu0
  %v299 = vadd.f32 0.0, %v298
  %v300 = vpop.f32.mrf.mxu0
  %301 = vmatprep.mubr.f32.mxu0 %v67
  %302 = vmatmul.mubr.f32.gmra.mxu0 %v66
  %v303 = vpop.f32.mrf.mxu0
  %v304 = vadd.f32 0.0, %v303
  %v305 = vpop.f32.mrf.mxu0
  %306 = vmatprep.mubr.f32.mxu0 %v69
  %307 = vmatmul.mubr.f32.gmra.mxu0 %v68
  %v308 = vpop.f32.mrf.mxu0
  %v309 = vadd.f32 0.0, %v308
  %v310 = vpop.f32.mrf.mxu0
  %311 = vmatprep.mubr.f32.mxu0 %v71
  %312 = vmatmul.mubr.f32.gmra.mxu0 %v70
  %v313 = vpop.f32.mrf.mxu0
  %v314 = vadd.f32 0.0, %v313
  %v315 = vpop.f32.mrf.mxu0
  %316 = vmatprep.mubr.f32.mxu0 %v73
  %317 = vmatmul.mubr.f32.gmra.mxu0 %v72
  %v318 = vpop.f32.mrf.mxu0
  %v319 = vadd.f32 0.0, %v318
  %v320 = vpop.f32.mrf.mxu0
  %321 = vmatprep.mubr.f32.mxu0 %v75
  %322 = vmatmul.mubr.f32.gmra.mxu0 %v74
  %v323 = vpop.f32.mrf.mxu0
  %v324 = vadd.f32 0.0, %v323
  %v325 = vpop.f32.mrf.mxu0
  %326 = vmatprep.mubr.f32.mxu0 %v77
  %327 = vmatmul.mubr.f32.gmra.mxu0 %v76
  %v328 = vpop.f32.mrf.mxu0
  %v329 = vadd.f32 0.0, %v328
  %v330 = vpop.f32.mrf.mxu0
  %331 = vmatprep.mubr.f32.mxu0 %v79
  %332 = vmatmul.mubr.f32.gmra.mxu0 %v78
  %v333 = vpop.f32.mrf.mxu0
  %v334 = vadd.f32 0.0, %v333
  %v335 = vpop.f32.mrf.mxu0
  %336 = vdwg.mxu0
  %337 = vst [vmem:[%s3] sm:$0xff] %v179
  %338 = vst [vmem:[%s3 + $0x8] sm:$0xff] %v184
  %339 = vst [vmem:[%s3 + $0x10] sm:$0xff] %v189
  %340 = vst [vmem:[%s3 + $0x18] sm:$0xff] %v194
  %341 = vst [vmem:[%s3 + $0x20] sm:$0xff] %v199
  %342 = vst [vmem:[%s3 + $0x28] sm:$0xff] %v204
  %343 = vst [vmem:[%s3 + $0x30] sm:$0xff] %v209
  %344 = vst [vmem:[%s3 + $0x38] sm:$0xff] %v214
  %345 = vst [vmem:[%s3 + $0x40] sm:$0xff] %v219
  %346 = vst [vmem:[%s3 + $0x48] sm:$0xff] %v224
  %347 = vst [vmem:[%s3 + $0x50] sm:$0xff] %v229
  %348 = vst [vmem:[%s3 + $0x58] sm:$0xff] %v234
  %349 = vst [vmem:[%s3 + $0x60] sm:$0xff] %v239
  %350 = vst [vmem:[%s3 + $0x68] sm:$0xff] %v244
  %351 = vst [vmem:[%s3 + $0x70] sm:$0xff] %v249
  %352 = vst [vmem:[%s3 + $0x78] sm:$0xff] %v254
  %353 = vst [vmem:[%s3 + $0x80] sm:$0xff] %v259
  %354 = vst [vmem:[%s3 + $0x88] sm:$0xff] %v264
  %355 = vst [vmem:[%s3 + $0x90] sm:$0xff] %v269
  %356 = vst [vmem:[%s3 + $0x98] sm:$0xff] %v274
  %357 = vst [vmem:[%s3 + $0xa0] sm:$0xff] %v279
  %358 = vst [vmem:[%s3 + $0xa8] sm:$0xff] %v284
  %359 = vst [vmem:[%s3 + $0xb0] sm:$0xff] %v289
  %360 = vst [vmem:[%s3 + $0xb8] sm:$0xff] %v294
  %361 = vst [vmem:[%s3 + $0xc0] sm:$0xff] %v299
  %362 = vst [vmem:[%s3 + $0xc8] sm:$0xff] %v304
  %363 = vst [vmem:[%s3 + $0xd0] sm:$0xff] %v309
  %364 = vst [vmem:[%s3 + $0xd8] sm:$0xff] %v314
  %365 = vst [vmem:[%s3 + $0xe0] sm:$0xff] %v319
  %366 = vst [vmem:[%s3 + $0xe8] sm:$0xff] %v324
  %367 = vst [vmem:[%s3 + $0xf0] sm:$0xff] %v329
  %368 = vst [vmem:[%s3 + $0xf8] sm:$0xff] %v334
  %v369 = vld [vmem:[%s2] sm:$0xff]
  %v370 = vld [vmem:[%s2 + $0x8] sm:$0xff]
  %v371 = vld [vmem:[%s2 + $0x10] sm:$0xff]
  %v372 = vld [vmem:[%s2 + $0x18] sm:$0xff]
  %v373 = vld [vmem:[%s2 + $0x20] sm:$0xff]
  %v374 = vld [vmem:[%s2 + $0x28] sm:$0xff]
  %v375 = vld [vmem:[%s2 + $0x30] sm:$0xff]
  %v376 = vld [vmem:[%s2 + $0x38] sm:$0xff]
  %v377 = vld [vmem:[%s2 + $0x40] sm:$0xff]
  %v378 = vld [vmem:[%s2 + $0x48] sm:$0xff]
  %v379 = vld [vmem:[%s2 + $0x50] sm:$0xff]
  %v380 = vld [vmem:[%s2 + $0x58] sm:$0xff]
  %v381 = vld [vmem:[%s2 + $0x60] sm:$0xff]
  %v382 = vld [vmem:[%s2 + $0x68] sm:$0xff]
  %v383 = vld [vmem:[%s2 + $0x70] sm:$0xff]
  %v384 = vld [vmem:[%s2 + $0x78] sm:$0xff]
  %v385 = vld [vmem:[%s2 + $0x80] sm:$0xff]
  %v386 = vld [vmem:[%s2 + $0x88] sm:$0xff]
  %v387 = vld [vmem:[%s2 + $0x90] sm:$0xff]
  %v388 = vld [vmem:[%s2 + $0x98] sm:$0xff]
  %v389 = vld [vmem:[%s2 + $0xa0] sm:$0xff]
  %v390 = vld [vmem:[%s2 + $0xa8] sm:$0xff]
  %v391 = vld [vmem:[%s2 + $0xb0] sm:$0xff]
  %v392 = vld [vmem:[%s2 + $0xb8] sm:$0xff]
  %v393 = vld [vmem:[%s2 + $0xc0] sm:$0xff]
  %v394 = vld [vmem:[%s2 + $0xc8] sm:$0xff]
  %v395 = vld [vmem:[%s2 + $0xd0] sm:$0xff]
  %v396 = vld [vmem:[%s2 + $0xd8] sm:$0xff]
  %v397 = vld [vmem:[%s2 + $0xe0] sm:$0xff]
  %v398 = vld [vmem:[%s2 + $0xe8] sm:$0xff]
  %v399 = vld [vmem:[%s2 + $0xf0] sm:$0xff]
  %v400 = vld [vmem:[%s2 + $0xf8] sm:$0xff]
  %v401 = vadd.f32 %v179, %v369
  %v402 = vadd.f32 %v184, %v370
  %v403 = vadd.f32 %v189, %v371
  %v404 = vadd.f32 %v194, %v372
  %v405 = vadd.f32 %v199, %v373
  %v406 = vadd.f32 %v204, %v374
  %v407 = vadd.f32 %v209, %v375
  %v408 = vadd.f32 %v214, %v376
  %v409 = vadd.f32 %v219, %v377
  %v410 = vadd.f32 %v224, %v378
  %v411 = vadd.f32 %v229, %v379
  %v412 = vadd.f32 %v234, %v380
  %v413 = vadd.f32 %v239, %v381
  %v414 = vadd.f32 %v244, %v382
  %v415 = vadd.f32 %v249, %v383
  %v416 = vadd.f32 %v254, %v384
  %v417 = vadd.f32 %v259, %v385
  %v418 = vadd.f32 %v264, %v386
  %v419 = vadd.f32 %v269, %v387
  %v420 = vadd.f32 %v274, %v388
  %v421 = vadd.f32 %v279, %v389
  %v422 = vadd.f32 %v284, %v390
  %v423 = vadd.f32 %v289, %v391
  %v424 = vadd.f32 %v294, %v392
  %v425 = vadd.f32 %v299, %v393
  %v426 = vadd.f32 %v304, %v394
  %v427 = vadd.f32 %v309, %v395
  %v428 = vadd.f32 %v314, %v396
  %v429 = vadd.f32 %v319, %v397
  %v430 = vadd.f32 %v324, %v398
  %v431 = vadd.f32 %v329, %v399
  %v432 = vadd.f32 %v334, %v400
  %433 = vst [vmem:[%s4] sm:$0xff] %v401
  %434 = vst [vmem:[%s4 + $0x8] sm:$0xff] %v402
  %435 = vst [vmem:[%s4 + $0x10] sm:$0xff] %v403
  %436 = vst [vmem:[%s4 + $0x18] sm:$0xff] %v404
  %437 = vst [vmem:[%s4 + $0x20] sm:$0xff] %v405
  %438 = vst [vmem:[%s4 + $0x28] sm:$0xff] %v406
  %439 = vst [vmem:[%s4 + $0x30] sm:$0xff] %v407
  %440 = vst [vmem:[%s4 + $0x38] sm:$0xff] %v408
  %441 = vst [vmem:[%s4 + $0x40] sm:$0xff] %v409
  %442 = vst [vmem:[%s4 + $0x48] sm:$0xff] %v410
  %443 = vst [vmem:[%s4 + $0x50] sm:$0xff] %v411
  %444 = vst [vmem:[%s4 + $0x58] sm:$0xff] %v412
  %445 = vst [vmem:[%s4 + $0x60] sm:$0xff] %v413
  %446 = vst [vmem:[%s4 + $0x68] sm:$0xff] %v414
  %447 = vst [vmem:[%s4 + $0x70] sm:$0xff] %v415
  %448 = vst [vmem:[%s4 + $0x78] sm:$0xff] %v416
  %449 = vst [vmem:[%s4 + $0x80] sm:$0xff] %v417
  %450 = vst [vmem:[%s4 + $0x88] sm:$0xff] %v418
  %451 = vst [vmem:[%s4 + $0x90] sm:$0xff] %v419
  %452 = vst [vmem:[%s4 + $0x98] sm:$0xff] %v420
  %453 = vst [vmem:[%s4 + $0xa0] sm:$0xff] %v421
  %454 = vst [vmem:[%s4 + $0xa8] sm:$0xff] %v422
  %455 = vst [vmem:[%s4 + $0xb0] sm:$0xff] %v423
  %456 = vst [vmem:[%s4 + $0xb8] sm:$0xff] %v424
  %457 = vst [vmem:[%s4 + $0xc0] sm:$0xff] %v425
  %458 = vst [vmem:[%s4 + $0xc8] sm:$0xff] %v426
  %459 = vst [vmem:[%s4 + $0xd0] sm:$0xff] %v427
  %460 = vst [vmem:[%s4 + $0xd8] sm:$0xff] %v428
  %461 = vst [vmem:[%s4 + $0xe0] sm:$0xff] %v429
  %462 = vst [vmem:[%s4 + $0xe8] sm:$0xff] %v430
  %463 = vst [vmem:[%s4 + $0xf0] sm:$0xff] %v431
  %464 = vst [vmem:[%s4 + $0xf8] sm:$0xff] %v432
  // Predicated region
  $region14: #{lightgcl_loss.14} parent=0 // pred_check
    _
  $region15: #{lightgcl_loss.14} parent=0 // pred_check_branch
    %466 = sbr.rel (0) target = $region17
  $region16: #{lightgcl_loss.14} parent=0 // pred_region
    _
  $region17: #{lightgcl_loss.14} parent=0 // pred_fallthru
    _
  // Predicated region
  $region18: #{lightgcl_loss.14} parent=0 // pred_check
    _
  $region19: #{lightgcl_loss.14} parent=0 // pred_check_branch
    %468 = sbr.rel (0) target = $region21
  $region20: #{lightgcl_loss.14} parent=0 // pred_region
    _
  $region21: #{lightgcl_loss.14} parent=0 // pred_fallthru
    _
  // Predicated region
  $region22: #{lightgcl_loss.14} parent=0 // pred_check
    _
  $region23: #{lightgcl_loss.14} parent=0 // pred_check_branch
    %470 = sbr.rel (0) target = $region25
  $region24: #{lightgcl_loss.14} parent=0 // pred_region
    _
  $region25: #{lightgcl_loss.14} parent=0 // pred_fallthru
    _
  // Predicated region
  $region26: #{lightgcl_loss.14} parent=0 // pred_check
    _
  $region27: #{lightgcl_loss.14} parent=0 // pred_check_branch
    %472 = sbr.rel (0) target = $region29
  $region28: #{lightgcl_loss.14} parent=0 // pred_region
    _
  $region29: #{lightgcl_loss.14} parent=0 // pred_fallthru
    _

// kernel: lightgcl_loss.20
$region0: #{lightgcl_loss.20}
  #allocation0 [shape = 'u32[]', space=smem, size = 0x4, offset = 0x4, fixed_abs, tag = 'smem constant byte address 0x4 - core index']
  #allocation1 [shape = 'u32[144,128]{1,0:T(1,128)}', space=vmem, size = 0x12000, scoped, tag = 'internal scratch']
  %s0 = inlined_call_operand.vmem [shape: f32[256,256], index: 0, kind: input, shape index: {}]
  %s1 = inlined_call_operand.vmem [shape: f32[256,128], index: 1, kind: input, shape index: {}]
  %s2 = inlined_call_operand.vmem [shape: f32[256,128], index: 2, kind: input, shape index: {}]
  %s3 = inlined_call_operand.hbm [shape: f32[256,128], index: 3, kind: output, shape index: {0}]
  %s4 = inlined_call_operand.vmem [shape: f32[256,128], index: 4, kind: output, shape index: {1}]
  %5 = xla_tuple %s3, %s4
  %s6 = sld [smem:[#allocation0]]
  $region30: #{lightgcl_loss.20} parent=0
    _
  %s8 = ssub.s32 1, %s6
  %s9 = scalar_select 0, %s8, %s6
  $region1: #{lightgcl_loss.20} parent=0
    #allocation2 [shape = 'u8[131072]{0}', space=vmem, size = 0x20000, scoped, tag = 'output window, operand 0, single buffered']
    #allocation3 [shape = 's32[1]{0}', space=sflag, size = 0x4, scoped, tag = 'scoped memory for lightgcl_loss.20']
    %10 = vsyncpa [#allocation3], 0
    // Predicated region
    $region2: #{lightgcl_loss.20} parent=1 // pred_check
      _
    $region3: #{lightgcl_loss.20} parent=1 // pred_check_branch
      %12 = sbr.rel (0) target = $region5
    $region4: #{lightgcl_loss.20} parent=1 // pred_region
      _
    $region5: #{lightgcl_loss.20} parent=1 // pred_fallthru
      _
    // Predicated region
    $region6: #{lightgcl_loss.20} parent=1 // pred_check
      _
    $region7: #{lightgcl_loss.20} parent=1 // pred_check_branch
      %14 = sbr.rel (0) target = $region9
    $region8: #{lightgcl_loss.20} parent=1 // pred_region
      _
    $region9: #{lightgcl_loss.20} parent=1 // pred_fallthru
      _
    // Predicated region
    $region10: #{lightgcl_loss.20} parent=1 // pred_check
      _
    $region11: #{lightgcl_loss.20} parent=1 // pred_check_branch
      %16 = sbr.rel (0) target = $region13
    $region12: #{lightgcl_loss.20} parent=1 // pred_region
      _
    $region13: #{lightgcl_loss.20} parent=1 // pred_fallthru
      _
    %v17 = vld [vmem:[%s0] sm:$0xff]
    %v18 = vld [vmem:[%s0 + $0x8] sm:$0xff]
    %v19 = vld [vmem:[%s0 + $0x10] sm:$0xff]
    %v20 = vld [vmem:[%s0 + $0x18] sm:$0xff]
    %v21 = vld [vmem:[%s0 + $0x20] sm:$0xff]
    %v22 = vld [vmem:[%s0 + $0x28] sm:$0xff]
    %v23 = vld [vmem:[%s0 + $0x30] sm:$0xff]
    %v24 = vld [vmem:[%s0 + $0x38] sm:$0xff]
    %v25 = vld [vmem:[%s0 + $0x40] sm:$0xff]
    %v26 = vld [vmem:[%s0 + $0x48] sm:$0xff]
    %v27 = vld [vmem:[%s0 + $0x50] sm:$0xff]
    %v28 = vld [vmem:[%s0 + $0x58] sm:$0xff]
    %v29 = vld [vmem:[%s0 + $0x60] sm:$0xff]
    %v30 = vld [vmem:[%s0 + $0x68] sm:$0xff]
    %v31 = vld [vmem:[%s0 + $0x70] sm:$0xff]
    %v32 = vld [vmem:[%s0 + $0x78] sm:$0xff]
    %v33 = vld [vmem:[%s0 + $0x80] sm:$0xff]
    %v34 = vld [vmem:[%s0 + $0x88] sm:$0xff]
    %v35 = vld [vmem:[%s0 + $0x90] sm:$0xff]
    %v36 = vld [vmem:[%s0 + $0x98] sm:$0xff]
    %v37 = vld [vmem:[%s0 + $0xa0] sm:$0xff]
    %v38 = vld [vmem:[%s0 + $0xa8] sm:$0xff]
    %v39 = vld [vmem:[%s0 + $0xb0] sm:$0xff]
    %v40 = vld [vmem:[%s0 + $0xb8] sm:$0xff]
    %v41 = vld [vmem:[%s0 + $0xc0] sm:$0xff]
    %v42 = vld [vmem:[%s0 + $0xc8] sm:$0xff]
    %v43 = vld [vmem:[%s0 + $0xd0] sm:$0xff]
    %v44 = vld [vmem:[%s0 + $0xd8] sm:$0xff]
    %v45 = vld [vmem:[%s0 + $0xe0] sm:$0xff]
    %v46 = vld [vmem:[%s0 + $0xe8] sm:$0xff]
    %v47 = vld [vmem:[%s0 + $0xf0] sm:$0xff]
    %v48 = vld [vmem:[%s0 + $0xf8] sm:$0xff]
    %v49 = vld [vmem:[%s0 + $0x100] sm:$0xff]
    %v50 = vld [vmem:[%s0 + $0x108] sm:$0xff]
    %v51 = vld [vmem:[%s0 + $0x110] sm:$0xff]
    %v52 = vld [vmem:[%s0 + $0x118] sm:$0xff]
    %v53 = vld [vmem:[%s0 + $0x120] sm:$0xff]
    %v54 = vld [vmem:[%s0 + $0x128] sm:$0xff]
    %v55 = vld [vmem:[%s0 + $0x130] sm:$0xff]
    %v56 = vld [vmem:[%s0 + $0x138] sm:$0xff]
    %v57 = vld [vmem:[%s0 + $0x140] sm:$0xff]
    %v58 = vld [vmem:[%s0 + $0x148] sm:$0xff]
    %v59 = vld [vmem:[%s0 + $0x150] sm:$0xff]
    %v60 = vld [vmem:[%s0 + $0x158] sm:$0xff]
    %v61 = vld [vmem:[%s0 + $0x160] sm:$0xff]
    %v62 = vld [vmem:[%s0 + $0x168] sm:$0xff]
    %v63 = vld [vmem:[%s0 + $0x170] sm:$0xff]
    %v64 = vld [vmem:[%s0 + $0x178] sm:$0xff]
    %v65 = vld [vmem:[%s0 + $0x180] sm:$0xff]
    %v66 = vld [vmem:[%s0 + $0x188] sm:$0xff]
    %v67 = vld [vmem:[%s0 + $0x190] sm:$0xff]
    %v68 = vld [vmem:[%s0 + $0x198] sm:$0xff]
    %v69 = vld [vmem:[%s0 + $0x1a0] sm:$0xff]
    %v70 = vld [vmem:[%s0 + $0x1a8] sm:$0xff]
    %v71 = vld [vmem:[%s0 + $0x1b0] sm:$0xff]
    %v72 = vld [vmem:[%s0 + $0x1b8] sm:$0xff]
    %v73 = vld [vmem:[%s0 + $0x1c0] sm:$0xff]
    %v74 = vld [vmem:[%s0 + $0x1c8] sm:$0xff]
    %v75 = vld [vmem:[%s0 + $0x1d0] sm:$0xff]
    %v76 = vld [vmem:[%s0 + $0x1d8] sm:$0xff]
    %v77 = vld [vmem:[%s0 + $0x1e0] sm:$0xff]
    %v78 = vld [vmem:[%s0 + $0x1e8] sm:$0xff]
    %v79 = vld [vmem:[%s0 + $0x1f0] sm:$0xff]
    %v80 = vld [vmem:[%s0 + $0x1f8] sm:$0xff]
    %v81 = vld [vmem:[%s1] sm:$0xff]
    %v82 = vld [vmem:[%s1 + $0x8] sm:$0xff]
    %v83 = vld [vmem:[%s1 + $0x10] sm:$0xff]
    %v84 = vld [vmem:[%s1 + $0x18] sm:$0xff]
    %v85 = vld [vmem:[%s1 + $0x20] sm:$0xff]
    %v86 = vld [vmem:[%s1 + $0x28] sm:$0xff]
    %v87 = vld [vmem:[%s1 + $0x30] sm:$0xff]
    %v88 = vld [vmem:[%s1 + $0x38] sm:$0xff]
    %v89 = vld [vmem:[%s1 + $0x40] sm:$0xff]
    %v90 = vld [vmem:[%s1 + $0x48] sm:$0xff]
    %v91 = vld [vmem:[%s1 + $0x50] sm:$0xff]
    %v92 = vld [vmem:[%s1 + $0x58] sm:$0xff]
    %v93 = vld [vmem:[%s1 + $0x60] sm:$0xff]
    %v94 = vld [vmem:[%s1 + $0x68] sm:$0xff]
    %v95 = vld [vmem:[%s1 + $0x70] sm:$0xff]
    %v96 = vld [vmem:[%s1 + $0x78] sm:$0xff]
    %v97 = vld [vmem:[%s1 + $0x80] sm:$0xff]
    %v98 = vld [vmem:[%s1 + $0x88] sm:$0xff]
    %v99 = vld [vmem:[%s1 + $0x90] sm:$0xff]
    %v100 = vld [vmem:[%s1 + $0x98] sm:$0xff]
    %v101 = vld [vmem:[%s1 + $0xa0] sm:$0xff]
    %v102 = vld [vmem:[%s1 + $0xa8] sm:$0xff]
    %v103 = vld [vmem:[%s1 + $0xb0] sm:$0xff]
    %v104 = vld [vmem:[%s1 + $0xb8] sm:$0xff]
    %v105 = vld [vmem:[%s1 + $0xc0] sm:$0xff]
    %v106 = vld [vmem:[%s1 + $0xc8] sm:$0xff]
    %v107 = vld [vmem:[%s1 + $0xd0] sm:$0xff]
    %v108 = vld [vmem:[%s1 + $0xd8] sm:$0xff]
    %v109 = vld [vmem:[%s1 + $0xe0] sm:$0xff]
    %v110 = vld [vmem:[%s1 + $0xe8] sm:$0xff]
    %v111 = vld [vmem:[%s1 + $0xf0] sm:$0xff]
    %v112 = vld [vmem:[%s1 + $0xf8] sm:$0xff]
    %113 = vmatprep.subr.mxu0 0.0
    %114 = vmatpush1.msra.mxu0 %v96
    %115 = vmatprep.subr.mxu0 0.0
    %116 = vmatpush1.msra.mxu0 %v95
    %117 = vmatprep.subr.mxu0 0.0
    %118 = vmatpush1.msra.mxu0 %v94
    %119 = vmatprep.subr.mxu0 0.0
    %120 = vmatpush1.msra.mxu0 %v93
    %121 = vmatprep.subr.mxu0 0.0
    %122 = vmatpush1.msra.mxu0 %v92
    %123 = vmatprep.subr.mxu0 0.0
    %124 = vmatpush1.msra.mxu0 %v91
    %125 = vmatprep.subr.mxu0 0.0
    %126 = vmatpush1.msra.mxu0 %v90
    %127 = vmatprep.subr.mxu0 0.0
    %128 = vmatpush1.msra.mxu0 %v89
    %129 = vmatprep.subr.mxu0 0.0
    %130 = vmatpush1.msra.mxu0 %v88
    %131 = vmatprep.subr.mxu0 0.0
    %132 = vmatpush1.msra.mxu0 %v87
    %133 = vmatprep.subr.mxu0 0.0
    %134 = vmatpush1.msra.mxu0 %v86
    %135 = vmatprep.subr.mxu0 0.0
    %136 = vmatpush1.msra.mxu0 %v85
    %137 = vmatprep.subr.mxu0 0.0
    %138 = vmatpush1.msra.mxu0 %v84
    %139 = vmatprep.subr.mxu0 0.0
    %140 = vmatpush1.msra.mxu0 %v83
    %141 = vmatprep.subr.mxu0 0.0
    %142 = vmatpush1.msra.mxu0 %v82
    %143 = vmatprep.subr.mxu0 0.0
    %144 = vmatpush1.msra.mxu0 %v81
    %145 = vmatprep.subr.mxu0 0.0
    %146 = vmatpush2.msra.mxu0 %v112
    %147 = vmatprep.subr.mxu0 0.0
    %148 = vmatpush2.msra.mxu0 %v111
    %149 = vmatprep.subr.mxu0 0.0
    %150 = vmatpush2.msra.mxu0 %v110
    %151 = vmatprep.subr.mxu0 0.0
    %152 = vmatpush2.msra.mxu0 %v109
    %153 = vmatprep.subr.mxu0 0.0
    %154 = vmatpush2.msra.mxu0 %v108
    %155 = vmatprep.subr.mxu0 0.0
    %156 = vmatpush2.msra.mxu0 %v107
    %157 = vmatprep.subr.mxu0 0.0
    %158 = vmatpush2.msra.mxu0 %v106
    %159 = vmatprep.subr.mxu0 0.0
    %160 = vmatpush2.msra.mxu0 %v105
    %161 = vmatprep.subr.mxu0 0.0
    %162 = vmatpush2.msra.mxu0 %v104
    %163 = vmatprep.subr.mxu0 0.0
    %164 = vmatpush2.msra.mxu0 %v103
    %165 = vmatprep.subr.mxu0 0.0
    %166 = vmatpush2.msra.mxu0 %v102
    %167 = vmatprep.subr.mxu0 0.0
    %168 = vmatpush2.msra.mxu0 %v101
    %169 = vmatprep.subr.mxu0 0.0
    %170 = vmatpush2.msra.mxu0 %v100
    %171 = vmatprep.subr.mxu0 0.0
    %172 = vmatpush2.msra.mxu0 %v99
    %173 = vmatprep.subr.mxu0 0.0
    %174 = vmatpush2.msra.mxu0 %v98
    %175 = vmatprep.subr.mxu0 0.0
    %176 = vmatpush2.msra.mxu0 %v97
    %177 = vmatprep.mubr.f32.mxu0 %v18
    %178 = vmatmul.mubr.f32.gmra.mxu0 %v17
    %v179 = vpop.f32.mrf.mxu0
    %v180 = vadd.f32 0.0, %v179
    %v181 = vpop.f32.mrf.mxu0
    %182 = vmatprep.mubr.f32.mxu0 %v20
    %183 = vmatmul.mubr.f32.gmra.mxu0 %v19
    %v184 = vpop.f32.mrf.mxu0
    %v185 = vadd.f32 0.0, %v184
    %v186 = vpop.f32.mrf.mxu0
    %187 = vmatprep.mubr.f32.mxu0 %v22
    %188 = vmatmul.mubr.f32.gmra.mxu0 %v21
    %v189 = vpop.f32.mrf.mxu0
    %v190 = vadd.f32 0.0, %v189
    %v191 = vpop.f32.mrf.mxu0
    %192 = vmatprep.mubr.f32.mxu0 %v24
    %193 = vmatmul.mubr.f32.gmra.mxu0 %v23
    %v194 = vpop.f32.mrf.mxu0
    %v195 = vadd.f32 0.0, %v194
    %v196 = vpop.f32.mrf.mxu0
    %197 = vmatprep.mubr.f32.mxu0 %v26
    %198 = vmatmul.mubr.f32.gmra.mxu0 %v25
    %v199 = vpop.f32.mrf.mxu0
    %v200 = vadd.f32 0.0, %v199
    %v201 = vpop.f32.mrf.mxu0
    %202 = vmatprep.mubr.f32.mxu0 %v28
    %203 = vmatmul.mubr.f32.gmra.mxu0 %v27
    %v204 = vpop.f32.mrf.mxu0
    %v205 = vadd.f32 0.0, %v204
    %v206 = vpop.f32.mrf.mxu0
    %207 = vmatprep.mubr.f32.mxu0 %v30
    %208 = vmatmul.mubr.f32.gmra.mxu0 %v29
    %v209 = vpop.f32.mrf.mxu0
    %v210 = vadd.f32 0.0, %v209
    %v211 = vpop.f32.mrf.mxu0
    %212 = vmatprep.mubr.f32.mxu0 %v32
    %213 = vmatmul.mubr.f32.gmra.mxu0 %v31
    %v214 = vpop.f32.mrf.mxu0
    %v215 = vadd.f32 0.0, %v214
    %v216 = vpop.f32.mrf.mxu0
    %217 = vmatprep.mubr.f32.mxu0 %v34
    %218 = vmatmul.mubr.f32.gmra.mxu0 %v33
    %v219 = vpop.f32.mrf.mxu0
    %v220 = vadd.f32 0.0, %v219
    %v221 = vpop.f32.mrf.mxu0
    %222 = vmatprep.mubr.f32.mxu0 %v36
    %223 = vmatmul.mubr.f32.gmra.mxu0 %v35
    %v224 = vpop.f32.mrf.mxu0
    %v225 = vadd.f32 0.0, %v224
    %v226 = vpop.f32.mrf.mxu0
    %227 = vmatprep.mubr.f32.mxu0 %v38
    %228 = vmatmul.mubr.f32.gmra.mxu0 %v37
    %v229 = vpop.f32.mrf.mxu0
    %v230 = vadd.f32 0.0, %v229
    %v231 = vpop.f32.mrf.mxu0
    %232 = vmatprep.mubr.f32.mxu0 %v40
    %233 = vmatmul.mubr.f32.gmra.mxu0 %v39
    %v234 = vpop.f32.mrf.mxu0
    %v235 = vadd.f32 0.0, %v234
    %v236 = vpop.f32.mrf.mxu0
    %237 = vmatprep.mubr.f32.mxu0 %v42
    %238 = vmatmul.mubr.f32.gmra.mxu0 %v41
    %v239 = vpop.f32.mrf.mxu0
    %v240 = vadd.f32 0.0, %v239
    %v241 = vpop.f32.mrf.mxu0
    %242 = vmatprep.mubr.f32.mxu0 %v44
    %243 = vmatmul.mubr.f32.gmra.mxu0 %v43
    %v244 = vpop.f32.mrf.mxu0
    %v245 = vadd.f32 0.0, %v244
    %v246 = vpop.f32.mrf.mxu0
    %247 = vmatprep.mubr.f32.mxu0 %v46
    %248 = vmatmul.mubr.f32.gmra.mxu0 %v45
    %v249 = vpop.f32.mrf.mxu0
    %v250 = vadd.f32 0.0, %v249
    %v251 = vpop.f32.mrf.mxu0
    %252 = vmatprep.mubr.f32.mxu0 %v48
    %253 = vmatmul.mubr.f32.gmra.mxu0 %v47
    %v254 = vpop.f32.mrf.mxu0
    %v255 = vadd.f32 0.0, %v254
    %v256 = vpop.f32.mrf.mxu0
    %257 = vmatprep.mubr.f32.mxu0 %v50
    %258 = vmatmul.mubr.f32.gmra.mxu0 %v49
    %v259 = vpop.f32.mrf.mxu0
    %v260 = vadd.f32 0.0, %v259
    %v261 = vpop.f32.mrf.mxu0
    %262 = vmatprep.mubr.f32.mxu0 %v52
    %263 = vmatmul.mubr.f32.gmra.mxu0 %v51
    %v264 = vpop.f32.mrf.mxu0
    %v265 = vadd.f32 0.0, %v264
    %v266 = vpop.f32.mrf.mxu0
    %267 = vmatprep.mubr.f32.mxu0 %v54
    %268 = vmatmul.mubr.f32.gmra.mxu0 %v53
    %v269 = vpop.f32.mrf.mxu0
    %v270 = vadd.f32 0.0, %v269
    %v271 = vpop.f32.mrf.mxu0
    %272 = vmatprep.mubr.f32.mxu0 %v56
    %273 = vmatmul.mubr.f32.gmra.mxu0 %v55
    %v274 = vpop.f32.mrf.mxu0
    %v275 = vadd.f32 0.0, %v274
    %v276 = vpop.f32.mrf.mxu0
    %277 = vmatprep.mubr.f32.mxu0 %v58
    %278 = vmatmul.mubr.f32.gmra.mxu0 %v57
    %v279 = vpop.f32.mrf.mxu0
    %v280 = vadd.f32 0.0, %v279
    %v281 = vpop.f32.mrf.mxu0
    %282 = vmatprep.mubr.f32.mxu0 %v60
    %283 = vmatmul.mubr.f32.gmra.mxu0 %v59
    %v284 = vpop.f32.mrf.mxu0
    %v285 = vadd.f32 0.0, %v284
    %v286 = vpop.f32.mrf.mxu0
    %287 = vmatprep.mubr.f32.mxu0 %v62
    %288 = vmatmul.mubr.f32.gmra.mxu0 %v61
    %v289 = vpop.f32.mrf.mxu0
    %v290 = vadd.f32 0.0, %v289
    %v291 = vpop.f32.mrf.mxu0
    %292 = vmatprep.mubr.f32.mxu0 %v64
    %293 = vmatmul.mubr.f32.gmra.mxu0 %v63
    %v294 = vpop.f32.mrf.mxu0
    %v295 = vadd.f32 0.0, %v294
    %v296 = vpop.f32.mrf.mxu0
    %297 = vmatprep.mubr.f32.mxu0 %v66
    %298 = vmatmul.mubr.f32.gmra.mxu0 %v65
    %v299 = vpop.f32.mrf.mxu0
    %v300 = vadd.f32 0.0, %v299
    %v301 = vpop.f32.mrf.mxu0
    %302 = vmatprep.mubr.f32.mxu0 %v68
    %303 = vmatmul.mubr.f32.gmra.mxu0 %v67
    %v304 = vpop.f32.mrf.mxu0
    %v305 = vadd.f32 0.0, %v304
    %v306 = vpop.f32.mrf.mxu0
    %307 = vmatprep.mubr.f32.mxu0 %v70
    %308 = vmatmul.mubr.f32.gmra.mxu0 %v69
    %v309 = vpop.f32.mrf.mxu0
    %v310 = vadd.f32 0.0, %v309
    %v311 = vpop.f32.mrf.mxu0
    %312 = vmatprep.mubr.f32.mxu0 %v72
    %313 = vmatmul.mubr.f32.gmra.mxu0 %v71
    %v314 = vpop.f32.mrf.mxu0
    %v315 = vadd.f32 0.0, %v314
    %v316 = vpop.f32.mrf.mxu0
    %317 = vmatprep.mubr.f32.mxu0 %v74
    %318 = vmatmul.mubr.f32.gmra.mxu0 %v73
    %v319 = vpop.f32.mrf.mxu0
    %v320 = vadd.f32 0.0, %v319
    %v321 = vpop.f32.mrf.mxu0
    %322 = vmatprep.mubr.f32.mxu0 %v76
    %323 = vmatmul.mubr.f32.gmra.mxu0 %v75
    %v324 = vpop.f32.mrf.mxu0
    %v325 = vadd.f32 0.0, %v324
    %v326 = vpop.f32.mrf.mxu0
    %327 = vmatprep.mubr.f32.mxu0 %v78
    %328 = vmatmul.mubr.f32.gmra.mxu0 %v77
    %v329 = vpop.f32.mrf.mxu0
    %v330 = vadd.f32 0.0, %v329
    %v331 = vpop.f32.mrf.mxu0
    %332 = vmatprep.mubr.f32.mxu0 %v80
    %333 = vmatmul.mubr.f32.gmra.mxu0 %v79
    %v334 = vpop.f32.mrf.mxu0
    %v335 = vadd.f32 0.0, %v334
    %v336 = vpop.f32.mrf.mxu0
    %337 = vdwg.mxu0
    %338 = vst [vmem:[#allocation2] sm:$0xff] %v180
    %339 = vst [vmem:[#allocation2 + $0x8] sm:$0xff] %v185
    %340 = vst [vmem:[#allocation2 + $0x10] sm:$0xff] %v190
    %341 = vst [vmem:[#allocation2 + $0x18] sm:$0xff] %v195
    %342 = vst [vmem:[#allocation2 + $0x20] sm:$0xff] %v200
    %343 = vst [vmem:[#allocation2 + $0x28] sm:$0xff] %v205
    %344 = vst [vmem:[#allocation2 + $0x30] sm:$0xff] %v210
    %345 = vst [vmem:[#allocation2 + $0x38] sm:$0xff] %v215
    %346 = vst [vmem:[#allocation2 + $0x40] sm:$0xff] %v220
    %347 = vst [vmem:[#allocation2 + $0x48] sm:$0xff] %v225
    %348 = vst [vmem:[#allocation2 + $0x50] sm:$0xff] %v230
    %349 = vst [vmem:[#allocation2 + $0x58] sm:$0xff] %v235
    %350 = vst [vmem:[#allocation2 + $0x60] sm:$0xff] %v240
    %351 = vst [vmem:[#allocation2 + $0x68] sm:$0xff] %v245
    %352 = vst [vmem:[#allocation2 + $0x70] sm:$0xff] %v250
    %353 = vst [vmem:[#allocation2 + $0x78] sm:$0xff] %v255
    %354 = vst [vmem:[#allocation2 + $0x80] sm:$0xff] %v260
    %355 = vst [vmem:[#allocation2 + $0x88] sm:$0xff] %v265
    %356 = vst [vmem:[#allocation2 + $0x90] sm:$0xff] %v270
    %357 = vst [vmem:[#allocation2 + $0x98] sm:$0xff] %v275
    %358 = vst [vmem:[#allocation2 + $0xa0] sm:$0xff] %v280
    %359 = vst [vmem:[#allocation2 + $0xa8] sm:$0xff] %v285
    %360 = vst [vmem:[#allocation2 + $0xb0] sm:$0xff] %v290
    %361 = vst [vmem:[#allocation2 + $0xb8] sm:$0xff] %v295
    %362 = vst [vmem:[#allocation2 + $0xc0] sm:$0xff] %v300
    %363 = vst [vmem:[#allocation2 + $0xc8] sm:$0xff] %v305
    %364 = vst [vmem:[#allocation2 + $0xd0] sm:$0xff] %v310
    %365 = vst [vmem:[#allocation2 + $0xd8] sm:$0xff] %v315
    %366 = vst [vmem:[#allocation2 + $0xe0] sm:$0xff] %v320
    %367 = vst [vmem:[#allocation2 + $0xe8] sm:$0xff] %v325
    %368 = vst [vmem:[#allocation2 + $0xf0] sm:$0xff] %v330
    %369 = vst [vmem:[#allocation2 + $0xf8] sm:$0xff] %v335
    %v370 = vld [vmem:[%s2] sm:$0xff]
    %v371 = vld [vmem:[%s2 + $0x8] sm:$0xff]
    %v372 = vld [vmem:[%s2 + $0x10] sm:$0xff]
    %v373 = vld [vmem:[%s2 + $0x18] sm:$0xff]
    %v374 = vld [vmem:[%s2 + $0x20] sm:$0xff]
    %v375 = vld [vmem:[%s2 + $0x28] sm:$0xff]
    %v376 = vld [vmem:[%s2 + $0x30] sm:$0xff]
    %v377 = vld [vmem:[%s2 + $0x38] sm:$0xff]
    %v378 = vld [vmem:[%s2 + $0x40] sm:$0xff]
    %v379 = vld [vmem:[%s2 + $0x48] sm:$0xff]
    %v380 = vld [vmem:[%s2 + $0x50] sm:$0xff]
    %v381 = vld [vmem:[%s2 + $0x58] sm:$0xff]
    %v382 = vld [vmem:[%s2 + $0x60] sm:$0xff]
    %v383 = vld [vmem:[%s2 + $0x68] sm:$0xff]
    %v384 = vld [vmem:[%s2 + $0x70] sm:$0xff]
    %v385 = vld [vmem:[%s2 + $0x78] sm:$0xff]
    %v386 = vld [vmem:[%s2 + $0x80] sm:$0xff]
    %v387 = vld [vmem:[%s2 + $0x88] sm:$0xff]
    %v388 = vld [vmem:[%s2 + $0x90] sm:$0xff]
    %v389 = vld [vmem:[%s2 + $0x98] sm:$0xff]
    %v390 = vld [vmem:[%s2 + $0xa0] sm:$0xff]
    %v391 = vld [vmem:[%s2 + $0xa8] sm:$0xff]
    %v392 = vld [vmem:[%s2 + $0xb0] sm:$0xff]
    %v393 = vld [vmem:[%s2 + $0xb8] sm:$0xff]
    %v394 = vld [vmem:[%s2 + $0xc0] sm:$0xff]
    %v395 = vld [vmem:[%s2 + $0xc8] sm:$0xff]
    %v396 = vld [vmem:[%s2 + $0xd0] sm:$0xff]
    %v397 = vld [vmem:[%s2 + $0xd8] sm:$0xff]
    %v398 = vld [vmem:[%s2 + $0xe0] sm:$0xff]
    %v399 = vld [vmem:[%s2 + $0xe8] sm:$0xff]
    %v400 = vld [vmem:[%s2 + $0xf0] sm:$0xff]
    %v401 = vld [vmem:[%s2 + $0xf8] sm:$0xff]
    %v402 = vadd.f32 %v180, %v370
    %v403 = vadd.f32 %v185, %v371
    %v404 = vadd.f32 %v190, %v372
    %v405 = vadd.f32 %v195, %v373
    %v406 = vadd.f32 %v200, %v374
    %v407 = vadd.f32 %v205, %v375
    %v408 = vadd.f32 %v210, %v376
    %v409 = vadd.f32 %v215, %v377
    %v410 = vadd.f32 %v220, %v378
    %v411 = vadd.f32 %v225, %v379
    %v412 = vadd.f32 %v230, %v380
    %v413 = vadd.f32 %v235, %v381
    %v414 = vadd.f32 %v240, %v382
    %v415 = vadd.f32 %v245, %v383
    %v416 = vadd.f32 %v250, %v384
    %v417 = vadd.f32 %v255, %v385
    %v418 = vadd.f32 %v260, %v386
    %v419 = vadd.f32 %v265, %v387
    %v420 = vadd.f32 %v270, %v388
    %v421 = vadd.f32 %v275, %v389
    %v422 = vadd.f32 %v280, %v390
    %v423 = vadd.f32 %v285, %v391
    %v424 = vadd.f32 %v290, %v392
    %v425 = vadd.f32 %v295, %v393
    %v426 = vadd.f32 %v300, %v394
    %v427 = vadd.f32 %v305, %v395
    %v428 = vadd.f32 %v310, %v396
    %v429 = vadd.f32 %v315, %v397
    %v430 = vadd.f32 %v320, %v398
    %v431 = vadd.f32 %v325, %v399
    %v432 = vadd.f32 %v330, %v400
    %v433 = vadd.f32 %v335, %v401
    %434 = vst [vmem:[%s4] sm:$0xff] %v402
    %435 = vst [vmem:[%s4 + $0x8] sm:$0xff] %v403
    %436 = vst [vmem:[%s4 + $0x10] sm:$0xff] %v404
    %437 = vst [vmem:[%s4 + $0x18] sm:$0xff] %v405
    %438 = vst [vmem:[%s4 + $0x20] sm:$0xff] %v406
    %439 = vst [vmem:[%s4 + $0x28] sm:$0xff] %v407
    %440 = vst [vmem:[%s4 + $0x30] sm:$0xff] %v408
    %441 = vst [vmem:[%s4 + $0x38] sm:$0xff] %v409
    %442 = vst [vmem:[%s4 + $0x40] sm:$0xff] %v410
    %443 = vst [vmem:[%s4 + $0x48] sm:$0xff] %v411
    %444 = vst [vmem:[%s4 + $0x50] sm:$0xff] %v412
    %445 = vst [vmem:[%s4 + $0x58] sm:$0xff] %v413
    %446 = vst [vmem:[%s4 + $0x60] sm:$0xff] %v414
    %447 = vst [vmem:[%s4 + $0x68] sm:$0xff] %v415
    %448 = vst [vmem:[%s4 + $0x70] sm:$0xff] %v416
    %449 = vst [vmem:[%s4 + $0x78] sm:$0xff] %v417
    %450 = vst [vmem:[%s4 + $0x80] sm:$0xff] %v418
    %451 = vst [vmem:[%s4 + $0x88] sm:$0xff] %v419
    %452 = vst [vmem:[%s4 + $0x90] sm:$0xff] %v420
    %453 = vst [vmem:[%s4 + $0x98] sm:$0xff] %v421
    %454 = vst [vmem:[%s4 + $0xa0] sm:$0xff] %v422
    %455 = vst [vmem:[%s4 + $0xa8] sm:$0xff] %v423
    %456 = vst [vmem:[%s4 + $0xb0] sm:$0xff] %v424
    %457 = vst [vmem:[%s4 + $0xb8] sm:$0xff] %v425
    %458 = vst [vmem:[%s4 + $0xc0] sm:$0xff] %v426
    %459 = vst [vmem:[%s4 + $0xc8] sm:$0xff] %v427
    %460 = vst [vmem:[%s4 + $0xd0] sm:$0xff] %v428
    %461 = vst [vmem:[%s4 + $0xd8] sm:$0xff] %v429
    %462 = vst [vmem:[%s4 + $0xe0] sm:$0xff] %v430
    %463 = vst [vmem:[%s4 + $0xe8] sm:$0xff] %v431
    %464 = vst [vmem:[%s4 + $0xf0] sm:$0xff] %v432
    %465 = vst [vmem:[%s4 + $0xf8] sm:$0xff] %v433
    // Predicated region
    $region14: #{lightgcl_loss.20} parent=1 // pred_check
      _
    $region15: #{lightgcl_loss.20} parent=1 // pred_check_branch
      %467 = sbr.rel (0) target = $region17
    $region16: #{lightgcl_loss.20} parent=1 // pred_region
      %s469 = ssub.s32 4096, 4096
      %470 = vsyncadd [#allocation3], %s469
      %s471 = sshll.u32 [#allocation2], 4
      %s472 = int_to_ptr.vmem [resolvable:$true] %s471
      %477 = dma.vmem_to_hbm [thread:$0]  %s472, 4096, %s3, [#allocation3], 128, 128, 8
    $region17: #{lightgcl_loss.20} parent=1 // pred_fallthru
      _
    // Predicated region
    $region18: #{lightgcl_loss.20} parent=1 // pred_check
      _
    $region19: #{lightgcl_loss.20} parent=1 // pred_check_branch
      %479 = sbr.rel (0) target = $region21
    $region20: #{lightgcl_loss.20} parent=1 // pred_region
      _
    $region21: #{lightgcl_loss.20} parent=1 // pred_fallthru
      _
    // Predicated region
    $region22: #{lightgcl_loss.20} parent=1 // pred_check
      _
    $region23: #{lightgcl_loss.20} parent=1 // pred_check_branch
      %481 = sbr.rel (0) target = $region25
    $region24: #{lightgcl_loss.20} parent=1 // pred_region
      %482 = dma.done [#allocation3], 4096
    $region25: #{lightgcl_loss.20} parent=1 // pred_fallthru
      _
    // Predicated region
    $region26: #{lightgcl_loss.20} parent=1 // pred_check
      _
    $region27: #{lightgcl_loss.20} parent=1 // pred_check_branch
      %484 = sbr.rel (0) target = $region29
    $region28: #{lightgcl_loss.20} parent=1 // pred_region
      _
    $region29: #{lightgcl_loss.20} parent=1 // pred_fallthru
      _
    %485 = vsyncpa [#allocation3], 1

// kernel: lightgcl_loss.22
$region0: #{lightgcl_loss.22}
  #allocation0 [shape = 'u32[]', space=smem, size = 0x4, offset = 0x4, fixed_abs, tag = 'smem constant byte address 0x4 - core index']
  #allocation1 [shape = 'u32[144,128]{1,0:T(1,128)}', space=vmem, size = 0x12000, scoped, tag = 'internal scratch']
  %s0 = inlined_call_operand.vmem [shape: f32[128,256], index: 0, kind: input, shape index: {}]
  %s1 = inlined_call_operand.vmem [shape: f32[256,128], index: 1, kind: input, shape index: {}]
  %s2 = inlined_call_operand.vmem [shape: f32[128,128], index: 2, kind: output, shape index: {}]
  %s3 = sld [smem:[#allocation0]]
  $region18: #{lightgcl_loss.22} parent=0
    _
  %s5 = ssub.s32 1, %s3
  %s6 = scalar_select 0, %s5, %s3
  // Predicated region
  $region2: #{lightgcl_loss.22} parent=0 // pred_check
    _
  $region3: #{lightgcl_loss.22} parent=0 // pred_check_branch
    %8 = sbr.rel (0) target = $region5
  $region4: #{lightgcl_loss.22} parent=0 // pred_region
    _
  $region5: #{lightgcl_loss.22} parent=0 // pred_fallthru
    _
  // Predicated region
  $region6: #{lightgcl_loss.22} parent=0 // pred_check
    _
  $region7: #{lightgcl_loss.22} parent=0 // pred_check_branch
    %10 = sbr.rel (0) target = $region9
  $region8: #{lightgcl_loss.22} parent=0 // pred_region
    _
  $region9: #{lightgcl_loss.22} parent=0 // pred_fallthru
    _
  %v11 = vld [vmem:[%s0] sm:$0xff]
  %v12 = vld [vmem:[%s0 + $0x8] sm:$0xff]
  %v13 = vld [vmem:[%s0 + $0x10] sm:$0xff]
  %v14 = vld [vmem:[%s0 + $0x18] sm:$0xff]
  %v15 = vld [vmem:[%s0 + $0x20] sm:$0xff]
  %v16 = vld [vmem:[%s0 + $0x28] sm:$0xff]
  %v17 = vld [vmem:[%s0 + $0x30] sm:$0xff]
  %v18 = vld [vmem:[%s0 + $0x38] sm:$0xff]
  %v19 = vld [vmem:[%s0 + $0x40] sm:$0xff]
  %v20 = vld [vmem:[%s0 + $0x48] sm:$0xff]
  %v21 = vld [vmem:[%s0 + $0x50] sm:$0xff]
  %v22 = vld [vmem:[%s0 + $0x58] sm:$0xff]
  %v23 = vld [vmem:[%s0 + $0x60] sm:$0xff]
  %v24 = vld [vmem:[%s0 + $0x68] sm:$0xff]
  %v25 = vld [vmem:[%s0 + $0x70] sm:$0xff]
  %v26 = vld [vmem:[%s0 + $0x78] sm:$0xff]
  %v27 = vld [vmem:[%s0 + $0x80] sm:$0xff]
  %v28 = vld [vmem:[%s0 + $0x88] sm:$0xff]
  %v29 = vld [vmem:[%s0 + $0x90] sm:$0xff]
  %v30 = vld [vmem:[%s0 + $0x98] sm:$0xff]
  %v31 = vld [vmem:[%s0 + $0xa0] sm:$0xff]
  %v32 = vld [vmem:[%s0 + $0xa8] sm:$0xff]
  %v33 = vld [vmem:[%s0 + $0xb0] sm:$0xff]
  %v34 = vld [vmem:[%s0 + $0xb8] sm:$0xff]
  %v35 = vld [vmem:[%s0 + $0xc0] sm:$0xff]
  %v36 = vld [vmem:[%s0 + $0xc8] sm:$0xff]
  %v37 = vld [vmem:[%s0 + $0xd0] sm:$0xff]
  %v38 = vld [vmem:[%s0 + $0xd8] sm:$0xff]
  %v39 = vld [vmem:[%s0 + $0xe0] sm:$0xff]
  %v40 = vld [vmem:[%s0 + $0xe8] sm:$0xff]
  %v41 = vld [vmem:[%s0 + $0xf0] sm:$0xff]
  %v42 = vld [vmem:[%s0 + $0xf8] sm:$0xff]
  %v43 = vld [vmem:[%s1] sm:$0xff]
  %v44 = vld [vmem:[%s1 + $0x8] sm:$0xff]
  %v45 = vld [vmem:[%s1 + $0x10] sm:$0xff]
  %v46 = vld [vmem:[%s1 + $0x18] sm:$0xff]
  %v47 = vld [vmem:[%s1 + $0x20] sm:$0xff]
  %v48 = vld [vmem:[%s1 + $0x28] sm:$0xff]
  %v49 = vld [vmem:[%s1 + $0x30] sm:$0xff]
  %v50 = vld [vmem:[%s1 + $0x38] sm:$0xff]
  %v51 = vld [vmem:[%s1 + $0x40] sm:$0xff]
  %v52 = vld [vmem:[%s1 + $0x48] sm:$0xff]
  %v53 = vld [vmem:[%s1 + $0x50] sm:$0xff]
  %v54 = vld [vmem:[%s1 + $0x58] sm:$0xff]
  %v55 = vld [vmem:[%s1 + $0x60] sm:$0xff]
  %v56 = vld [vmem:[%s1 + $0x68] sm:$0xff]
  %v57 = vld [vmem:[%s1 + $0x70] sm:$0xff]
  %v58 = vld [vmem:[%s1 + $0x78] sm:$0xff]
  %v59 = vld [vmem:[%s1 + $0x80] sm:$0xff]
  %v60 = vld [vmem:[%s1 + $0x88] sm:$0xff]
  %v61 = vld [vmem:[%s1 + $0x90] sm:$0xff]
  %v62 = vld [vmem:[%s1 + $0x98] sm:$0xff]
  %v63 = vld [vmem:[%s1 + $0xa0] sm:$0xff]
  %v64 = vld [vmem:[%s1 + $0xa8] sm:$0xff]
  %v65 = vld [vmem:[%s1 + $0xb0] sm:$0xff]
  %v66 = vld [vmem:[%s1 + $0xb8] sm:$0xff]
  %v67 = vld [vmem:[%s1 + $0xc0] sm:$0xff]
  %v68 = vld [vmem:[%s1 + $0xc8] sm:$0xff]
  %v69 = vld [vmem:[%s1 + $0xd0] sm:$0xff]
  %v70 = vld [vmem:[%s1 + $0xd8] sm:$0xff]
  %v71 = vld [vmem:[%s1 + $0xe0] sm:$0xff]
  %v72 = vld [vmem:[%s1 + $0xe8] sm:$0xff]
  %v73 = vld [vmem:[%s1 + $0xf0] sm:$0xff]
  %v74 = vld [vmem:[%s1 + $0xf8] sm:$0xff]
  %75 = vmatprep.subr.mxu0 0.0
  %76 = vmatpush1.msra.mxu0 %v58
  %77 = vmatprep.subr.mxu0 0.0
  %78 = vmatpush1.msra.mxu0 %v57
  %79 = vmatprep.subr.mxu0 0.0
  %80 = vmatpush1.msra.mxu0 %v56
  %81 = vmatprep.subr.mxu0 0.0
  %82 = vmatpush1.msra.mxu0 %v55
  %83 = vmatprep.subr.mxu0 0.0
  %84 = vmatpush1.msra.mxu0 %v54
  %85 = vmatprep.subr.mxu0 0.0
  %86 = vmatpush1.msra.mxu0 %v53
  %87 = vmatprep.subr.mxu0 0.0
  %88 = vmatpush1.msra.mxu0 %v52
  %89 = vmatprep.subr.mxu0 0.0
  %90 = vmatpush1.msra.mxu0 %v51
  %91 = vmatprep.subr.mxu0 0.0
  %92 = vmatpush1.msra.mxu0 %v50
  %93 = vmatprep.subr.mxu0 0.0
  %94 = vmatpush1.msra.mxu0 %v49
  %95 = vmatprep.subr.mxu0 0.0
  %96 = vmatpush1.msra.mxu0 %v48
  %97 = vmatprep.subr.mxu0 0.0
  %98 = vmatpush1.msra.mxu0 %v47
  %99 = vmatprep.subr.mxu0 0.0
  %100 = vmatpush1.msra.mxu0 %v46
  %101 = vmatprep.subr.mxu0 0.0
  %102 = vmatpush1.msra.mxu0 %v45
  %103 = vmatprep.subr.mxu0 0.0
  %104 = vmatpush1.msra.mxu0 %v44
  %105 = vmatprep.subr.mxu0 0.0
  %106 = vmatpush1.msra.mxu0 %v43
  %107 = vmatprep.subr.mxu0 0.0
  %108 = vmatpush2.msra.mxu0 %v74
  %109 = vmatprep.subr.mxu0 0.0
  %110 = vmatpush2.msra.mxu0 %v73
  %111 = vmatprep.subr.mxu0 0.0
  %112 = vmatpush2.msra.mxu0 %v72
  %113 = vmatprep.subr.mxu0 0.0
  %114 = vmatpush2.msra.mxu0 %v71
  %115 = vmatprep.subr.mxu0 0.0
  %116 = vmatpush2.msra.mxu0 %v70
  %117 = vmatprep.subr.mxu0 0.0
  %118 = vmatpush2.msra.mxu0 %v69
  %119 = vmatprep.subr.mxu0 0.0
  %120 = vmatpush2.msra.mxu0 %v68
  %121 = vmatprep.subr.mxu0 0.0
  %122 = vmatpush2.msra.mxu0 %v67
  %123 = vmatprep.subr.mxu0 0.0
  %124 = vmatpush2.msra.mxu0 %v66
  %125 = vmatprep.subr.mxu0 0.0
  %126 = vmatpush2.msra.mxu0 %v65
  %127 = vmatprep.subr.mxu0 0.0
  %128 = vmatpush2.msra.mxu0 %v64
  %129 = vmatprep.subr.mxu0 0.0
  %130 = vmatpush2.msra.mxu0 %v63
  %131 = vmatprep.subr.mxu0 0.0
  %132 = vmatpush2.msra.mxu0 %v62
  %133 = vmatprep.subr.mxu0 0.0
  %134 = vmatpush2.msra.mxu0 %v61
  %135 = vmatprep.subr.mxu0 0.0
  %136 = vmatpush2.msra.mxu0 %v60
  %137 = vmatprep.subr.mxu0 0.0
  %138 = vmatpush2.msra.mxu0 %v59
  %139 = vmatprep.mubr.f32.mxu0 %v12
  %140 = vmatmul.mubr.f32.gmra.mxu0 %v11
  %v141 = vpop.f32.mrf.mxu0
  %v142 = vadd.f32 0.0, %v141
  %v143 = vpop.f32.mrf.mxu0
  %144 = vmatprep.mubr.f32.mxu0 %v14
  %145 = vmatmul.mubr.f32.gmra.mxu0 %v13
  %v146 = vpop.f32.mrf.mxu0
  %v147 = vadd.f32 0.0, %v146
  %v148 = vpop.f32.mrf.mxu0
  %149 = vmatprep.mubr.f32.mxu0 %v16
  %150 = vmatmul.mubr.f32.gmra.mxu0 %v15
  %v151 = vpop.f32.mrf.mxu0
  %v152 = vadd.f32 0.0, %v151
  %v153 = vpop.f32.mrf.mxu0
  %154 = vmatprep.mubr.f32.mxu0 %v18
  %155 = vmatmul.mubr.f32.gmra.mxu0 %v17
  %v156 = vpop.f32.mrf.mxu0
  %v157 = vadd.f32 0.0, %v156
  %v158 = vpop.f32.mrf.mxu0
  %159 = vmatprep.mubr.f32.mxu0 %v20
  %160 = vmatmul.mubr.f32.gmra.mxu0 %v19
  %v161 = vpop.f32.mrf.mxu0
  %v162 = vadd.f32 0.0, %v161
  %v163 = vpop.f32.mrf.mxu0
  %164 = vmatprep.mubr.f32.mxu0 %v22
  %165 = vmatmul.mubr.f32.gmra.mxu0 %v21
  %v166 = vpop.f32.mrf.mxu0
  %v167 = vadd.f32 0.0, %v166
  %v168 = vpop.f32.mrf.mxu0
  %169 = vmatprep.mubr.f32.mxu0 %v24
  %170 = vmatmul.mubr.f32.gmra.mxu0 %v23
  %v171 = vpop.f32.mrf.mxu0
  %v172 = vadd.f32 0.0, %v171
  %v173 = vpop.f32.mrf.mxu0
  %174 = vmatprep.mubr.f32.mxu0 %v26
  %175 = vmatmul.mubr.f32.gmra.mxu0 %v25
  %v176 = vpop.f32.mrf.mxu0
  %v177 = vadd.f32 0.0, %v176
  %v178 = vpop.f32.mrf.mxu0
  %179 = vmatprep.mubr.f32.mxu0 %v28
  %180 = vmatmul.mubr.f32.gmra.mxu0 %v27
  %v181 = vpop.f32.mrf.mxu0
  %v182 = vadd.f32 0.0, %v181
  %v183 = vpop.f32.mrf.mxu0
  %184 = vmatprep.mubr.f32.mxu0 %v30
  %185 = vmatmul.mubr.f32.gmra.mxu0 %v29
  %v186 = vpop.f32.mrf.mxu0
  %v187 = vadd.f32 0.0, %v186
  %v188 = vpop.f32.mrf.mxu0
  %189 = vmatprep.mubr.f32.mxu0 %v32
  %190 = vmatmul.mubr.f32.gmra.mxu0 %v31
  %v191 = vpop.f32.mrf.mxu0
  %v192 = vadd.f32 0.0, %v191
  %v193 = vpop.f32.mrf.mxu0
  %194 = vmatprep.mubr.f32.mxu0 %v34
  %195 = vmatmul.mubr.f32.gmra.mxu0 %v33
  %v196 = vpop.f32.mrf.mxu0
  %v197 = vadd.f32 0.0, %v196
  %v198 = vpop.f32.mrf.mxu0
  %199 = vmatprep.mubr.f32.mxu0 %v36
  %200 = vmatmul.mubr.f32.gmra.mxu0 %v35
  %v201 = vpop.f32.mrf.mxu0
  %v202 = vadd.f32 0.0, %v201
  %v203 = vpop.f32.mrf.mxu0
  %204 = vmatprep.mubr.f32.mxu0 %v38
  %205 = vmatmul.mubr.f32.gmra.mxu0 %v37
  %v206 = vpop.f32.mrf.mxu0
  %v207 = vadd.f32 0.0, %v206
  %v208 = vpop.f32.mrf.mxu0
  %209 = vmatprep.mubr.f32.mxu0 %v40
  %210 = vmatmul.mubr.f32.gmra.mxu0 %v39
  %v211 = vpop.f32.mrf.mxu0
  %v212 = vadd.f32 0.0, %v211
  %v213 = vpop.f32.mrf.mxu0
  %214 = vmatprep.mubr.f32.mxu0 %v42
  %215 = vmatmul.mubr.f32.gmra.mxu0 %v41
  %v216 = vpop.f32.mrf.mxu0
  %v217 = vadd.f32 0.0, %v216
  %v218 = vpop.f32.mrf.mxu0
  %219 = vdwg.mxu0
  %220 = vst [vmem:[%s2] sm:$0xff] %v142
  %221 = vst [vmem:[%s2 + $0x8] sm:$0xff] %v147
  %222 = vst [vmem:[%s2 + $0x10] sm:$0xff] %v152
  %223 = vst [vmem:[%s2 + $0x18] sm:$0xff] %v157
  %224 = vst [vmem:[%s2 + $0x20] sm:$0xff] %v162
  %225 = vst [vmem:[%s2 + $0x28] sm:$0xff] %v167
  %226 = vst [vmem:[%s2 + $0x30] sm:$0xff] %v172
  %227 = vst [vmem:[%s2 + $0x38] sm:$0xff] %v177
  %228 = vst [vmem:[%s2 + $0x40] sm:$0xff] %v182
  %229 = vst [vmem:[%s2 + $0x48] sm:$0xff] %v187
  %230 = vst [vmem:[%s2 + $0x50] sm:$0xff] %v192
  %231 = vst [vmem:[%s2 + $0x58] sm:$0xff] %v197
  %232 = vst [vmem:[%s2 + $0x60] sm:$0xff] %v202
  %233 = vst [vmem:[%s2 + $0x68] sm:$0xff] %v207
  %234 = vst [vmem:[%s2 + $0x70] sm:$0xff] %v212
  %235 = vst [vmem:[%s2 + $0x78] sm:$0xff] %v217
  // Predicated region
  $region10: #{lightgcl_loss.22} parent=0 // pred_check
    _
  $region11: #{lightgcl_loss.22} parent=0 // pred_check_branch
    %237 = sbr.rel (0) target = $region13
  $region12: #{lightgcl_loss.22} parent=0 // pred_region
    _
  $region13: #{lightgcl_loss.22} parent=0 // pred_fallthru
    _
  // Predicated region
  $region14: #{lightgcl_loss.22} parent=0 // pred_check
    _
  $region15: #{lightgcl_loss.22} parent=0 // pred_check_branch
    %239 = sbr.rel (0) target = $region17
  $region16: #{lightgcl_loss.22} parent=0 // pred_region
    _
  $region17: #{lightgcl_loss.22} parent=0 // pred_fallthru
    _

// kernel: lightgcl_loss.17
$region0: #{lightgcl_loss.17}
  #allocation0 [shape = 'u32[]', space=smem, size = 0x4, offset = 0x4, fixed_abs, tag = 'smem constant byte address 0x4 - core index']
  #allocation1 [shape = 'u32[144,128]{1,0:T(1,128)}', space=vmem, size = 0x12000, scoped, tag = 'internal scratch']
  %s0 = inlined_call_operand.vmem [shape: f32[256,128], index: 0, kind: input, shape index: {}]
  %s1 = inlined_call_operand.vmem [shape: f32[128,128], index: 1, kind: input, shape index: {}]
  %s2 = inlined_call_operand.vmem [shape: f32[256,128], index: 2, kind: input, shape index: {}]
  %s3 = inlined_call_operand.vmem [shape: f32[256,128], index: 3, kind: output, shape index: {}]
  %s4 = sld [smem:[#allocation0]]
  $region22: #{lightgcl_loss.17} parent=0
    _
  %s6 = ssub.s32 1, %s4
  %s7 = scalar_select 0, %s6, %s4
  // Predicated region
  $region2: #{lightgcl_loss.17} parent=0 // pred_check
    _
  $region3: #{lightgcl_loss.17} parent=0 // pred_check_branch
    %9 = sbr.rel (0) target = $region5
  $region4: #{lightgcl_loss.17} parent=0 // pred_region
    _
  $region5: #{lightgcl_loss.17} parent=0 // pred_fallthru
    _
  // Predicated region
  $region6: #{lightgcl_loss.17} parent=0 // pred_check
    _
  $region7: #{lightgcl_loss.17} parent=0 // pred_check_branch
    %11 = sbr.rel (0) target = $region9
  $region8: #{lightgcl_loss.17} parent=0 // pred_region
    _
  $region9: #{lightgcl_loss.17} parent=0 // pred_fallthru
    _
  // Predicated region
  $region10: #{lightgcl_loss.17} parent=0 // pred_check
    _
  $region11: #{lightgcl_loss.17} parent=0 // pred_check_branch
    %13 = sbr.rel (0) target = $region13
  $region12: #{lightgcl_loss.17} parent=0 // pred_region
    _
  $region13: #{lightgcl_loss.17} parent=0 // pred_fallthru
    _
  %v14 = vld [vmem:[%s0] sm:$0xff]
  %v15 = vld [vmem:[%s0 + $0x8] sm:$0xff]
  %v16 = vld [vmem:[%s0 + $0x10] sm:$0xff]
  %v17 = vld [vmem:[%s0 + $0x18] sm:$0xff]
  %v18 = vld [vmem:[%s0 + $0x20] sm:$0xff]
  %v19 = vld [vmem:[%s0 + $0x28] sm:$0xff]
  %v20 = vld [vmem:[%s0 + $0x30] sm:$0xff]
  %v21 = vld [vmem:[%s0 + $0x38] sm:$0xff]
  %v22 = vld [vmem:[%s0 + $0x40] sm:$0xff]
  %v23 = vld [vmem:[%s0 + $0x48] sm:$0xff]
  %v24 = vld [vmem:[%s0 + $0x50] sm:$0xff]
  %v25 = vld [vmem:[%s0 + $0x58] sm:$0xff]
  %v26 = vld [vmem:[%s0 + $0x60] sm:$0xff]
  %v27 = vld [vmem:[%s0 + $0x68] sm:$0xff]
  %v28 = vld [vmem:[%s0 + $0x70] sm:$0xff]
  %v29 = vld [vmem:[%s0 + $0x78] sm:$0xff]
  %v30 = vld [vmem:[%s0 + $0x80] sm:$0xff]
  %v31 = vld [vmem:[%s0 + $0x88] sm:$0xff]
  %v32 = vld [vmem:[%s0 + $0x90] sm:$0xff]
  %v33 = vld [vmem:[%s0 + $0x98] sm:$0xff]
  %v34 = vld [vmem:[%s0 + $0xa0] sm:$0xff]
  %v35 = vld [vmem:[%s0 + $0xa8] sm:$0xff]
  %v36 = vld [vmem:[%s0 + $0xb0] sm:$0xff]
  %v37 = vld [vmem:[%s0 + $0xb8] sm:$0xff]
  %v38 = vld [vmem:[%s0 + $0xc0] sm:$0xff]
  %v39 = vld [vmem:[%s0 + $0xc8] sm:$0xff]
  %v40 = vld [vmem:[%s0 + $0xd0] sm:$0xff]
  %v41 = vld [vmem:[%s0 + $0xd8] sm:$0xff]
  %v42 = vld [vmem:[%s0 + $0xe0] sm:$0xff]
  %v43 = vld [vmem:[%s0 + $0xe8] sm:$0xff]
  %v44 = vld [vmem:[%s0 + $0xf0] sm:$0xff]
  %v45 = vld [vmem:[%s0 + $0xf8] sm:$0xff]
  %v46 = vld [vmem:[%s1] sm:$0xff]
  %v47 = vld [vmem:[%s1 + $0x8] sm:$0xff]
  %v48 = vld [vmem:[%s1 + $0x10] sm:$0xff]
  %v49 = vld [vmem:[%s1 + $0x18] sm:$0xff]
  %v50 = vld [vmem:[%s1 + $0x20] sm:$0xff]
  %v51 = vld [vmem:[%s1 + $0x28] sm:$0xff]
  %v52 = vld [vmem:[%s1 + $0x30] sm:$0xff]
  %v53 = vld [vmem:[%s1 + $0x38] sm:$0xff]
  %v54 = vld [vmem:[%s1 + $0x40] sm:$0xff]
  %v55 = vld [vmem:[%s1 + $0x48] sm:$0xff]
  %v56 = vld [vmem:[%s1 + $0x50] sm:$0xff]
  %v57 = vld [vmem:[%s1 + $0x58] sm:$0xff]
  %v58 = vld [vmem:[%s1 + $0x60] sm:$0xff]
  %v59 = vld [vmem:[%s1 + $0x68] sm:$0xff]
  %v60 = vld [vmem:[%s1 + $0x70] sm:$0xff]
  %v61 = vld [vmem:[%s1 + $0x78] sm:$0xff]
  %v62 = vld [vmem:[%s2] sm:$0xff]
  %v63 = vld [vmem:[%s2 + $0x8] sm:$0xff]
  %v64 = vld [vmem:[%s2 + $0x10] sm:$0xff]
  %v65 = vld [vmem:[%s2 + $0x18] sm:$0xff]
  %v66 = vld [vmem:[%s2 + $0x20] sm:$0xff]
  %v67 = vld [vmem:[%s2 + $0x28] sm:$0xff]
  %v68 = vld [vmem:[%s2 + $0x30] sm:$0xff]
  %v69 = vld [vmem:[%s2 + $0x38] sm:$0xff]
  %v70 = vld [vmem:[%s2 + $0x40] sm:$0xff]
  %v71 = vld [vmem:[%s2 + $0x48] sm:$0xff]
  %v72 = vld [vmem:[%s2 + $0x50] sm:$0xff]
  %v73 = vld [vmem:[%s2 + $0x58] sm:$0xff]
  %v74 = vld [vmem:[%s2 + $0x60] sm:$0xff]
  %v75 = vld [vmem:[%s2 + $0x68] sm:$0xff]
  %v76 = vld [vmem:[%s2 + $0x70] sm:$0xff]
  %v77 = vld [vmem:[%s2 + $0x78] sm:$0xff]
  %v78 = vld [vmem:[%s2 + $0x80] sm:$0xff]
  %v79 = vld [vmem:[%s2 + $0x88] sm:$0xff]
  %v80 = vld [vmem:[%s2 + $0x90] sm:$0xff]
  %v81 = vld [vmem:[%s2 + $0x98] sm:$0xff]
  %v82 = vld [vmem:[%s2 + $0xa0] sm:$0xff]
  %v83 = vld [vmem:[%s2 + $0xa8] sm:$0xff]
  %v84 = vld [vmem:[%s2 + $0xb0] sm:$0xff]
  %v85 = vld [vmem:[%s2 + $0xb8] sm:$0xff]
  %v86 = vld [vmem:[%s2 + $0xc0] sm:$0xff]
  %v87 = vld [vmem:[%s2 + $0xc8] sm:$0xff]
  %v88 = vld [vmem:[%s2 + $0xd0] sm:$0xff]
  %v89 = vld [vmem:[%s2 + $0xd8] sm:$0xff]
  %v90 = vld [vmem:[%s2 + $0xe0] sm:$0xff]
  %v91 = vld [vmem:[%s2 + $0xe8] sm:$0xff]
  %v92 = vld [vmem:[%s2 + $0xf0] sm:$0xff]
  %v93 = vld [vmem:[%s2 + $0xf8] sm:$0xff]
  %94 = vmatprep.subr.mxu0 0.0
  %95 = vmatpush1.msra.mxu0 %v61
  %96 = vmatprep.subr.mxu0 0.0
  %97 = vmatpush1.msra.mxu0 %v60
  %98 = vmatprep.subr.mxu0 0.0
  %99 = vmatpush1.msra.mxu0 %v59
  %100 = vmatprep.subr.mxu0 0.0
  %101 = vmatpush1.msra.mxu0 %v58
  %102 = vmatprep.subr.mxu0 0.0
  %103 = vmatpush1.msra.mxu0 %v57
  %104 = vmatprep.subr.mxu0 0.0
  %105 = vmatpush1.msra.mxu0 %v56
  %106 = vmatprep.subr.mxu0 0.0
  %107 = vmatpush1.msra.mxu0 %v55
  %108 = vmatprep.subr.mxu0 0.0
  %109 = vmatpush1.msra.mxu0 %v54
  %110 = vmatprep.subr.mxu0 0.0
  %111 = vmatpush1.msra.mxu0 %v53
  %112 = vmatprep.subr.mxu0 0.0
  %113 = vmatpush1.msra.mxu0 %v52
  %114 = vmatprep.subr.mxu0 0.0
  %115 = vmatpush1.msra.mxu0 %v51
  %116 = vmatprep.subr.mxu0 0.0
  %117 = vmatpush1.msra.mxu0 %v50
  %118 = vmatprep.subr.mxu0 0.0
  %119 = vmatpush1.msra.mxu0 %v49
  %120 = vmatprep.subr.mxu0 0.0
  %121 = vmatpush1.msra.mxu0 %v48
  %122 = vmatprep.subr.mxu0 0.0
  %123 = vmatpush1.msra.mxu0 %v47
  %124 = vmatprep.subr.mxu0 0.0
  %125 = vmatpush1.msra.mxu0 %v46
  %126 = vmatprep.subr.mxu0 0.0
  %127 = vmatpush2.msra.mxu0 0.0
  %128 = vmatprep.subr.mxu0 0.0
  %129 = vmatpush2.msra.mxu0 0.0
  %130 = vmatprep.subr.mxu0 0.0
  %131 = vmatpush2.msra.mxu0 0.0
  %132 = vmatprep.subr.mxu0 0.0
  %133 = vmatpush2.msra.mxu0 0.0
  %134 = vmatprep.subr.mxu0 0.0
  %135 = vmatpush2.msra.mxu0 0.0
  %136 = vmatprep.subr.mxu0 0.0
  %137 = vmatpush2.msra.mxu0 0.0
  %138 = vmatprep.subr.mxu0 0.0
  %139 = vmatpush2.msra.mxu0 0.0
  %140 = vmatprep.subr.mxu0 0.0
  %141 = vmatpush2.msra.mxu0 0.0
  %142 = vmatprep.subr.mxu0 0.0
  %143 = vmatpush2.msra.mxu0 0.0
  %144 = vmatprep.subr.mxu0 0.0
  %145 = vmatpush2.msra.mxu0 0.0
  %146 = vmatprep.subr.mxu0 0.0
  %147 = vmatpush2.msra.mxu0 0.0
  %148 = vmatprep.subr.mxu0 0.0
  %149 = vmatpush2.msra.mxu0 0.0
  %150 = vmatprep.subr.mxu0 0.0
  %151 = vmatpush2.msra.mxu0 0.0
  %152 = vmatprep.subr.mxu0 0.0
  %153 = vmatpush2.msra.mxu0 0.0
  %154 = vmatprep.subr.mxu0 0.0
  %155 = vmatpush2.msra.mxu0 0.0
  %156 = vmatprep.subr.mxu0 0.0
  %157 = vmatpush2.msra.mxu0 0.0
  %158 = vmatprep.mubr.f32.mxu0 0.0
  %159 = vmatmul.mubr.f32.gmra.mxu0 %v14
  %v160 = vpop.f32.mrf.mxu0
  %v161 = vadd.f32 %v62, %v160
  %v162 = vpop.f32.mrf.mxu0
  %163 = vmatprep.mubr.f32.mxu0 0.0
  %164 = vmatmul.mubr.f32.gmra.mxu0 %v15
  %v165 = vpop.f32.mrf.mxu0
  %v166 = vadd.f32 %v63, %v165
  %v167 = vpop.f32.mrf.mxu0
  %168 = vmatprep.mubr.f32.mxu0 0.0
  %169 = vmatmul.mubr.f32.gmra.mxu0 %v16
  %v170 = vpop.f32.mrf.mxu0
  %v171 = vadd.f32 %v64, %v170
  %v172 = vpop.f32.mrf.mxu0
  %173 = vmatprep.mubr.f32.mxu0 0.0
  %174 = vmatmul.mubr.f32.gmra.mxu0 %v17
  %v175 = vpop.f32.mrf.mxu0
  %v176 = vadd.f32 %v65, %v175
  %v177 = vpop.f32.mrf.mxu0
  %178 = vmatprep.mubr.f32.mxu0 0.0
  %179 = vmatmul.mubr.f32.gmra.mxu0 %v18
  %v180 = vpop.f32.mrf.mxu0
  %v181 = vadd.f32 %v66, %v180
  %v182 = vpop.f32.mrf.mxu0
  %183 = vmatprep.mubr.f32.mxu0 0.0
  %184 = vmatmul.mubr.f32.gmra.mxu0 %v19
  %v185 = vpop.f32.mrf.mxu0
  %v186 = vadd.f32 %v67, %v185
  %v187 = vpop.f32.mrf.mxu0
  %188 = vmatprep.mubr.f32.mxu0 0.0
  %189 = vmatmul.mubr.f32.gmra.mxu0 %v20
  %v190 = vpop.f32.mrf.mxu0
  %v191 = vadd.f32 %v68, %v190
  %v192 = vpop.f32.mrf.mxu0
  %193 = vmatprep.mubr.f32.mxu0 0.0
  %194 = vmatmul.mubr.f32.gmra.mxu0 %v21
  %v195 = vpop.f32.mrf.mxu0
  %v196 = vadd.f32 %v69, %v195
  %v197 = vpop.f32.mrf.mxu0
  %198 = vmatprep.mubr.f32.mxu0 0.0
  %199 = vmatmul.mubr.f32.gmra.mxu0 %v22
  %v200 = vpop.f32.mrf.mxu0
  %v201 = vadd.f32 %v70, %v200
  %v202 = vpop.f32.mrf.mxu0
  %203 = vmatprep.mubr.f32.mxu0 0.0
  %204 = vmatmul.mubr.f32.gmra.mxu0 %v23
  %v205 = vpop.f32.mrf.mxu0
  %v206 = vadd.f32 %v71, %v205
  %v207 = vpop.f32.mrf.mxu0
  %208 = vmatprep.mubr.f32.mxu0 0.0
  %209 = vmatmul.mubr.f32.gmra.mxu0 %v24
  %v210 = vpop.f32.mrf.mxu0
  %v211 = vadd.f32 %v72, %v210
  %v212 = vpop.f32.mrf.mxu0
  %213 = vmatprep.mubr.f32.mxu0 0.0
  %214 = vmatmul.mubr.f32.gmra.mxu0 %v25
  %v215 = vpop.f32.mrf.mxu0
  %v216 = vadd.f32 %v73, %v215
  %v217 = vpop.f32.mrf.mxu0
  %218 = vmatprep.mubr.f32.mxu0 0.0
  %219 = vmatmul.mubr.f32.gmra.mxu0 %v26
  %v220 = vpop.f32.mrf.mxu0
  %v221 = vadd.f32 %v74, %v220
  %v222 = vpop.f32.mrf.mxu0
  %223 = vmatprep.mubr.f32.mxu0 0.0
  %224 = vmatmul.mubr.f32.gmra.mxu0 %v27
  %v225 = vpop.f32.mrf.mxu0
  %v226 = vadd.f32 %v75, %v225
  %v227 = vpop.f32.mrf.mxu0
  %228 = vmatprep.mubr.f32.mxu0 0.0
  %229 = vmatmul.mubr.f32.gmra.mxu0 %v28
  %v230 = vpop.f32.mrf.mxu0
  %v231 = vadd.f32 %v76, %v230
  %v232 = vpop.f32.mrf.mxu0
  %233 = vmatprep.mubr.f32.mxu0 0.0
  %234 = vmatmul.mubr.f32.gmra.mxu0 %v29
  %v235 = vpop.f32.mrf.mxu0
  %v236 = vadd.f32 %v77, %v235
  %v237 = vpop.f32.mrf.mxu0
  %238 = vmatprep.mubr.f32.mxu0 0.0
  %239 = vmatmul.mubr.f32.gmra.mxu0 %v30
  %v240 = vpop.f32.mrf.mxu0
  %v241 = vadd.f32 %v78, %v240
  %v242 = vpop.f32.mrf.mxu0
  %243 = vmatprep.mubr.f32.mxu0 0.0
  %244 = vmatmul.mubr.f32.gmra.mxu0 %v31
  %v245 = vpop.f32.mrf.mxu0
  %v246 = vadd.f32 %v79, %v245
  %v247 = vpop.f32.mrf.mxu0
  %248 = vmatprep.mubr.f32.mxu0 0.0
  %249 = vmatmul.mubr.f32.gmra.mxu0 %v32
  %v250 = vpop.f32.mrf.mxu0
  %v251 = vadd.f32 %v80, %v250
  %v252 = vpop.f32.mrf.mxu0
  %253 = vmatprep.mubr.f32.mxu0 0.0
  %254 = vmatmul.mubr.f32.gmra.mxu0 %v33
  %v255 = vpop.f32.mrf.mxu0
  %v256 = vadd.f32 %v81, %v255
  %v257 = vpop.f32.mrf.mxu0
  %258 = vmatprep.mubr.f32.mxu0 0.0
  %259 = vmatmul.mubr.f32.gmra.mxu0 %v34
  %v260 = vpop.f32.mrf.mxu0
  %v261 = vadd.f32 %v82, %v260
  %v262 = vpop.f32.mrf.mxu0
  %263 = vmatprep.mubr.f32.mxu0 0.0
  %264 = vmatmul.mubr.f32.gmra.mxu0 %v35
  %v265 = vpop.f32.mrf.mxu0
  %v266 = vadd.f32 %v83, %v265
  %v267 = vpop.f32.mrf.mxu0
  %268 = vmatprep.mubr.f32.mxu0 0.0
  %269 = vmatmul.mubr.f32.gmra.mxu0 %v36
  %v270 = vpop.f32.mrf.mxu0
  %v271 = vadd.f32 %v84, %v270
  %v272 = vpop.f32.mrf.mxu0
  %273 = vmatprep.mubr.f32.mxu0 0.0
  %274 = vmatmul.mubr.f32.gmra.mxu0 %v37
  %v275 = vpop.f32.mrf.mxu0
  %v276 = vadd.f32 %v85, %v275
  %v277 = vpop.f32.mrf.mxu0
  %278 = vmatprep.mubr.f32.mxu0 0.0
  %279 = vmatmul.mubr.f32.gmra.mxu0 %v38
  %v280 = vpop.f32.mrf.mxu0
  %v281 = vadd.f32 %v86, %v280
  %v282 = vpop.f32.mrf.mxu0
  %283 = vmatprep.mubr.f32.mxu0 0.0
  %284 = vmatmul.mubr.f32.gmra.mxu0 %v39
  %v285 = vpop.f32.mrf.mxu0
  %v286 = vadd.f32 %v87, %v285
  %v287 = vpop.f32.mrf.mxu0
  %288 = vmatprep.mubr.f32.mxu0 0.0
  %289 = vmatmul.mubr.f32.gmra.mxu0 %v40
  %v290 = vpop.f32.mrf.mxu0
  %v291 = vadd.f32 %v88, %v290
  %v292 = vpop.f32.mrf.mxu0
  %293 = vmatprep.mubr.f32.mxu0 0.0
  %294 = vmatmul.mubr.f32.gmra.mxu0 %v41
  %v295 = vpop.f32.mrf.mxu0
  %v296 = vadd.f32 %v89, %v295
  %v297 = vpop.f32.mrf.mxu0
  %298 = vmatprep.mubr.f32.mxu0 0.0
  %299 = vmatmul.mubr.f32.gmra.mxu0 %v42
  %v300 = vpop.f32.mrf.mxu0
  %v301 = vadd.f32 %v90, %v300
  %v302 = vpop.f32.mrf.mxu0
  %303 = vmatprep.mubr.f32.mxu0 0.0
  %304 = vmatmul.mubr.f32.gmra.mxu0 %v43
  %v305 = vpop.f32.mrf.mxu0
  %v306 = vadd.f32 %v91, %v305
  %v307 = vpop.f32.mrf.mxu0
  %308 = vmatprep.mubr.f32.mxu0 0.0
  %309 = vmatmul.mubr.f32.gmra.mxu0 %v44
  %v310 = vpop.f32.mrf.mxu0
  %v311 = vadd.f32 %v92, %v310
  %v312 = vpop.f32.mrf.mxu0
  %313 = vmatprep.mubr.f32.mxu0 0.0
  %314 = vmatmul.mubr.f32.gmra.mxu0 %v45
  %v315 = vpop.f32.mrf.mxu0
  %v316 = vadd.f32 %v93, %v315
  %v317 = vpop.f32.mrf.mxu0
  %318 = vdwg.mxu0
  %319 = vst [vmem:[%s3] sm:$0xff] %v161
  %320 = vst [vmem:[%s3 + $0x8] sm:$0xff] %v166
  %321 = vst [vmem:[%s3 + $0x10] sm:$0xff] %v171
  %322 = vst [vmem:[%s3 + $0x18] sm:$0xff] %v176
  %323 = vst [vmem:[%s3 + $0x20] sm:$0xff] %v181
  %324 = vst [vmem:[%s3 + $0x28] sm:$0xff] %v186
  %325 = vst [vmem:[%s3 + $0x30] sm:$0xff] %v191
  %326 = vst [vmem:[%s3 + $0x38] sm:$0xff] %v196
  %327 = vst [vmem:[%s3 + $0x40] sm:$0xff] %v201
  %328 = vst [vmem:[%s3 + $0x48] sm:$0xff] %v206
  %329 = vst [vmem:[%s3 + $0x50] sm:$0xff] %v211
  %330 = vst [vmem:[%s3 + $0x58] sm:$0xff] %v216
  %331 = vst [vmem:[%s3 + $0x60] sm:$0xff] %v221
  %332 = vst [vmem:[%s3 + $0x68] sm:$0xff] %v226
  %333 = vst [vmem:[%s3 + $0x70] sm:$0xff] %v231
  %334 = vst [vmem:[%s3 + $0x78] sm:$0xff] %v236
  %335 = vst [vmem:[%s3 + $0x80] sm:$0xff] %v241
  %336 = vst [vmem:[%s3 + $0x88] sm:$0xff] %v246
  %337 = vst [vmem:[%s3 + $0x90] sm:$0xff] %v251
  %338 = vst [vmem:[%s3 + $0x98] sm:$0xff] %v256
  %339 = vst [vmem:[%s3 + $0xa0] sm:$0xff] %v261
  %340 = vst [vmem:[%s3 + $0xa8] sm:$0xff] %v266
  %341 = vst [vmem:[%s3 + $0xb0] sm:$0xff] %v271
  %342 = vst [vmem:[%s3 + $0xb8] sm:$0xff] %v276
  %343 = vst [vmem:[%s3 + $0xc0] sm:$0xff] %v281
  %344 = vst [vmem:[%s3 + $0xc8] sm:$0xff] %v286
  %345 = vst [vmem:[%s3 + $0xd0] sm:$0xff] %v291
  %346 = vst [vmem:[%s3 + $0xd8] sm:$0xff] %v296
  %347 = vst [vmem:[%s3 + $0xe0] sm:$0xff] %v301
  %348 = vst [vmem:[%s3 + $0xe8] sm:$0xff] %v306
  %349 = vst [vmem:[%s3 + $0xf0] sm:$0xff] %v311
  %350 = vst [vmem:[%s3 + $0xf8] sm:$0xff] %v316
  // Predicated region
  $region14: #{lightgcl_loss.17} parent=0 // pred_check
    _
  $region15: #{lightgcl_loss.17} parent=0 // pred_check_branch
    %352 = sbr.rel (0) target = $region17
  $region16: #{lightgcl_loss.17} parent=0 // pred_region
    _
  $region17: #{lightgcl_loss.17} parent=0 // pred_fallthru
    _
  // Predicated region
  $region18: #{lightgcl_loss.17} parent=0 // pred_check
    _
  $region19: #{lightgcl_loss.17} parent=0 // pred_check_branch
    %354 = sbr.rel (0) target = $region21
  $region20: #{lightgcl_loss.17} parent=0 // pred_region
    _
  $region21: #{lightgcl_loss.17} parent=0 // pred_fallthru
    _

// kernel: lightgcl_loss.21
$region0: #{lightgcl_loss.21}
  #allocation0 [shape = 'u32[]', space=smem, size = 0x4, offset = 0x4, fixed_abs, tag = 'smem constant byte address 0x4 - core index']
  #allocation1 [shape = 'u32[144,128]{1,0:T(1,128)}', space=vmem, size = 0x12000, scoped, tag = 'internal scratch']
  %s0 = inlined_call_operand.vmem [shape: f32[256,256], index: 0, kind: input, shape index: {}]
  %s1 = inlined_call_operand.vmem [shape: f32[256,128], index: 1, kind: input, shape index: {}]
  %s2 = inlined_call_operand.vmem [shape: f32[256,128], index: 2, kind: input, shape index: {}]
  %s3 = inlined_call_operand.hbm [shape: f32[256,128], index: 3, kind: output, shape index: {0}]
  %s4 = inlined_call_operand.vmem [shape: f32[256,128], index: 4, kind: output, shape index: {1}]
  %5 = xla_tuple %s3, %s4
  %s6 = sld [smem:[#allocation0]]
  $region30: #{lightgcl_loss.21} parent=0
    _
  %s8 = ssub.s32 1, %s6
  %s9 = scalar_select 0, %s8, %s6
  $region1: #{lightgcl_loss.21} parent=0
    #allocation2 [shape = 'u8[131072]{0}', space=vmem, size = 0x20000, scoped, tag = 'output window, operand 0, single buffered']
    #allocation3 [shape = 's32[1]{0}', space=sflag, size = 0x4, scoped, tag = 'scoped memory for lightgcl_loss.21']
    %10 = vsyncpa [#allocation3], 0
    // Predicated region
    $region2: #{lightgcl_loss.21} parent=1 // pred_check
      _
    $region3: #{lightgcl_loss.21} parent=1 // pred_check_branch
      %12 = sbr.rel (0) target = $region5
    $region4: #{lightgcl_loss.21} parent=1 // pred_region
      _
    $region5: #{lightgcl_loss.21} parent=1 // pred_fallthru
      _
    // Predicated region
    $region6: #{lightgcl_loss.21} parent=1 // pred_check
      _
    $region7: #{lightgcl_loss.21} parent=1 // pred_check_branch
      %14 = sbr.rel (0) target = $region9
    $region8: #{lightgcl_loss.21} parent=1 // pred_region
      _
    $region9: #{lightgcl_loss.21} parent=1 // pred_fallthru
      _
    // Predicated region
    $region10: #{lightgcl_loss.21} parent=1 // pred_check
      _
    $region11: #{lightgcl_loss.21} parent=1 // pred_check_branch
      %16 = sbr.rel (0) target = $region13
    $region12: #{lightgcl_loss.21} parent=1 // pred_region
      _
    $region13: #{lightgcl_loss.21} parent=1 // pred_fallthru
      _
    %v17 = vld [vmem:[%s0] sm:$0xff]
    %v18 = vld [vmem:[%s0 + $0x8] sm:$0xff]
    %v19 = vld [vmem:[%s0 + $0x10] sm:$0xff]
    %v20 = vld [vmem:[%s0 + $0x18] sm:$0xff]
    %v21 = vld [vmem:[%s0 + $0x20] sm:$0xff]
    %v22 = vld [vmem:[%s0 + $0x28] sm:$0xff]
    %v23 = vld [vmem:[%s0 + $0x30] sm:$0xff]
    %v24 = vld [vmem:[%s0 + $0x38] sm:$0xff]
    %v25 = vld [vmem:[%s0 + $0x40] sm:$0xff]
    %v26 = vld [vmem:[%s0 + $0x48] sm:$0xff]
    %v27 = vld [vmem:[%s0 + $0x50] sm:$0xff]
    %v28 = vld [vmem:[%s0 + $0x58] sm:$0xff]
    %v29 = vld [vmem:[%s0 + $0x60] sm:$0xff]
    %v30 = vld [vmem:[%s0 + $0x68] sm:$0xff]
    %v31 = vld [vmem:[%s0 + $0x70] sm:$0xff]
    %v32 = vld [vmem:[%s0 + $0x78] sm:$0xff]
    %v33 = vld [vmem:[%s0 + $0x80] sm:$0xff]
    %v34 = vld [vmem:[%s0 + $0x88] sm:$0xff]
    %v35 = vld [vmem:[%s0 + $0x90] sm:$0xff]
    %v36 = vld [vmem:[%s0 + $0x98] sm:$0xff]
    %v37 = vld [vmem:[%s0 + $0xa0] sm:$0xff]
    %v38 = vld [vmem:[%s0 + $0xa8] sm:$0xff]
    %v39 = vld [vmem:[%s0 + $0xb0] sm:$0xff]
    %v40 = vld [vmem:[%s0 + $0xb8] sm:$0xff]
    %v41 = vld [vmem:[%s0 + $0xc0] sm:$0xff]
    %v42 = vld [vmem:[%s0 + $0xc8] sm:$0xff]
    %v43 = vld [vmem:[%s0 + $0xd0] sm:$0xff]
    %v44 = vld [vmem:[%s0 + $0xd8] sm:$0xff]
    %v45 = vld [vmem:[%s0 + $0xe0] sm:$0xff]
    %v46 = vld [vmem:[%s0 + $0xe8] sm:$0xff]
    %v47 = vld [vmem:[%s0 + $0xf0] sm:$0xff]
    %v48 = vld [vmem:[%s0 + $0xf8] sm:$0xff]
    %v49 = vld [vmem:[%s0 + $0x100] sm:$0xff]
    %v50 = vld [vmem:[%s0 + $0x108] sm:$0xff]
    %v51 = vld [vmem:[%s0 + $0x110] sm:$0xff]
    %v52 = vld [vmem:[%s0 + $0x118] sm:$0xff]
    %v53 = vld [vmem:[%s0 + $0x120] sm:$0xff]
    %v54 = vld [vmem:[%s0 + $0x128] sm:$0xff]
    %v55 = vld [vmem:[%s0 + $0x130] sm:$0xff]
    %v56 = vld [vmem:[%s0 + $0x138] sm:$0xff]
    %v57 = vld [vmem:[%s0 + $0x140] sm:$0xff]
    %v58 = vld [vmem:[%s0 + $0x148] sm:$0xff]
    %v59 = vld [vmem:[%s0 + $0x150] sm:$0xff]
    %v60 = vld [vmem:[%s0 + $0x158] sm:$0xff]
    %v61 = vld [vmem:[%s0 + $0x160] sm:$0xff]
    %v62 = vld [vmem:[%s0 + $0x168] sm:$0xff]
    %v63 = vld [vmem:[%s0 + $0x170] sm:$0xff]
    %v64 = vld [vmem:[%s0 + $0x178] sm:$0xff]
    %v65 = vld [vmem:[%s0 + $0x180] sm:$0xff]
    %v66 = vld [vmem:[%s0 + $0x188] sm:$0xff]
    %v67 = vld [vmem:[%s0 + $0x190] sm:$0xff]
    %v68 = vld [vmem:[%s0 + $0x198] sm:$0xff]
    %v69 = vld [vmem:[%s0 + $0x1a0] sm:$0xff]
    %v70 = vld [vmem:[%s0 + $0x1a8] sm:$0xff]
    %v71 = vld [vmem:[%s0 + $0x1b0] sm:$0xff]
    %v72 = vld [vmem:[%s0 + $0x1b8] sm:$0xff]
    %v73 = vld [vmem:[%s0 + $0x1c0] sm:$0xff]
    %v74 = vld [vmem:[%s0 + $0x1c8] sm:$0xff]
    %v75 = vld [vmem:[%s0 + $0x1d0] sm:$0xff]
    %v76 = vld [vmem:[%s0 + $0x1d8] sm:$0xff]
    %v77 = vld [vmem:[%s0 + $0x1e0] sm:$0xff]
    %v78 = vld [vmem:[%s0 + $0x1e8] sm:$0xff]
    %v79 = vld [vmem:[%s0 + $0x1f0] sm:$0xff]
    %v80 = vld [vmem:[%s0 + $0x1f8] sm:$0xff]
    %v81 = vld [vmem:[%s1] sm:$0xff]
    %v82 = vld [vmem:[%s1 + $0x8] sm:$0xff]
    %v83 = vld [vmem:[%s1 + $0x10] sm:$0xff]
    %v84 = vld [vmem:[%s1 + $0x18] sm:$0xff]
    %v85 = vld [vmem:[%s1 + $0x20] sm:$0xff]
    %v86 = vld [vmem:[%s1 + $0x28] sm:$0xff]
    %v87 = vld [vmem:[%s1 + $0x30] sm:$0xff]
    %v88 = vld [vmem:[%s1 + $0x38] sm:$0xff]
    %v89 = vld [vmem:[%s1 + $0x40] sm:$0xff]
    %v90 = vld [vmem:[%s1 + $0x48] sm:$0xff]
    %v91 = vld [vmem:[%s1 + $0x50] sm:$0xff]
    %v92 = vld [vmem:[%s1 + $0x58] sm:$0xff]
    %v93 = vld [vmem:[%s1 + $0x60] sm:$0xff]
    %v94 = vld [vmem:[%s1 + $0x68] sm:$0xff]
    %v95 = vld [vmem:[%s1 + $0x70] sm:$0xff]
    %v96 = vld [vmem:[%s1 + $0x78] sm:$0xff]
    %v97 = vld [vmem:[%s1 + $0x80] sm:$0xff]
    %v98 = vld [vmem:[%s1 + $0x88] sm:$0xff]
    %v99 = vld [vmem:[%s1 + $0x90] sm:$0xff]
    %v100 = vld [vmem:[%s1 + $0x98] sm:$0xff]
    %v101 = vld [vmem:[%s1 + $0xa0] sm:$0xff]
    %v102 = vld [vmem:[%s1 + $0xa8] sm:$0xff]
    %v103 = vld [vmem:[%s1 + $0xb0] sm:$0xff]
    %v104 = vld [vmem:[%s1 + $0xb8] sm:$0xff]
    %v105 = vld [vmem:[%s1 + $0xc0] sm:$0xff]
    %v106 = vld [vmem:[%s1 + $0xc8] sm:$0xff]
    %v107 = vld [vmem:[%s1 + $0xd0] sm:$0xff]
    %v108 = vld [vmem:[%s1 + $0xd8] sm:$0xff]
    %v109 = vld [vmem:[%s1 + $0xe0] sm:$0xff]
    %v110 = vld [vmem:[%s1 + $0xe8] sm:$0xff]
    %v111 = vld [vmem:[%s1 + $0xf0] sm:$0xff]
    %v112 = vld [vmem:[%s1 + $0xf8] sm:$0xff]
    %113 = vxpose.xlu0.b32.start [1/16] %v17, 128
    %114 = vxpose.xlu0.b32.cont [2/16] %v19, 128
    %115 = vxpose.xlu0.b32.cont [3/16] %v21, 128
    %116 = vxpose.xlu0.b32.cont [4/16] %v23, 128
    %117 = vxpose.xlu0.b32.cont [5/16] %v25, 128
    %118 = vxpose.xlu0.b32.cont [6/16] %v27, 128
    %119 = vxpose.xlu0.b32.cont [7/16] %v29, 128
    %120 = vxpose.xlu0.b32.cont [8/16] %v31, 128
    %121 = vxpose.xlu0.b32.cont [9/16] %v33, 128
    %122 = vxpose.xlu0.b32.cont [10/16] %v35, 128
    %123 = vxpose.xlu0.b32.cont [11/16] %v37, 128
    %124 = vxpose.xlu0.b32.cont [12/16] %v39, 128
    %125 = vxpose.xlu0.b32.cont [13/16] %v41, 128
    %126 = vxpose.xlu0.b32.cont [14/16] %v43, 128
    %127 = vxpose.xlu0.b32.cont [15/16] %v45, 128
    %128 = vxpose.xlu0.b32.end [16/16] %v47, 128
    %v129 = vpop.trf.xlu0
    %v130 = vpop.trf.xlu0
    %v131 = vpop.trf.xlu0
    %v132 = vpop.trf.xlu0
    %v133 = vpop.trf.xlu0
    %v134 = vpop.trf.xlu0
    %v135 = vpop.trf.xlu0
    %v136 = vpop.trf.xlu0
    %v137 = vpop.trf.xlu0
    %v138 = vpop.trf.xlu0
    %v139 = vpop.trf.xlu0
    %v140 = vpop.trf.xlu0
    %v141 = vpop.trf.xlu0
    %v142 = vpop.trf.xlu0
    %v143 = vpop.trf.xlu0
    %v144 = vpop.trf.xlu0
    %145 = vxpose.xlu0.b32.start [1/16] %v18, 128
    %146 = vxpose.xlu0.b32.cont [2/16] %v20, 128
    %147 = vxpose.xlu0.b32.cont [3/16] %v22, 128
    %148 = vxpose.xlu0.b32.cont [4/16] %v24, 128
    %149 = vxpose.xlu0.b32.cont [5/16] %v26, 128
    %150 = vxpose.xlu0.b32.cont [6/16] %v28, 128
    %151 = vxpose.xlu0.b32.cont [7/16] %v30, 128
    %152 = vxpose.xlu0.b32.cont [8/16] %v32, 128
    %153 = vxpose.xlu0.b32.cont [9/16] %v34, 128
    %154 = vxpose.xlu0.b32.cont [10/16] %v36, 128
    %155 = vxpose.xlu0.b32.cont [11/16] %v38, 128
    %156 = vxpose.xlu0.b32.cont [12/16] %v40, 128
    %157 = vxpose.xlu0.b32.cont [13/16] %v42, 128
    %158 = vxpose.xlu0.b32.cont [14/16] %v44, 128
    %159 = vxpose.xlu0.b32.cont [15/16] %v46, 128
    %160 = vxpose.xlu0.b32.end [16/16] %v48, 128
    %v161 = vpop.trf.xlu0
    %v162 = vpop.trf.xlu0
    %v163 = vpop.trf.xlu0
    %v164 = vpop.trf.xlu0
    %v165 = vpop.trf.xlu0
    %v166 = vpop.trf.xlu0
    %v167 = vpop.trf.xlu0
    %v168 = vpop.trf.xlu0
    %v169 = vpop.trf.xlu0
    %v170 = vpop.trf.xlu0
    %v171 = vpop.trf.xlu0
    %v172 = vpop.trf.xlu0
    %v173 = vpop.trf.xlu0
    %v174 = vpop.trf.xlu0
    %v175 = vpop.trf.xlu0
    %v176 = vpop.trf.xlu0
    %177 = vxpose.xlu0.b32.start [1/16] %v49, 128
    %178 = vxpose.xlu0.b32.cont [2/16] %v51, 128
    %179 = vxpose.xlu0.b32.cont [3/16] %v53, 128
    %180 = vxpose.xlu0.b32.cont [4/16] %v55, 128
    %181 = vxpose.xlu0.b32.cont [5/16] %v57, 128
    %182 = vxpose.xlu0.b32.cont [6/16] %v59, 128
    %183 = vxpose.xlu0.b32.cont [7/16] %v61, 128
    %184 = vxpose.xlu0.b32.cont [8/16] %v63, 128
    %185 = vxpose.xlu0.b32.cont [9/16] %v65, 128
    %186 = vxpose.xlu0.b32.cont [10/16] %v67, 128
    %187 = vxpose.xlu0.b32.cont [11/16] %v69, 128
    %188 = vxpose.xlu0.b32.cont [12/16] %v71, 128
    %189 = vxpose.xlu0.b32.cont [13/16] %v73, 128
    %190 = vxpose.xlu0.b32.cont [14/16] %v75, 128
    %191 = vxpose.xlu0.b32.cont [15/16] %v77, 128
    %192 = vxpose.xlu0.b32.end [16/16] %v79, 128
    %v193 = vpop.trf.xlu0
    %v194 = vpop.trf.xlu0
    %v195 = vpop.trf.xlu0
    %v196 = vpop.trf.xlu0
    %v197 = vpop.trf.xlu0
    %v198 = vpop.trf.xlu0
    %v199 = vpop.trf.xlu0
    %v200 = vpop.trf.xlu0
    %v201 = vpop.trf.xlu0
    %v202 = vpop.trf.xlu0
    %v203 = vpop.trf.xlu0
    %v204 = vpop.trf.xlu0
    %v205 = vpop.trf.xlu0
    %v206 = vpop.trf.xlu0
    %v207 = vpop.trf.xlu0
    %v208 = vpop.trf.xlu0
    %209 = vxpose.xlu0.b32.start [1/16] %v50, 128
    %210 = vxpose.xlu0.b32.cont [2/16] %v52, 128
    %211 = vxpose.xlu0.b32.cont [3/16] %v54, 128
    %212 = vxpose.xlu0.b32.cont [4/16] %v56, 128
    %213 = vxpose.xlu0.b32.cont [5/16] %v58, 128
    %214 = vxpose.xlu0.b32.cont [6/16] %v60, 128
    %215 = vxpose.xlu0.b32.cont [7/16] %v62, 128
    %216 = vxpose.xlu0.b32.cont [8/16] %v64, 128
    %217 = vxpose.xlu0.b32.cont [9/16] %v66, 128
    %218 = vxpose.xlu0.b32.cont [10/16] %v68, 128
    %219 = vxpose.xlu0.b32.cont [11/16] %v70, 128
    %220 = vxpose.xlu0.b32.cont [12/16] %v72, 128
    %221 = vxpose.xlu0.b32.cont [13/16] %v74, 128
    %222 = vxpose.xlu0.b32.cont [14/16] %v76, 128
    %223 = vxpose.xlu0.b32.cont [15/16] %v78, 128
    %224 = vxpose.xlu0.b32.end [16/16] %v80, 128
    %v225 = vpop.trf.xlu0
    %v226 = vpop.trf.xlu0
    %v227 = vpop.trf.xlu0
    %v228 = vpop.trf.xlu0
    %v229 = vpop.trf.xlu0
    %v230 = vpop.trf.xlu0
    %v231 = vpop.trf.xlu0
    %v232 = vpop.trf.xlu0
    %v233 = vpop.trf.xlu0
    %v234 = vpop.trf.xlu0
    %v235 = vpop.trf.xlu0
    %v236 = vpop.trf.xlu0
    %v237 = vpop.trf.xlu0
    %v238 = vpop.trf.xlu0
    %v239 = vpop.trf.xlu0
    %v240 = vpop.trf.xlu0
    %241 = vmatprep.subr.mxu0 0.0
    %242 = vmatpush1.msra.mxu0 %v96
    %243 = vmatprep.subr.mxu0 0.0
    %244 = vmatpush1.msra.mxu0 %v95
    %245 = vmatprep.subr.mxu0 0.0
    %246 = vmatpush1.msra.mxu0 %v94
    %247 = vmatprep.subr.mxu0 0.0
    %248 = vmatpush1.msra.mxu0 %v93
    %249 = vmatprep.subr.mxu0 0.0
    %250 = vmatpush1.msra.mxu0 %v92
    %251 = vmatprep.subr.mxu0 0.0
    %252 = vmatpush1.msra.mxu0 %v91
    %253 = vmatprep.subr.mxu0 0.0
    %254 = vmatpush1.msra.mxu0 %v90
    %255 = vmatprep.subr.mxu0 0.0
    %256 = vmatpush1.msra.mxu0 %v89
    %257 = vmatprep.subr.mxu0 0.0
    %258 = vmatpush1.msra.mxu0 %v88
    %259 = vmatprep.subr.mxu0 0.0
    %260 = vmatpush1.msra.mxu0 %v87
    %261 = vmatprep.subr.mxu0 0.0
    %262 = vmatpush1.msra.mxu0 %v86
    %263 = vmatprep.subr.mxu0 0.0
    %264 = vmatpush1.msra.mxu0 %v85
    %265 = vmatprep.subr.mxu0 0.0
    %266 = vmatpush1.msra.mxu0 %v84
    %267 = vmatprep.subr.mxu0 0.0
    %268 = vmatpush1.msra.mxu0 %v83
    %269 = vmatprep.subr.mxu0 0.0
    %270 = vmatpush1.msra.mxu0 %v82
    %271 = vmatprep.subr.mxu0 0.0
    %272 = vmatpush1.msra.mxu0 %v81
    %273 = vmatprep.subr.mxu0 0.0
    %274 = vmatpush2.msra.mxu0 %v112
    %275 = vmatprep.subr.mxu0 0.0
    %276 = vmatpush2.msra.mxu0 %v111
    %277 = vmatprep.subr.mxu0 0.0
    %278 = vmatpush2.msra.mxu0 %v110
    %279 = vmatprep.subr.mxu0 0.0
    %280 = vmatpush2.msra.mxu0 %v109
    %281 = vmatprep.subr.mxu0 0.0
    %282 = vmatpush2.msra.mxu0 %v108
    %283 = vmatprep.subr.mxu0 0.0
    %284 = vmatpush2.msra.mxu0 %v107
    %285 = vmatprep.subr.mxu0 0.0
    %286 = vmatpush2.msra.mxu0 %v106
    %287 = vmatprep.subr.mxu0 0.0
    %288 = vmatpush2.msra.mxu0 %v105
    %289 = vmatprep.subr.mxu0 0.0
    %290 = vmatpush2.msra.mxu0 %v104
    %291 = vmatprep.subr.mxu0 0.0
    %292 = vmatpush2.msra.mxu0 %v103
    %293 = vmatprep.subr.mxu0 0.0
    %294 = vmatpush2.msra.mxu0 %v102
    %295 = vmatprep.subr.mxu0 0.0
    %296 = vmatpush2.msra.mxu0 %v101
    %297 = vmatprep.subr.mxu0 0.0
    %298 = vmatpush2.msra.mxu0 %v100
    %299 = vmatprep.subr.mxu0 0.0
    %300 = vmatpush2.msra.mxu0 %v99
    %301 = vmatprep.subr.mxu0 0.0
    %302 = vmatpush2.msra.mxu0 %v98
    %303 = vmatprep.subr.mxu0 0.0
    %304 = vmatpush2.msra.mxu0 %v97
    %305 = vmatprep.mubr.f32.mxu0 %v193
    %306 = vmatmul.mubr.f32.gmra.mxu0 %v129
    %v307 = vpop.f32.mrf.mxu0
    %v308 = vadd.f32 0.0, %v307
    %v309 = vpop.f32.mrf.mxu0
    %310 = vmatprep.mubr.f32.mxu0 %v194
    %311 = vmatmul.mubr.f32.gmra.mxu0 %v130
    %v312 = vpop.f32.mrf.mxu0
    %v313 = vadd.f32 0.0, %v312
    %v314 = vpop.f32.mrf.mxu0
    %315 = vmatprep.mubr.f32.mxu0 %v195
    %316 = vmatmul.mubr.f32.gmra.mxu0 %v131
    %v317 = vpop.f32.mrf.mxu0
    %v318 = vadd.f32 0.0, %v317
    %v319 = vpop.f32.mrf.mxu0
    %320 = vmatprep.mubr.f32.mxu0 %v196
    %321 = vmatmul.mubr.f32.gmra.mxu0 %v132
    %v322 = vpop.f32.mrf.mxu0
    %v323 = vadd.f32 0.0, %v322
    %v324 = vpop.f32.mrf.mxu0
    %325 = vmatprep.mubr.f32.mxu0 %v197
    %326 = vmatmul.mubr.f32.gmra.mxu0 %v133
    %v327 = vpop.f32.mrf.mxu0
    %v328 = vadd.f32 0.0, %v327
    %v329 = vpop.f32.mrf.mxu0
    %330 = vmatprep.mubr.f32.mxu0 %v198
    %331 = vmatmul.mubr.f32.gmra.mxu0 %v134
    %v332 = vpop.f32.mrf.mxu0
    %v333 = vadd.f32 0.0, %v332
    %v334 = vpop.f32.mrf.mxu0
    %335 = vmatprep.mubr.f32.mxu0 %v199
    %336 = vmatmul.mubr.f32.gmra.mxu0 %v135
    %v337 = vpop.f32.mrf.mxu0
    %v338 = vadd.f32 0.0, %v337
    %v339 = vpop.f32.mrf.mxu0
    %340 = vmatprep.mubr.f32.mxu0 %v200
    %341 = vmatmul.mubr.f32.gmra.mxu0 %v136
    %v342 = vpop.f32.mrf.mxu0
    %v343 = vadd.f32 0.0, %v342
    %v344 = vpop.f32.mrf.mxu0
    %345 = vmatprep.mubr.f32.mxu0 %v201
    %346 = vmatmul.mubr.f32.gmra.mxu0 %v137
    %v347 = vpop.f32.mrf.mxu0
    %v348 = vadd.f32 0.0, %v347
    %v349 = vpop.f32.mrf.mxu0
    %350 = vmatprep.mubr.f32.mxu0 %v202
    %351 = vmatmul.mubr.f32.gmra.mxu0 %v138
    %v352 = vpop.f32.mrf.mxu0
    %v353 = vadd.f32 0.0, %v352
    %v354 = vpop.f32.mrf.mxu0
    %355 = vmatprep.mubr.f32.mxu0 %v203
    %356 = vmatmul.mubr.f32.gmra.mxu0 %v139
    %v357 = vpop.f32.mrf.mxu0
    %v358 = vadd.f32 0.0, %v357
    %v359 = vpop.f32.mrf.mxu0
    %360 = vmatprep.mubr.f32.mxu0 %v204
    %361 = vmatmul.mubr.f32.gmra.mxu0 %v140
    %v362 = vpop.f32.mrf.mxu0
    %v363 = vadd.f32 0.0, %v362
    %v364 = vpop.f32.mrf.mxu0
    %365 = vmatprep.mubr.f32.mxu0 %v205
    %366 = vmatmul.mubr.f32.gmra.mxu0 %v141
    %v367 = vpop.f32.mrf.mxu0
    %v368 = vadd.f32 0.0, %v367
    %v369 = vpop.f32.mrf.mxu0
    %370 = vmatprep.mubr.f32.mxu0 %v206
    %371 = vmatmul.mubr.f32.gmra.mxu0 %v142
    %v372 = vpop.f32.mrf.mxu0
    %v373 = vadd.f32 0.0, %v372
    %v374 = vpop.f32.mrf.mxu0
    %375 = vmatprep.mubr.f32.mxu0 %v207
    %376 = vmatmul.mubr.f32.gmra.mxu0 %v143
    %v377 = vpop.f32.mrf.mxu0
    %v378 = vadd.f32 0.0, %v377
    %v379 = vpop.f32.mrf.mxu0
    %380 = vmatprep.mubr.f32.mxu0 %v208
    %381 = vmatmul.mubr.f32.gmra.mxu0 %v144
    %v382 = vpop.f32.mrf.mxu0
    %v383 = vadd.f32 0.0, %v382
    %v384 = vpop.f32.mrf.mxu0
    %385 = vmatprep.mubr.f32.mxu0 %v225
    %386 = vmatmul.mubr.f32.gmra.mxu0 %v161
    %v387 = vpop.f32.mrf.mxu0
    %v388 = vadd.f32 0.0, %v387
    %v389 = vpop.f32.mrf.mxu0
    %390 = vmatprep.mubr.f32.mxu0 %v226
    %391 = vmatmul.mubr.f32.gmra.mxu0 %v162
    %v392 = vpop.f32.mrf.mxu0
    %v393 = vadd.f32 0.0, %v392
    %v394 = vpop.f32.mrf.mxu0
    %395 = vmatprep.mubr.f32.mxu0 %v227
    %396 = vmatmul.mubr.f32.gmra.mxu0 %v163
    %v397 = vpop.f32.mrf.mxu0
    %v398 = vadd.f32 0.0, %v397
    %v399 = vpop.f32.mrf.mxu0
    %400 = vmatprep.mubr.f32.mxu0 %v228
    %401 = vmatmul.mubr.f32.gmra.mxu0 %v164
    %v402 = vpop.f32.mrf.mxu0
    %v403 = vadd.f32 0.0, %v402
    %v404 = vpop.f32.mrf.mxu0
    %405 = vmatprep.mubr.f32.mxu0 %v229
    %406 = vmatmul.mubr.f32.gmra.mxu0 %v165
    %v407 = vpop.f32.mrf.mxu0
    %v408 = vadd.f32 0.0, %v407
    %v409 = vpop.f32.mrf.mxu0
    %410 = vmatprep.mubr.f32.mxu0 %v230
    %411 = vmatmul.mubr.f32.gmra.mxu0 %v166
    %v412 = vpop.f32.mrf.mxu0
    %v413 = vadd.f32 0.0, %v412
    %v414 = vpop.f32.mrf.mxu0
    %415 = vmatprep.mubr.f32.mxu0 %v231
    %416 = vmatmul.mubr.f32.gmra.mxu0 %v167
    %v417 = vpop.f32.mrf.mxu0
    %v418 = vadd.f32 0.0, %v417
    %v419 = vpop.f32.mrf.mxu0
    %420 = vmatprep.mubr.f32.mxu0 %v232
    %421 = vmatmul.mubr.f32.gmra.mxu0 %v168
    %v422 = vpop.f32.mrf.mxu0
    %v423 = vadd.f32 0.0, %v422
    %v424 = vpop.f32.mrf.mxu0
    %425 = vmatprep.mubr.f32.mxu0 %v233
    %426 = vmatmul.mubr.f32.gmra.mxu0 %v169
    %v427 = vpop.f32.mrf.mxu0
    %v428 = vadd.f32 0.0, %v427
    %v429 = vpop.f32.mrf.mxu0
    %430 = vmatprep.mubr.f32.mxu0 %v234
    %431 = vmatmul.mubr.f32.gmra.mxu0 %v170
    %v432 = vpop.f32.mrf.mxu0
    %v433 = vadd.f32 0.0, %v432
    %v434 = vpop.f32.mrf.mxu0
    %435 = vmatprep.mubr.f32.mxu0 %v235
    %436 = vmatmul.mubr.f32.gmra.mxu0 %v171
    %v437 = vpop.f32.mrf.mxu0
    %v438 = vadd.f32 0.0, %v437
    %v439 = vpop.f32.mrf.mxu0
    %440 = vmatprep.mubr.f32.mxu0 %v236
    %441 = vmatmul.mubr.f32.gmra.mxu0 %v172
    %v442 = vpop.f32.mrf.mxu0
    %v443 = vadd.f32 0.0, %v442
    %v444 = vpop.f32.mrf.mxu0
    %445 = vmatprep.mubr.f32.mxu0 %v237
    %446 = vmatmul.mubr.f32.gmra.mxu0 %v173
    %v447 = vpop.f32.mrf.mxu0
    %v448 = vadd.f32 0.0, %v447
    %v449 = vpop.f32.mrf.mxu0
    %450 = vmatprep.mubr.f32.mxu0 %v238
    %451 = vmatmul.mubr.f32.gmra.mxu0 %v174
    %v452 = vpop.f32.mrf.mxu0
    %v453 = vadd.f32 0.0, %v452
    %v454 = vpop.f32.mrf.mxu0
    %455 = vmatprep.mubr.f32.mxu0 %v239
    %456 = vmatmul.mubr.f32.gmra.mxu0 %v175
    %v457 = vpop.f32.mrf.mxu0
    %v458 = vadd.f32 0.0, %v457
    %v459 = vpop.f32.mrf.mxu0
    %460 = vmatprep.mubr.f32.mxu0 %v240
    %461 = vmatmul.mubr.f32.gmra.mxu0 %v176
    %v462 = vpop.f32.mrf.mxu0
    %v463 = vadd.f32 0.0, %v462
    %v464 = vpop.f32.mrf.mxu0
    %465 = vdwg.mxu0
    %466 = vst [vmem:[#allocation2] sm:$0xff] %v308
    %467 = vst [vmem:[#allocation2 + $0x8] sm:$0xff] %v313
    %468 = vst [vmem:[#allocation2 + $0x10] sm:$0xff] %v318
    %469 = vst [vmem:[#allocation2 + $0x18] sm:$0xff] %v323
    %470 = vst [vmem:[#allocation2 + $0x20] sm:$0xff] %v328
    %471 = vst [vmem:[#allocation2 + $0x28] sm:$0xff] %v333
    %472 = vst [vmem:[#allocation2 + $0x30] sm:$0xff] %v338
    %473 = vst [vmem:[#allocation2 + $0x38] sm:$0xff] %v343
    %474 = vst [vmem:[#allocation2 + $0x40] sm:$0xff] %v348
    %475 = vst [vmem:[#allocation2 + $0x48] sm:$0xff] %v353
    %476 = vst [vmem:[#allocation2 + $0x50] sm:$0xff] %v358
    %477 = vst [vmem:[#allocation2 + $0x58] sm:$0xff] %v363
    %478 = vst [vmem:[#allocation2 + $0x60] sm:$0xff] %v368
    %479 = vst [vmem:[#allocation2 + $0x68] sm:$0xff] %v373
    %480 = vst [vmem:[#allocation2 + $0x70] sm:$0xff] %v378
    %481 = vst [vmem:[#allocation2 + $0x78] sm:$0xff] %v383
    %482 = vst [vmem:[#allocation2 + $0x80] sm:$0xff] %v388
    %483 = vst [vmem:[#allocation2 + $0x88] sm:$0xff] %v393
    %484 = vst [vmem:[#allocation2 + $0x90] sm:$0xff] %v398
    %485 = vst [vmem:[#allocation2 + $0x98] sm:$0xff] %v403
    %486 = vst [vmem:[#allocation2 + $0xa0] sm:$0xff] %v408
    %487 = vst [vmem:[#allocation2 + $0xa8] sm:$0xff] %v413
    %488 = vst [vmem:[#allocation2 + $0xb0] sm:$0xff] %v418
    %489 = vst [vmem:[#allocation2 + $0xb8] sm:$0xff] %v423
    %490 = vst [vmem:[#allocation2 + $0xc0] sm:$0xff] %v428
    %491 = vst [vmem:[#allocation2 + $0xc8] sm:$0xff] %v433
    %492 = vst [vmem:[#allocation2 + $0xd0] sm:$0xff] %v438
    %493 = vst [vmem:[#allocation2 + $0xd8] sm:$0xff] %v443
    %494 = vst [vmem:[#allocation2 + $0xe0] sm:$0xff] %v448
    %495 = vst [vmem:[#allocation2 + $0xe8] sm:$0xff] %v453
    %496 = vst [vmem:[#allocation2 + $0xf0] sm:$0xff] %v458
    %497 = vst [vmem:[#allocation2 + $0xf8] sm:$0xff] %v463
    %v498 = vld [vmem:[%s2] sm:$0xff]
    %v499 = vld [vmem:[%s2 + $0x8] sm:$0xff]
    %v500 = vld [vmem:[%s2 + $0x10] sm:$0xff]
    %v501 = vld [vmem:[%s2 + $0x18] sm:$0xff]
    %v502 = vld [vmem:[%s2 + $0x20] sm:$0xff]
    %v503 = vld [vmem:[%s2 + $0x28] sm:$0xff]
    %v504 = vld [vmem:[%s2 + $0x30] sm:$0xff]
    %v505 = vld [vmem:[%s2 + $0x38] sm:$0xff]
    %v506 = vld [vmem:[%s2 + $0x40] sm:$0xff]
    %v507 = vld [vmem:[%s2 + $0x48] sm:$0xff]
    %v508 = vld [vmem:[%s2 + $0x50] sm:$0xff]
    %v509 = vld [vmem:[%s2 + $0x58] sm:$0xff]
    %v510 = vld [vmem:[%s2 + $0x60] sm:$0xff]
    %v511 = vld [vmem:[%s2 + $0x68] sm:$0xff]
    %v512 = vld [vmem:[%s2 + $0x70] sm:$0xff]
    %v513 = vld [vmem:[%s2 + $0x78] sm:$0xff]
    %v514 = vld [vmem:[%s2 + $0x80] sm:$0xff]
    %v515 = vld [vmem:[%s2 + $0x88] sm:$0xff]
    %v516 = vld [vmem:[%s2 + $0x90] sm:$0xff]
    %v517 = vld [vmem:[%s2 + $0x98] sm:$0xff]
    %v518 = vld [vmem:[%s2 + $0xa0] sm:$0xff]
    %v519 = vld [vmem:[%s2 + $0xa8] sm:$0xff]
    %v520 = vld [vmem:[%s2 + $0xb0] sm:$0xff]
    %v521 = vld [vmem:[%s2 + $0xb8] sm:$0xff]
    %v522 = vld [vmem:[%s2 + $0xc0] sm:$0xff]
    %v523 = vld [vmem:[%s2 + $0xc8] sm:$0xff]
    %v524 = vld [vmem:[%s2 + $0xd0] sm:$0xff]
    %v525 = vld [vmem:[%s2 + $0xd8] sm:$0xff]
    %v526 = vld [vmem:[%s2 + $0xe0] sm:$0xff]
    %v527 = vld [vmem:[%s2 + $0xe8] sm:$0xff]
    %v528 = vld [vmem:[%s2 + $0xf0] sm:$0xff]
    %v529 = vld [vmem:[%s2 + $0xf8] sm:$0xff]
    %v530 = vadd.f32 %v308, %v498
    %v531 = vadd.f32 %v313, %v499
    %v532 = vadd.f32 %v318, %v500
    %v533 = vadd.f32 %v323, %v501
    %v534 = vadd.f32 %v328, %v502
    %v535 = vadd.f32 %v333, %v503
    %v536 = vadd.f32 %v338, %v504
    %v537 = vadd.f32 %v343, %v505
    %v538 = vadd.f32 %v348, %v506
    %v539 = vadd.f32 %v353, %v507
    %v540 = vadd.f32 %v358, %v508
    %v541 = vadd.f32 %v363, %v509
    %v542 = vadd.f32 %v368, %v510
    %v543 = vadd.f32 %v373, %v511
    %v544 = vadd.f32 %v378, %v512
    %v545 = vadd.f32 %v383, %v513
    %v546 = vadd.f32 %v388, %v514
    %v547 = vadd.f32 %v393, %v515
    %v548 = vadd.f32 %v398, %v516
    %v549 = vadd.f32 %v403, %v517
    %v550 = vadd.f32 %v408, %v518
    %v551 = vadd.f32 %v413, %v519
    %v552 = vadd.f32 %v418, %v520
    %v553 = vadd.f32 %v423, %v521
    %v554 = vadd.f32 %v428, %v522
    %v555 = vadd.f32 %v433, %v523
    %v556 = vadd.f32 %v438, %v524
    %v557 = vadd.f32 %v443, %v525
    %v558 = vadd.f32 %v448, %v526
    %v559 = vadd.f32 %v453, %v527
    %v560 = vadd.f32 %v458, %v528
    %v561 = vadd.f32 %v463, %v529
    %562 = vst [vmem:[%s4] sm:$0xff] %v530
    %563 = vst [vmem:[%s4 + $0x8] sm:$0xff] %v531
    %564 = vst [vmem:[%s4 + $0x10] sm:$0xff] %v532
    %565 = vst [vmem:[%s4 + $0x18] sm:$0xff] %v533
    %566 = vst [vmem:[%s4 + $0x20] sm:$0xff] %v534
    %567 = vst [vmem:[%s4 + $0x28] sm:$0xff] %v535
    %568 = vst [vmem:[%s4 + $0x30] sm:$0xff] %v536
    %569 = vst [vmem:[%s4 + $0x38] sm:$0xff] %v537
    %570 = vst [vmem:[%s4 + $0x40] sm:$0xff] %v538
    %571 = vst [vmem:[%s4 + $0x48] sm:$0xff] %v539
    %572 = vst [vmem:[%s4 + $0x50] sm:$0xff] %v540
    %573 = vst [vmem:[%s4 + $0x58] sm:$0xff] %v541
    %574 = vst [vmem:[%s4 + $0x60] sm:$0xff] %v542
    %575 = vst [vmem:[%s4 + $0x68] sm:$0xff] %v543
    %576 = vst [vmem:[%s4 + $0x70] sm:$0xff] %v544
    %577 = vst [vmem:[%s4 + $0x78] sm:$0xff] %v545
    %578 = vst [vmem:[%s4 + $0x80] sm:$0xff] %v546
    %579 = vst [vmem:[%s4 + $0x88] sm:$0xff] %v547
    %580 = vst [vmem:[%s4 + $0x90] sm:$0xff] %v548
    %581 = vst [vmem:[%s4 + $0x98] sm:$0xff] %v549
    %582 = vst [vmem:[%s4 + $0xa0] sm:$0xff] %v550
    %583 = vst [vmem:[%s4 + $0xa8] sm:$0xff] %v551
    %584 = vst [vmem:[%s4 + $0xb0] sm:$0xff] %v552
    %585 = vst [vmem:[%s4 + $0xb8] sm:$0xff] %v553
    %586 = vst [vmem:[%s4 + $0xc0] sm:$0xff] %v554
    %587 = vst [vmem:[%s4 + $0xc8] sm:$0xff] %v555
    %588 = vst [vmem:[%s4 + $0xd0] sm:$0xff] %v556
    %589 = vst [vmem:[%s4 + $0xd8] sm:$0xff] %v557
    %590 = vst [vmem:[%s4 + $0xe0] sm:$0xff] %v558
    %591 = vst [vmem:[%s4 + $0xe8] sm:$0xff] %v559
    %592 = vst [vmem:[%s4 + $0xf0] sm:$0xff] %v560
    %593 = vst [vmem:[%s4 + $0xf8] sm:$0xff] %v561
    // Predicated region
    $region14: #{lightgcl_loss.21} parent=1 // pred_check
      _
    $region15: #{lightgcl_loss.21} parent=1 // pred_check_branch
      %595 = sbr.rel (0) target = $region17
    $region16: #{lightgcl_loss.21} parent=1 // pred_region
      %s597 = ssub.s32 4096, 4096
      %598 = vsyncadd [#allocation3], %s597
      %s599 = sshll.u32 [#allocation2], 4
      %s600 = int_to_ptr.vmem [resolvable:$true] %s599
      %605 = dma.vmem_to_hbm [thread:$0]  %s600, 4096, %s3, [#allocation3], 128, 128, 8
    $region17: #{lightgcl_loss.21} parent=1 // pred_fallthru
      _
    // Predicated region
    $region18: #{lightgcl_loss.21} parent=1 // pred_check
      _
    $region19: #{lightgcl_loss.21} parent=1 // pred_check_branch
      %607 = sbr.rel (0) target = $region21
    $region20: #{lightgcl_loss.21} parent=1 // pred_region
      _
    $region21: #{lightgcl_loss.21} parent=1 // pred_fallthru
      _
    // Predicated region
    $region22: #{lightgcl_loss.21} parent=1 // pred_check
      _
    $region23: #{lightgcl_loss.21} parent=1 // pred_check_branch
      %609 = sbr.rel (0) target = $region25
    $region24: #{lightgcl_loss.21} parent=1 // pred_region
      %610 = dma.done [#allocation3], 4096
    $region25: #{lightgcl_loss.21} parent=1 // pred_fallthru
      _
    // Predicated region
    $region26: #{lightgcl_loss.21} parent=1 // pred_check
      _
    $region27: #{lightgcl_loss.21} parent=1 // pred_check_branch
      %612 = sbr.rel (0) target = $region29
    $region28: #{lightgcl_loss.21} parent=1 // pred_region
      _
    $region29: #{lightgcl_loss.21} parent=1 // pred_fallthru
      _
    %613 = vsyncpa [#allocation3], 1

// kernel: lightgcl_loss.27
$region0: #{lightgcl_loss.27}
  #allocation0 [shape = 'u32[]', space=smem, size = 0x4, offset = 0x4, fixed_abs, tag = 'smem constant byte address 0x4 - core index']
  #allocation1 [shape = 'u32[144,128]{1,0:T(1,128)}', space=vmem, size = 0x12000, scoped, tag = 'internal scratch']
  #allocation2 [shape = 'f32[32,128]{1,0:T(8,128)}', space=vmem, size = 0x4000, scoped, tag = 'scratch operand']
  %s0 = inlined_call_operand.vmem [shape: f32[64,128], index: 0, kind: input, shape index: {}]
  %s1 = inlined_call_operand.vmem [shape: f32[256,128], index: 1, kind: input, shape index: {}]
  %s2 = inlined_call_operand.vmem [shape: f32[64,128], index: 2, kind: output, shape index: {}]
  %s3 = sld [smem:[#allocation0]]
  $region49: #{lightgcl_loss.27} parent=0
    _
  %s5 = ssub.s32 1, %s3
  %s6 = scalar_select 0, %s5, %s3
  loop: start=0, step=1, limit=4
  $region2: #{lightgcl_loss.27} parent=0 // loop_pre_header
    _
  $region3: #{lightgcl_loss.27} parent=0 // loop_header
    %s8 = sphi 0, %s12
    %p9 = scmp.ge.s32.totalorder %s8, 4
    %s15 = sphi 0, %s27
    %s16 = sphi 0, %s23
    %s17 = sphi 0, %s15
    %s18 = sphi 0, %s16
    %s19 = sphi 0, %s17
    %s20 = sphi 0, %s18
    %s30 = sphi 0, %s32
    %s33 = sphi 0, %s30
    %s34 = sphi 0, %s33
    %s50 = sphi 0, %s34
    %s56 = sphi 0, %s58
    %s59 = sphi 0, %s56
    %s60 = sphi 0, %s59
    %s76 = sphi 0, %s60
    %s82 = sphi 0, %s84
    %s85 = sphi 0, %s82
    %s86 = sphi 0, %s85
    %s102 = sphi 0, %s86
  $region4: #{lightgcl_loss.27} parent=0 // loop_header_branch
    %11 = sbr.rel (%p9) target = $region8
  $region5: #{lightgcl_loss.27} parent=0 // loop_body
    %s13 = ssub.s32 %s8, 1
    %s14 = ssub.s32 %s8, 2
    %s21 = sadd.s32 1, %s16
    %p22 = scmp.ge.s32.totalorder %s21, 1
    %s23 = scalar_select %p22, 0, %s21
    %s24 = sadd.s32 1, %s15
    %s25 = scalar_select %p22, %s24, %s15
    %p26 = scmp.ge.s32.totalorder %s25, 2
    %s27 = scalar_select %p26, 0, %s25
    %s28 = ssub.s32 %s15, %s27
    %p29 = scmp.eq.s32.totalorder %s28, 0
    %s31 = sadd.s32 %s30, 1
    %s32 = scalar_select %p29, %s30, %s31
    %p35 = pneg %p29
    %p36 = scmp.eq.s32.totalorder %s8, 1
    %p37 = por %p35, %p36
    %p38 = scmp.ne.s32.totalorder %s30, %s33
    %p39 = scmp.eq.s32.totalorder %s8, 0
    %p40 = por %p38, %p39
    %p41 = scmp.ne.s32.totalorder %s30, %s33
    %p42 = scmp.eq.s32.totalorder %s13, 1
    %p43 = por %p41, %p42
    %p44 = scmp.ne.s32.totalorder %s33, %s34
    %p45 = scmp.eq.s32.totalorder %s13, 0
    %p46 = por %p44, %p45
    %p47 = scmp.ne.s32.totalorder %s33, %s34
    %p48 = scmp.eq.s32.totalorder %s14, 1
    %p49 = por %p47, %p48
    %p51 = scmp.ne.s32.totalorder %s34, %s50
    %p52 = scmp.eq.s32.totalorder %s14, 0
    %p53 = por %p51, %p52
    %s54 = ssub.s32 %s16, %s23
    %p55 = scmp.eq.s32.totalorder %s54, 0
    %s57 = sadd.s32 %s56, 1
    %s58 = scalar_select %p55, %s56, %s57
    %p61 = pneg %p55
    %p62 = scmp.eq.s32.totalorder %s8, 1
    %p63 = por %p61, %p62
    %p64 = scmp.ne.s32.totalorder %s56, %s59
    %p65 = scmp.eq.s32.totalorder %s8, 0
    %p66 = por %p64, %p65
    %p67 = scmp.ne.s32.totalorder %s56, %s59
    %p68 = scmp.eq.s32.totalorder %s13, 1
    %p69 = por %p67, %p68
    %p70 = scmp.ne.s32.totalorder %s59, %s60
    %p71 = scmp.eq.s32.totalorder %s13, 0
    %p72 = por %p70, %p71
    %p73 = scmp.ne.s32.totalorder %s59, %s60
    %p74 = scmp.eq.s32.totalorder %s14, 1
    %p75 = por %p73, %p74
    %p77 = scmp.ne.s32.totalorder %s60, %s76
    %p78 = scmp.eq.s32.totalorder %s14, 0
    %p79 = por %p77, %p78
    %s80 = ssub.s32 %s15, %s27
    %p81 = scmp.eq.s32.totalorder %s80, 0
    %s83 = sadd.s32 %s82, 1
    %s84 = scalar_select %p81, %s82, %s83
    %p87 = pneg %p81
    %p88 = scmp.eq.s32.totalorder %s8, 1
    %p89 = por %p87, %p88
    %p90 = scmp.ne.s32.totalorder %s82, %s85
    %p91 = scmp.eq.s32.totalorder %s8, 0
    %p92 = por %p90, %p91
    %p93 = scmp.ne.s32.totalorder %s82, %s85
    %p94 = scmp.eq.s32.totalorder %s13, 1
    %p95 = por %p93, %p94
    %p96 = scmp.ne.s32.totalorder %s85, %s86
    %p97 = scmp.eq.s32.totalorder %s13, 0
    %p98 = por %p96, %p97
    %p99 = scmp.ne.s32.totalorder %s85, %s86
    %p100 = scmp.eq.s32.totalorder %s14, 1
    %p101 = por %p99, %p100
    %p103 = scmp.ne.s32.totalorder %s86, %s102
    %p104 = scmp.eq.s32.totalorder %s14, 0
    %p105 = por %p103, %p104
    %p106 = scmp.le.s32.totalorder 1, %s8
    %p107 = scmp.lt.s32.totalorder %s8, 3
    %p108 = pnand %p106, %p107
    %p109 = pneg %p108
    // Predicated region
    $region9: #{lightgcl_loss.27} parent=5 // pred_check
      _
    $region10: #{lightgcl_loss.27} parent=5 // pred_check_branch
      %111 = sbr.rel (%p108) target = $region12
    $region11: #{lightgcl_loss.27} parent=5 // pred_region
      %s112 = ssub.s32 %s8, 1
      // Predicated region
      $region13: #{lightgcl_loss.27} parent=11 // pred_check
        %p113 = pneg %p72
      $region14: #{lightgcl_loss.27} parent=11 // pred_check_branch
        %115 = sbr.rel (%p113) target = $region16
      $region15: #{lightgcl_loss.27} parent=11 // pred_region
        %s116 = smul.u32 32, %s18
        %p117 = scmp.lt.s32.totalorder %s116, 31
        %s118 = scalar_select %p117, %s116, 31
        %s119 = smul.addr %s118, 8
        %s120 = scalar_lea.vmem %s1, %s119
        %s121 = smul.u32 32, %s18
      $region16: #{lightgcl_loss.27} parent=11 // pred_fallthru
        _
    $region12: #{lightgcl_loss.27} parent=5 // pred_fallthru
      _
    %p122 = scmp.lt.s32.totalorder %s8, 2
    // Predicated region
    $region17: #{lightgcl_loss.27} parent=5 // pred_check
      %p123 = pneg %p122
    $region18: #{lightgcl_loss.27} parent=5 // pred_check_branch
      %125 = sbr.rel (%p123) target = $region20
    $region19: #{lightgcl_loss.27} parent=5 // pred_region
      // Predicated region
      $region21: #{lightgcl_loss.27} parent=19 // pred_check
        %p126 = pneg %p40
      $region22: #{lightgcl_loss.27} parent=19 // pred_check_branch
        %128 = sbr.rel (%p126) target = $region24
      $region23: #{lightgcl_loss.27} parent=19 // pred_region
        %s129 = smul.u32 4, %s15
        %p130 = scmp.lt.s32.totalorder %s129, 7
        %s131 = scalar_select %p130, %s129, 7
        %s132 = smul.addr %s131, 8
        %s133 = scalar_lea.vmem %s0, %s132
        %s134 = smul.u32 4, %s15
      $region24: #{lightgcl_loss.27} parent=19 // pred_fallthru
        _
    $region20: #{lightgcl_loss.27} parent=5 // pred_fallthru
      _
    %p135 = scmp.le.s32.totalorder 1, %s8
    %p136 = scmp.lt.s32.totalorder %s8, 3
    %p137 = pnand %p135, %p136
    %p138 = pneg %p137
    // Predicated region
    $region25: #{lightgcl_loss.27} parent=5 // pred_check
      _
    $region26: #{lightgcl_loss.27} parent=5 // pred_check_branch
      %140 = sbr.rel (%p137) target = $region28
    $region27: #{lightgcl_loss.27} parent=5 // pred_region
      %s141 = ssub.s32 %s8, 1
      %s142 = smul.u32 4, %s17
      %p143 = scmp.lt.s32.totalorder %s142, 7
      %s144 = scalar_select %p143, %s142, 7
      %s145 = smul.addr %s144, 8
      %s146 = scalar_lea.vmem %s0, %s145
      %p147 = pneg %p46
      %p148 = pneg %p43
      %s149 = smul.u32 32, %s18
      %p150 = scmp.lt.s32.totalorder %s149, 31
      %s151 = scalar_select %p150, %s149, 31
      %s152 = smul.addr %s151, 8
      %s153 = scalar_lea.vmem %s1, %s152
      %p154 = pneg %p72
      %p155 = pneg %p69
      %p156 = pneg %p98
      %p157 = pneg %p95
      %s158 = smul.u32 4, %s17
      %p159 = scmp.lt.s32.totalorder %s158, 7
      %s160 = scalar_select %p159, %s158, 7
      %s161 = smul.addr %s160, 8
      %s162 = scalar_lea.vmem %s2, %s161
      %s163 = smul.u32 4, %s17
      %p164 = scmp.lt.s32.totalorder %s163, 7
      %s165 = scalar_select %p164, %s163, 7
      %s166 = smul.addr %s165, 8
      %s167 = scalar_lea.vmem %s0, %s166
      %s168 = smul.u32 4, %s17
      %s169 = smul.u32 32, %s18
      %p170 = scmp.lt.s32.totalorder %s169, 31
      %s171 = scalar_select %p170, %s169, 31
      %s172 = smul.addr %s171, 8
      %s173 = scalar_lea.vmem %s1, %s172
      %s174 = smul.u32 32, %s18
      %s175 = smul.u32 4, %s17
      %p176 = scmp.lt.s32.totalorder %s175, 7
      %s177 = scalar_select %p176, %s175, 7
      %s178 = smul.addr %s177, 8
      %s179 = scalar_lea.vmem %s2, %s178
      %s180 = smul.u32 4, %s17
      %p181 = scmp.eq.s32.totalorder %s18, 0
      // Predicated region
      $region29: #{lightgcl_loss.27} parent=27 // pred_check
        %p182 = pneg %p181
      $region30: #{lightgcl_loss.27} parent=27 // pred_check_branch
        %184 = sbr.rel (%p182) target = $region32
      $region31: #{lightgcl_loss.27} parent=27 // pred_region
        %185 = vst [vmem:[#allocation2] sm:$0xff] 0.0
        %186 = vst [vmem:[#allocation2 + $0x8] sm:$0xff] 0.0
        %187 = vst [vmem:[#allocation2 + $0x10] sm:$0xff] 0.0
        %188 = vst [vmem:[#allocation2 + $0x18] sm:$0xff] 0.0
      $region32: #{lightgcl_loss.27} parent=27 // pred_fallthru
        _
      %v189 = vld [vmem:[%s167] sm:$0xff]
      %v190 = vld [vmem:[%s167 + $0x8] sm:$0xff]
      %v191 = vld [vmem:[%s167 + $0x10] sm:$0xff]
      %v192 = vld [vmem:[%s167 + $0x18] sm:$0xff]
      %v193 = vld [vmem:[%s173] sm:$0xff]
      %v194 = vld [vmem:[%s173 + $0x8] sm:$0xff]
      %v195 = vld [vmem:[%s173 + $0x10] sm:$0xff]
      %v196 = vld [vmem:[%s173 + $0x18] sm:$0xff]
      %v197 = vld [vmem:[%s173 + $0x20] sm:$0xff]
      %v198 = vld [vmem:[%s173 + $0x28] sm:$0xff]
      %v199 = vld [vmem:[%s173 + $0x30] sm:$0xff]
      %v200 = vld [vmem:[%s173 + $0x38] sm:$0xff]
      %v201 = vld [vmem:[%s173 + $0x40] sm:$0xff]
      %v202 = vld [vmem:[%s173 + $0x48] sm:$0xff]
      %v203 = vld [vmem:[%s173 + $0x50] sm:$0xff]
      %v204 = vld [vmem:[%s173 + $0x58] sm:$0xff]
      %v205 = vld [vmem:[%s173 + $0x60] sm:$0xff]
      %v206 = vld [vmem:[%s173 + $0x68] sm:$0xff]
      %v207 = vld [vmem:[%s173 + $0x70] sm:$0xff]
      %v208 = vld [vmem:[%s173 + $0x78] sm:$0xff]
      %v209 = vld [vmem:[%s173 + $0x80] sm:$0xff]
      %v210 = vld [vmem:[%s173 + $0x88] sm:$0xff]
      %v211 = vld [vmem:[%s173 + $0x90] sm:$0xff]
      %v212 = vld [vmem:[%s173 + $0x98] sm:$0xff]
      %v213 = vld [vmem:[%s173 + $0xa0] sm:$0xff]
      %v214 = vld [vmem:[%s173 + $0xa8] sm:$0xff]
      %v215 = vld [vmem:[%s173 + $0xb0] sm:$0xff]
      %v216 = vld [vmem:[%s173 + $0xb8] sm:$0xff]
      %v217 = vld [vmem:[%s173 + $0xc0] sm:$0xff]
      %v218 = vld [vmem:[%s173 + $0xc8] sm:$0xff]
      %v219 = vld [vmem:[%s173 + $0xd0] sm:$0xff]
      %v220 = vld [vmem:[%s173 + $0xd8] sm:$0xff]
      %v221 = vld [vmem:[%s173 + $0xe0] sm:$0xff]
      %v222 = vld [vmem:[%s173 + $0xe8] sm:$0xff]
      %v223 = vld [vmem:[%s173 + $0xf0] sm:$0xff]
      %v224 = vld [vmem:[%s173 + $0xf8] sm:$0xff]
      %225 = vmatprep.subr.mxu0 0.0
      %226 = vmatpush1.xpose.msra.mxu0 %v208
      %227 = vmatprep.subr.mxu0 0.0
      %228 = vmatpush1.xpose.msra.mxu0 %v207
      %229 = vmatprep.subr.mxu0 0.0
      %230 = vmatpush1.xpose.msra.mxu0 %v206
      %231 = vmatprep.subr.mxu0 0.0
      %232 = vmatpush1.xpose.msra.mxu0 %v205
      %233 = vmatprep.subr.mxu0 0.0
      %234 = vmatpush1.xpose.msra.mxu0 %v204
      %235 = vmatprep.subr.mxu0 0.0
      %236 = vmatpush1.xpose.msra.mxu0 %v203
      %237 = vmatprep.subr.mxu0 0.0
      %238 = vmatpush1.xpose.msra.mxu0 %v202
      %239 = vmatprep.subr.mxu0 0.0
      %240 = vmatpush1.xpose.msra.mxu0 %v201
      %241 = vmatprep.subr.mxu0 0.0
      %242 = vmatpush1.xpose.msra.mxu0 %v200
      %243 = vmatprep.subr.mxu0 0.0
      %244 = vmatpush1.xpose.msra.mxu0 %v199
      %245 = vmatprep.subr.mxu0 0.0
      %246 = vmatpush1.xpose.msra.mxu0 %v198
      %247 = vmatprep.subr.mxu0 0.0
      %248 = vmatpush1.xpose.msra.mxu0 %v197
      %249 = vmatprep.subr.mxu0 0.0
      %250 = vmatpush1.xpose.msra.mxu0 %v196
      %251 = vmatprep.subr.mxu0 0.0
      %252 = vmatpush1.xpose.msra.mxu0 %v195
      %253 = vmatprep.subr.mxu0 0.0
      %254 = vmatpush1.xpose.msra.mxu0 %v194
      %255 = vmatprep.subr.mxu0 0.0
      %256 = vmatpush1.xpose.msra.mxu0 %v193
      %257 = vmatprep.subr.mxu0 0.0
      %258 = vmatpush2.xpose.msra.mxu0 %v224
      %259 = vmatprep.subr.mxu0 0.0
      %260 = vmatpush2.xpose.msra.mxu0 %v223
      %261 = vmatprep.subr.mxu0 0.0
      %262 = vmatpush2.xpose.msra.mxu0 %v222
      %263 = vmatprep.subr.mxu0 0.0
      %264 = vmatpush2.xpose.msra.mxu0 %v221
      %265 = vmatprep.subr.mxu0 0.0
      %266 = vmatpush2.xpose.msra.mxu0 %v220
      %267 = vmatprep.subr.mxu0 0.0
      %268 = vmatpush2.xpose.msra.mxu0 %v219
      %269 = vmatprep.subr.mxu0 0.0
      %270 = vmatpush2.xpose.msra.mxu0 %v218
      %271 = vmatprep.subr.mxu0 0.0
      %272 = vmatpush2.xpose.msra.mxu0 %v217
      %273 = vmatprep.subr.mxu0 0.0
      %274 = vmatpush2.xpose.msra.mxu0 %v216
      %275 = vmatprep.subr.mxu0 0.0
      %276 = vmatpush2.xpose.msra.mxu0 %v215
      %277 = vmatprep.subr.mxu0 0.0
      %278 = vmatpush2.xpose.msra.mxu0 %v214
      %279 = vmatprep.subr.mxu0 0.0
      %280 = vmatpush2.xpose.msra.mxu0 %v213
      %281 = vmatprep.subr.mxu0 0.0
      %282 = vmatpush2.xpose.msra.mxu0 %v212
      %283 = vmatprep.subr.mxu0 0.0
      %284 = vmatpush2.xpose.msra.mxu0 %v211
      %285 = vmatprep.subr.mxu0 0.0
      %286 = vmatpush2.xpose.msra.mxu0 %v210
      %287 = vmatprep.subr.mxu0 0.0
      %288 = vmatpush2.xpose.msra.mxu0 %v209
      %289 = vmatprep.mubr.f32.mxu0 0.0
      %290 = vmatmul.mubr.f32.gmra.mxu0 %v189
      %v291 = vpop.f32.mrf.mxu0
      %v292 = vadd.f32 0.0, %v291
      %v293 = vpop.f32.mrf.mxu0
      %v294 = vadd.f32 0.0, %v293
      %295 = vmatprep.mubr.f32.mxu0 0.0
      %296 = vmatmul.mubr.f32.gmra.mxu0 %v190
      %v297 = vpop.f32.mrf.mxu0
      %v298 = vadd.f32 0.0, %v297
      %v299 = vpop.f32.mrf.mxu0
      %v300 = vadd.f32 0.0, %v299
      %301 = vmatprep.mubr.f32.mxu0 0.0
      %302 = vmatmul.mubr.f32.gmra.mxu0 %v191
      %v303 = vpop.f32.mrf.mxu0
      %v304 = vadd.f32 0.0, %v303
      %v305 = vpop.f32.mrf.mxu0
      %v306 = vadd.f32 0.0, %v305
      %307 = vmatprep.mubr.f32.mxu0 0.0
      %308 = vmatmul.mubr.f32.gmra.mxu0 %v192
      %v309 = vpop.f32.mrf.mxu0
      %v310 = vadd.f32 0.0, %v309
      %v311 = vpop.f32.mrf.mxu0
      %v312 = vadd.f32 0.0, %v311
      %313 = vdwg.mxu0
      %v314 = vmul.f32 %v292, 5.0
      %v315 = vmul.f32 %v294, 5.0
      %v316 = vmul.f32 %v298, 5.0
      %v317 = vmul.f32 %v300, 5.0
      %v318 = vmul.f32 %v304, 5.0
      %v319 = vmul.f32 %v306, 5.0
      %v320 = vmul.f32 %v310, 5.0
      %v321 = vmul.f32 %v312, 5.0
      %v322 = vmul.f32 %v314, 1.442695
      %v323 = vpow.pop %v322
      %v324 = vmul.f32 %v315, 1.442695
      %v325 = vpow.pop %v324
      %v326 = vmul.f32 %v316, 1.442695
      %v327 = vpow.pop %v326
      %v328 = vmul.f32 %v317, 1.442695
      %v329 = vpow.pop %v328
      %v330 = vmul.f32 %v318, 1.442695
      %v331 = vpow.pop %v330
      %v332 = vmul.f32 %v319, 1.442695
      %v333 = vpow.pop %v332
      %v334 = vmul.f32 %v320, 1.442695
      %v335 = vpow.pop %v334
      %v336 = vmul.f32 %v321, 1.442695
      %v337 = vpow.pop %v336
      %v338 = vadd.f32 %v323, %v325
      %v339 = vadd.f32 %v327, %v329
      %v340 = vadd.f32 %v331, %v333
      %v341 = vadd.f32 %v335, %v337
      %v342 = vld [vmem:[#allocation2] sm:$0xff]
      %v343 = vld [vmem:[#allocation2 + $0x8] sm:$0xff]
      %v344 = vld [vmem:[#allocation2 + $0x10] sm:$0xff]
      %v345 = vld [vmem:[#allocation2 + $0x18] sm:$0xff]
      %v346 = vadd.f32 %v342, %v338
      %v347 = vadd.f32 %v343, %v339
      %v348 = vadd.f32 %v344, %v340
      %v349 = vadd.f32 %v345, %v341
      %350 = vst [vmem:[#allocation2] sm:$0xff] %v346
      %351 = vst [vmem:[#allocation2 + $0x8] sm:$0xff] %v347
      %352 = vst [vmem:[#allocation2 + $0x10] sm:$0xff] %v348
      %353 = vst [vmem:[#allocation2 + $0x18] sm:$0xff] %v349
      // Predicated region
      $region33: #{lightgcl_loss.27} parent=27 // pred_check
        %p354 = pneg %p181
      $region34: #{lightgcl_loss.27} parent=27 // pred_check_branch
        %356 = sbr.rel (%p354) target = $region36
      $region35: #{lightgcl_loss.27} parent=27 // pred_region
        %v357 = vld [vmem:[#allocation2] sm:$0xff]
        %v358 = vld [vmem:[#allocation2 + $0x8] sm:$0xff]
        %v359 = vld [vmem:[#allocation2 + $0x10] sm:$0xff]
        %v360 = vld [vmem:[#allocation2 + $0x18] sm:$0xff]
        %361 = vst [vmem:[%s179] sm:$0xff] %v357
        %362 = vst [vmem:[%s179 + $0x8] sm:$0xff] %v358
        %363 = vst [vmem:[%s179 + $0x10] sm:$0xff] %v359
        %364 = vst [vmem:[%s179 + $0x18] sm:$0xff] %v360
      $region36: #{lightgcl_loss.27} parent=27 // pred_fallthru
        _
      %s365 = smul.u32 4, %s17
      %p366 = scmp.lt.s32.totalorder %s365, 7
      %s367 = scalar_select %p366, %s365, 7
      %s368 = smul.addr %s367, 8
      %s369 = scalar_lea.vmem %s2, %s368
      // Predicated region
      $region37: #{lightgcl_loss.27} parent=27 // pred_check
        %p370 = pneg %p95
      $region38: #{lightgcl_loss.27} parent=27 // pred_check_branch
        %372 = sbr.rel (%p370) target = $region40
      $region39: #{lightgcl_loss.27} parent=27 // pred_region
        %s373 = smul.u32 4, %s17
      $region40: #{lightgcl_loss.27} parent=27 // pred_fallthru
        _
    $region28: #{lightgcl_loss.27} parent=5 // pred_fallthru
      _
    %p374 = scmp.le.s32.totalorder 2, %s8
    // Predicated region
    $region41: #{lightgcl_loss.27} parent=5 // pred_check
      %p375 = pneg %p374
    $region42: #{lightgcl_loss.27} parent=5 // pred_check_branch
      %377 = sbr.rel (%p375) target = $region44
    $region43: #{lightgcl_loss.27} parent=5 // pred_region
      %s378 = ssub.s32 %s8, 2
      // Predicated region
      $region45: #{lightgcl_loss.27} parent=43 // pred_check
        %p379 = pneg %p101
      $region46: #{lightgcl_loss.27} parent=43 // pred_check_branch
        %381 = sbr.rel (%p379) target = $region48
      $region47: #{lightgcl_loss.27} parent=43 // pred_region
        %s382 = smul.u32 4, %s19
        %p383 = scmp.lt.s32.totalorder %s382, 7
        %s384 = scalar_select %p383, %s382, 7
        %s385 = smul.addr %s384, 8
        %s386 = scalar_lea.vmem %s2, %s385
      $region48: #{lightgcl_loss.27} parent=43 // pred_fallthru
        _
    $region44: #{lightgcl_loss.27} parent=5 // pred_fallthru
      _
  $region6: #{lightgcl_loss.27} parent=0 // loop_footer
    %s12 = sadd.s32 1, %s8
  $region7: #{lightgcl_loss.27} parent=0 // loop_footer_branch
    %7 = sbr.rel target = $region3
  $region8: #{lightgcl_loss.27} parent=0 // loop_exit
    _

</llo_original>
